<compile_context>
chip_gen: v7x
topology: tpu7x:2x2x1
jax: 0.10.0
libtpu: 0.0.40
codegen_flags: <defaults>
</compile_context>

<pallas_src>
import functools

import jax
import jax.numpy as jnp
from jax.experimental import pallas as pl
from jax.experimental.pallas import tpu as pltpu

LN_EPS = 1e-5


# ----------------------------- Pallas kernels ------------------------------
def _layernorm(y, gamma, beta):
    """LayerNorm over the full (C, P) slab, biased variance, single pass."""
    n = y.shape[0] * y.shape[1]
    s = jnp.sum(y)
    ss = jnp.sum(y * y)
    mean = s / n
    var = ss / n - mean * mean
    return (y - mean) * jax.lax.rsqrt(var + LN_EPS) * gamma + beta


def conv_ln_relu_kernel(p_ref, w_ref, b_ref, g_ref, bt_ref, out_ref, *, nb, cb):
    """Fused conv0 of `nb` branches sharing the same input, + per-branch LN + relu.

      p_ref : (1, KKC, P)   bf16  im2col patches of the shared input
      w_ref : (nb*cb, KKC)  bf16  branch conv0 weights stacked along Cout
      b_ref : (nb*cb, 1)    f32   conv biases
      g_ref, bt_ref: (nb*cb, P) f32 per-branch LayerNorm affine, stacked
      out_ref: (1, nb*cb, P)
    """
    y = jnp.dot(w_ref[...], p_ref[0], preferred_element_type=jnp.float32)
    y = y + b_ref[...]
    g = g_ref[...]
    bt = bt_ref[...]
    parts = []
    for b in range(nb):
        sl = slice(b * cb, (b + 1) * cb)
        parts.append(jnp.maximum(_layernorm(y[sl], g[sl], bt[sl]), 0.0))
    out_ref[0] = jnp.concatenate(parts, axis=0).astype(out_ref.dtype)


def gates_conv1_kernel(p_ref, w_ref, b_ref, g_ref, bt_ref, mem_ref, out_ref, *, mc):
    """Fused conv1 of the 3 gate branches (block-diagonal weight) + LN + gating.

    Emits new_memory = sigmoid(update)*tanh(value) + sigmoid(forget)*memory
    directly, so no separate elementwise kernel / HBM round-trip is needed.
    """
    y = jnp.dot(w_ref[...], p_ref[0], preferred_element_type=jnp.float32)
    y = y + b_ref[...]
    g = g_ref[...]
    bt = bt_ref[...]
    ug = jax.nn.sigmoid(_layernorm(y[0:mc], g[0:mc], bt[0:mc]))
    fg = jax.nn.sigmoid(_layernorm(y[mc:2 * mc], g[mc:2 * mc], bt[mc:2 * mc]))
    uv = jnp.tanh(_layernorm(y[2 * mc:3 * mc], g[2 * mc:3 * mc], bt[2 * mc:3 * mc]))
    out_ref[0] = (ug * uv + fg * mem_ref[0]).astype(out_ref.dtype)


def forward_conv1_kernel(p_ref, w_ref, b_ref, g_ref, bt_ref, x_ref, out_ref):
    """Forward-branch conv1 + LN with the residual fused: relu(x + conv_ln(h))."""
    y = jnp.dot(w_ref[...], p_ref[0], preferred_element_type=jnp.float32)
    y = y + b_ref[...]
    y = _layernorm(y, g_ref[...], bt_ref[...])
    out_ref[0] = jnp.maximum(x_ref[0] + y, 0.0).astype(out_ref.dtype)


# ------------------------------ glue / wrappers -----------------------------
def _im2col(x, k):
    """(N, C, H, W) -> (N, C*K*K, H*W) patches, row order (cin, kh, kw)."""
    n, c, h, w = x.shape
    pad = k // 2
    xp = jnp.pad(x, ((0, 0), (0, 0), (pad, pad), (pad, pad)))
    taps = [xp[:, :, kh:kh + h, kw:kw + w] for kh in range(k) for kw in range(k)]
    pat = jnp.stack(taps, axis=2)                    # (N, C, K*K, H, W)
    return pat.reshape(n, c * k * k, h * w)


def _run_conv(kernel, patches, w, b, g, bt, extra=None, *, out_channels, out_dtype):
    """One pallas_call: grid=(N,), one lane-dense (C, 784) sample per step."""
    n, kkc, p = patches.shape
    co = w.shape[0]
    args = [patches, w, b, g, bt]
    in_specs = [
        pl.BlockSpec((1, kkc, p), lambda i: (i, 0, 0)),
        pl.BlockSpec((co, kkc), lambda i: (0, 0)),
        pl.BlockSpec((co, 1), lambda i: (0, 0)),
        pl.BlockSpec((co, p), lambda i: (0, 0)),
        pl.BlockSpec((co, p), lambda i: (0, 0)),
    ]
    if extra is not None:
        ec = extra.shape[1]
        args.append(extra)
        in_specs.append(pl.BlockSpec((1, ec, p), lambda i: (i, 0, 0)))
    return pl.pallas_call(
        kernel,
        out_shape=jax.ShapeDtypeStruct((n, out_channels, p), out_dtype),
        grid_spec=pltpu.PrefetchScalarGridSpec(
            num_scalar_prefetch=0,
            grid=(n,),
            in_specs=in_specs,
            out_specs=pl.BlockSpec((1, out_channels, p), lambda i: (i, 0, 0)),
        ),
        compiler_params=pltpu.CompilerParams(dimension_semantics=("parallel",)),
    )(*args)


@functools.partial(jax.jit, static_argnames=("k",))
def residual_block(x, memory, packed, *, k=3):
    """x: (N, hidden, H, W), memory: (N, mem, H, W) -> (next_x, new_memory)."""
    n, hc, h, w = x.shape
    mc = memory.shape[1]
    p = h * w
    gh = (hc + mc) // 2                               # per-branch hidden channels
    gp, fp = packed["gates"], packed["forward"]

    # --- three gate branches, conv0 fused into one wide matmul -------------
    cat0 = jnp.concatenate([x, memory], axis=1)
    pat0 = _im2col(cat0, k).astype(jnp.bfloat16)
    h_gates = _run_conv(
        functools.partial(conv_ln_relu_kernel, nb=3, cb=gh),
        pat0, gp["w0"], gp["b0"], gp["g0"], gp["bt0"],
        out_channels=3 * gh, out_dtype=jnp.bfloat16)

    # --- gate conv1 (block-diag) + LN + sigmoid/tanh + gating epilogue ------
    pat_g1 = _im2col(h_gates.reshape(n, 3 * gh, h, w), k)
    new_memory = _run_conv(
        functools.partial(gates_conv1_kernel, mc=mc),
        pat_g1, gp["w1"], gp["b1"], gp["g1"], gp["bt1"],
        extra=memory.reshape(n, mc, p),
        out_channels=mc, out_dtype=x.dtype)

    # --- forward branch: conv0+relu, then conv1+LN+residual relu epilogue ---
    cat1 = jnp.concatenate([x, new_memory.reshape(n, mc, h, w)], axis=1)
    pat1 = _im2col(cat1, k).astype(jnp.bfloat16)
    h_fwd = _run_conv(
        functools.partial(conv_ln_relu_kernel, nb=1, cb=gh),
        pat1, fp["w0"], fp["b0"], fp["g0"], fp["bt0"],
        out_channels=gh, out_dtype=jnp.bfloat16)

    pat_f1 = _im2col(h_fwd.reshape(n, gh, h, w), k)
    next_x = _run_conv(
        forward_conv1_kernel,
        pat_f1, fp["w1"], fp["b1"], fp["g1"], fp["bt1"],
        extra=x.reshape(n, hc, p),
        out_channels=hc, out_dtype=x.dtype)

    return next_x.reshape(n, hc, h, w), new_memory.reshape(n, mc, h, w)


# --------------------------- parameter packing -------------------------------
def _conv_ln_to_kernel(p):
    """HWIO weight + (C,H,W) LN params -> lane-dense kernel format."""
    wgt = p["w"]                                       # (k, k, cin, cout)
    cout = wgt.shape[3]
    return {
        # column order (cin, kh, kw) matches _im2col's row order.
        "w": jnp.transpose(wgt, (3, 2, 0, 1)).reshape(cout, -1).astype(jnp.bfloat16),
        "b": p["b"].reshape(cout, 1).astype(jnp.float32),
        "g": p["gamma"].reshape(cout, -1).astype(jnp.float32),
        "bt": p["beta"].reshape(cout, -1).astype(jnp.float32),
    }


def _block_diag(mats):
    rows = sum(m.shape[0] for m in mats)
    cols = sum(m.shape[1] for m in mats)
    out = jnp.zeros((rows, cols), mats[0].dtype)
    r = c = 0
    for m in mats:
        out = out.at[r:r + m.shape[0], c:c + m.shape[1]].set(m)
        r += m.shape[0]
        c += m.shape[1]
    return out


def pack_params(params):
    gates = [params["update_gate"], params["forget_gate"], params["update_value"]]
    g0 = [_conv_ln_to_kernel(b["conv0"]) for b in gates]
    g1 = [_conv_ln_to_kernel(b["conv1"]) for b in gates]
    f0 = _conv_ln_to_kernel(params["forward"]["conv0"])
    f1 = _conv_ln_to_kernel(params["forward"]["conv1"])
    cat = lambda key, ds: jnp.concatenate([d[key] for d in ds], axis=0)
    return {
        "gates": {
            "w0": cat("w", g0), "b0": cat("b", g0), "g0": cat("g", g0), "bt0": cat("bt", g0),
            "w1": _block_diag([d["w"] for d in g1]),
            "b1": cat("b", g1), "g1": cat("g", g1), "bt1": cat("bt", g1),
        },
        "forward": {
            "w0": f0["w"], "b0": f0["b"], "g0": f0["g"], "bt0": f0["bt"],
            "w1": f1["w"], "b1": f1["b"], "g1": f1["g"], "bt1": f1["bt"],
        },
    }


# --------------------------- parameter construction -------------------------
def init_conv_ln(key, cin, cout, k, h, w):
    k1, k2, k3, k4 = jax.random.split(key, 4)
    fan_in = cin * k * k
    return {
        "w": jax.random.normal(k1, (k, k, cin, cout), jnp.float32) / jnp.sqrt(fan_in),
        "b": 0.05 * jax.random.normal(k2, (cout,), jnp.float32),
        "gamma": 1.0 + 0.1 * jax.random.normal(k3, (cout, h, w), jnp.float32),
        "beta": 0.1 * jax.random.normal(k4, (cout, h, w), jnp.float32),
    }


def init_branch(key, cin, cout, k, h, w):
    hidden = cin // 2
    k0, k1 = jax.random.split(key)
    return {"conv0": init_conv_ln(k0, cin, hidden, k, h, w),
            "conv1": init_conv_ln(k1, hidden, cout, k, h, w)}


def init_residual_block(key, hidden_channels, memory_channels, k, h, w):
    sum_channels = hidden_channels + memory_channels
    keys = jax.random.split(key, 4)
    return {
        "update_gate": init_branch(keys[0], sum_channels, memory_channels, k, h, w),
        "forget_gate": init_branch(keys[1], sum_channels, memory_channels, k, h, w),
        "update_value": init_branch(keys[2], sum_channels, memory_channels, k, h, w),
        "forward": init_branch(keys[3], sum_channels, hidden_channels, k, h, w),
    }


# ------------------------------- pure-JAX reference -------------------------
def _ref_conv_ln(x, p):
    y = jax.lax.conv_general_dilated(
        x, p["w"], window_strides=(1, 1), padding="SAME",
        dimension_numbers=("NCHW", "HWIO", "NCHW"))
    y = y + p["b"].reshape(1, -1, 1, 1)
    mean = jnp.mean(y, axis=(1, 2, 3), keepdims=True)
    var = jnp.mean((y - mean) ** 2, axis=(1, 2, 3), keepdims=True)
    yn = (y - mean) * jax.lax.rsqrt(var + LN_EPS)
    return yn * p["gamma"][None] + p["beta"][None]


def _ref_branch(x, params):
    h = jnp.maximum(_ref_conv_ln(x, params["conv0"]), 0.0)
    return _ref_conv_ln(h, params["conv1"])


def _ref_residual_block(x, memory, params):
    cat0 = jnp.concatenate([x, memory], axis=1)
    ug = jax.nn.sigmoid(_ref_branch(cat0, params["update_gate"]))
    fg = jax.nn.sigmoid(_ref_branch(cat0, params["forget_gate"]))
    uv = jnp.tanh(_ref_branch(cat0, params["update_value"]))
    new_mem = ug * uv + fg * memory
    cat1 = jnp.concatenate([x, new_mem], axis=1)
    next_x = jnp.maximum(x + _ref_branch(cat1, params["forward"]), 0.0)
    return next_x, new_mem


# ------------------------------------ main -----------------------------------
if __name__ == "__main__":
    hidden_channels, memory_channels, kernel_size = 4, 4, 3
    batch, height, width = 2, 28, 28  # LayerNorm((C, 28, 28)) fixes spatial size

    key = jax.random.PRNGKey(0)
    kx, km, kp = jax.random.split(key, 3)
    x = jax.random.normal(kx, (batch, hidden_channels, height, width), jnp.float32)
    memory = jax.random.normal(km, (batch, memory_channels, height, width), jnp.float32)
    params = init_residual_block(kp, hidden_channels, memory_channels,
                                 kernel_size, height, width)
    packed = pack_params(params)

    next_x, new_memory = residual_block(x, memory, packed, k=kernel_size)
    jax.block_until_ready((next_x, new_memory))

    ref_x, ref_mem = _ref_residual_block(x, memory, params)
    assert next_x.shape == (batch, hidden_channels, height, width)
    assert new_memory.shape == (batch, memory_channels, height, width)
    assert jnp.allclose(next_x, ref_x, atol=5e-2, rtol=5e-2), \
        float(jnp.max(jnp.abs(next_x - ref_x)))
    assert jnp.allclose(new_memory, ref_mem, atol=5e-2, rtol=5e-2), \
        float(jnp.max(jnp.abs(new_memory - ref_mem)))
    print("KERNEL_OK")
</pallas_src>

<mosaic_0001>
module attributes {stable_mosaic.version = 11 : i64} {
  func.func @conv_ln_relu_kernel(%arg0: i32, %arg1: memref<1x72x784xbf16, #tpu.memory_space<vmem>>, %arg2: memref<12x72xbf16, #tpu.memory_space<vmem>>, %arg3: memref<12x1xf32, #tpu.memory_space<vmem>>, %arg4: memref<12x784xf32, #tpu.memory_space<vmem>>, %arg5: memref<12x784xf32, #tpu.memory_space<vmem>>, %arg6: memref<1x12x784xbf16, #tpu.memory_space<vmem>>) attributes {dimension_semantics = [#tpu.dimension_semantics<parallel>], iteration_bounds = array<i64: 2>, scalar_prefetch = 0 : i64, scratch_operands = 0 : i64, tpu.core_type = #tpu.core_type<tc>, window_params = [{transform_indices = @transform_0, window_bounds = array<i64: 1, 72, 784>}, {pipeline_mode = #tpu.pipeline_mode<synchronous>, transform_indices = @transform_1, window_bounds = array<i64: 12, 72>}, {pipeline_mode = #tpu.pipeline_mode<synchronous>, transform_indices = @transform_2, window_bounds = array<i64: 12, 1>}, {pipeline_mode = #tpu.pipeline_mode<synchronous>, transform_indices = @transform_3, window_bounds = array<i64: 12, 784>}, {pipeline_mode = #tpu.pipeline_mode<synchronous>, transform_indices = @transform_4, window_bounds = array<i64: 12, 784>}, {transform_indices = @transform_5, window_bounds = array<i64: 1, 12, 784>}]} {
    %c0 = arith.constant 0 : index
    %c0_0 = arith.constant 0 : index
    %0 = vector.load %arg2[%c0, %c0_0] : memref<12x72xbf16, #tpu.memory_space<vmem>>, vector<12x72xbf16>
    %c0_1 = arith.constant 0 : index
    %c0_2 = arith.constant 0 : index
    %c0_3 = arith.constant 0 : index
    %1 = vector.load %arg1[%c0_1, %c0_2, %c0_3] : memref<1x72x784xbf16, #tpu.memory_space<vmem>>, vector<1x72x784xbf16>
    %2 = vector.shape_cast %1 : vector<1x72x784xbf16> to vector<72x784xbf16>
    %cst = arith.constant dense<0.000000e+00> : vector<12x784xf32>
    %3 = tpu.matmul %0, %2, %cst {dimension_numbers = #tpu.dot_dimension_numbers<[1], [0], [0], [1], [0, 0, 1, 1], [], []>} : vector<12x72xbf16>, vector<72x784xbf16>, vector<12x784xf32> -> vector<12x784xf32>
    %c0_4 = arith.constant 0 : index
    %c0_5 = arith.constant 0 : index
    %4 = vector.load %arg3[%c0_4, %c0_5] : memref<12x1xf32, #tpu.memory_space<vmem>>, vector<12x1xf32>
    %5 = vector.broadcast %4 : vector<12x1xf32> to vector<12x784xf32>
    %6 = arith.addf %3, %5 : vector<12x784xf32>
    %c0_6 = arith.constant 0 : index
    %c0_7 = arith.constant 0 : index
    %7 = vector.load %arg4[%c0_6, %c0_7] : memref<12x784xf32, #tpu.memory_space<vmem>>, vector<12x784xf32>
    %c0_8 = arith.constant 0 : index
    %c0_9 = arith.constant 0 : index
    %8 = vector.load %arg5[%c0_8, %c0_9] : memref<12x784xf32, #tpu.memory_space<vmem>>, vector<12x784xf32>
    %9 = vector.extract_strided_slice %6 {offsets = [0, 0], sizes = [4, 784], strides = [1, 1]} : vector<12x784xf32> to vector<4x784xf32>
    %10 = vector.extract_strided_slice %7 {offsets = [0, 0], sizes = [4, 784], strides = [1, 1]} : vector<12x784xf32> to vector<4x784xf32>
    %11 = vector.extract_strided_slice %8 {offsets = [0, 0], sizes = [4, 784], strides = [1, 1]} : vector<12x784xf32> to vector<4x784xf32>
    %12 = vector.shape_cast %9 : vector<4x784xf32> to vector<1x4x784xf32>
    %cst_10 = arith.constant dense<0.000000e+00> : vector<1xf32>
    %13 = vector.multi_reduction <add>, %12, %cst_10 [1, 2] : vector<1x4x784xf32> to vector<1xf32>
    %14 = vector.shape_cast %13 : vector<1xf32> to vector<1x1x1xf32>
    %15 = vector.extract %14[0, 0, 0] : f32 from vector<1x1x1xf32>
    %16 = arith.mulf %9, %9 : vector<4x784xf32>
    %17 = vector.shape_cast %16 : vector<4x784xf32> to vector<1x4x784xf32>
    %cst_11 = arith.constant dense<0.000000e+00> : vector<1xf32>
    %18 = vector.multi_reduction <add>, %17, %cst_11 [1, 2] : vector<1x4x784xf32> to vector<1xf32>
    %19 = vector.shape_cast %18 : vector<1xf32> to vector<1x1x1xf32>
    %20 = vector.extract %19[0, 0, 0] : f32 from vector<1x1x1xf32>
    %cst_12 = arith.constant 3.136000e+03 : f32
    %21 = arith.divf %15, %cst_12 : f32
    %cst_13 = arith.constant 3.136000e+03 : f32
    %22 = arith.divf %20, %cst_13 : f32
    %23 = arith.mulf %21, %21 : f32
    %24 = arith.subf %22, %23 : f32
    %25 = vector.broadcast %21 : f32 to vector<4x784xf32>
    %26 = arith.subf %9, %25 : vector<4x784xf32>
    %cst_14 = arith.constant 9.99999974E-6 : f32
    %27 = arith.addf %24, %cst_14 : f32
    %28 = math.rsqrt %27 : f32
    %29 = vector.broadcast %28 : f32 to vector<4x784xf32>
    %30 = arith.mulf %26, %29 : vector<4x784xf32>
    %31 = arith.mulf %30, %10 : vector<4x784xf32>
    %32 = arith.addf %31, %11 : vector<4x784xf32>
    %cst_15 = arith.constant 0.000000e+00 : f32
    %33 = vector.broadcast %cst_15 : f32 to vector<4x784xf32>
    %34 = arith.maximumf %32, %33 : vector<4x784xf32>
    %35 = vector.extract_strided_slice %6 {offsets = [4, 0], sizes = [4, 784], strides = [1, 1]} : vector<12x784xf32> to vector<4x784xf32>
    %36 = vector.extract_strided_slice %7 {offsets = [4, 0], sizes = [4, 784], strides = [1, 1]} : vector<12x784xf32> to vector<4x784xf32>
    %37 = vector.extract_strided_slice %8 {offsets = [4, 0], sizes = [4, 784], strides = [1, 1]} : vector<12x784xf32> to vector<4x784xf32>
    %38 = vector.shape_cast %35 : vector<4x784xf32> to vector<1x4x784xf32>
    %cst_16 = arith.constant dense<0.000000e+00> : vector<1xf32>
    %39 = vector.multi_reduction <add>, %38, %cst_16 [1, 2] : vector<1x4x784xf32> to vector<1xf32>
    %40 = vector.shape_cast %39 : vector<1xf32> to vector<1x1x1xf32>
    %41 = vector.extract %40[0, 0, 0] : f32 from vector<1x1x1xf32>
    %42 = arith.mulf %35, %35 : vector<4x784xf32>
    %43 = vector.shape_cast %42 : vector<4x784xf32> to vector<1x4x784xf32>
    %cst_17 = arith.constant dense<0.000000e+00> : vector<1xf32>
    %44 = vector.multi_reduction <add>, %43, %cst_17 [1, 2] : vector<1x4x784xf32> to vector<1xf32>
    %45 = vector.shape_cast %44 : vector<1xf32> to vector<1x1x1xf32>
    %46 = vector.extract %45[0, 0, 0] : f32 from vector<1x1x1xf32>
    %cst_18 = arith.constant 3.136000e+03 : f32
    %47 = arith.divf %41, %cst_18 : f32
    %cst_19 = arith.constant 3.136000e+03 : f32
    %48 = arith.divf %46, %cst_19 : f32
    %49 = arith.mulf %47, %47 : f32
    %50 = arith.subf %48, %49 : f32
    %51 = vector.broadcast %47 : f32 to vector<4x784xf32>
    %52 = arith.subf %35, %51 : vector<4x784xf32>
    %cst_20 = arith.constant 9.99999974E-6 : f32
    %53 = arith.addf %50, %cst_20 : f32
    %54 = math.rsqrt %53 : f32
    %55 = vector.broadcast %54 : f32 to vector<4x784xf32>
    %56 = arith.mulf %52, %55 : vector<4x784xf32>
    %57 = arith.mulf %56, %36 : vector<4x784xf32>
    %58 = arith.addf %57, %37 : vector<4x784xf32>
    %cst_21 = arith.constant 0.000000e+00 : f32
    %59 = vector.broadcast %cst_21 : f32 to vector<4x784xf32>
    %60 = arith.maximumf %58, %59 : vector<4x784xf32>
    %61 = vector.extract_strided_slice %6 {offsets = [8, 0], sizes = [4, 784], strides = [1, 1]} : vector<12x784xf32> to vector<4x784xf32>
    %62 = vector.extract_strided_slice %7 {offsets = [8, 0], sizes = [4, 784], strides = [1, 1]} : vector<12x784xf32> to vector<4x784xf32>
    %63 = vector.extract_strided_slice %8 {offsets = [8, 0], sizes = [4, 784], strides = [1, 1]} : vector<12x784xf32> to vector<4x784xf32>
    %64 = vector.shape_cast %61 : vector<4x784xf32> to vector<1x4x784xf32>
    %cst_22 = arith.constant dense<0.000000e+00> : vector<1xf32>
    %65 = vector.multi_reduction <add>, %64, %cst_22 [1, 2] : vector<1x4x784xf32> to vector<1xf32>
    %66 = vector.shape_cast %65 : vector<1xf32> to vector<1x1x1xf32>
    %67 = vector.extract %66[0, 0, 0] : f32 from vector<1x1x1xf32>
    %68 = arith.mulf %61, %61 : vector<4x784xf32>
    %69 = vector.shape_cast %68 : vector<4x784xf32> to vector<1x4x784xf32>
    %cst_23 = arith.constant dense<0.000000e+00> : vector<1xf32>
    %70 = vector.multi_reduction <add>, %69, %cst_23 [1, 2] : vector<1x4x784xf32> to vector<1xf32>
    %71 = vector.shape_cast %70 : vector<1xf32> to vector<1x1x1xf32>
    %72 = vector.extract %71[0, 0, 0] : f32 from vector<1x1x1xf32>
    %cst_24 = arith.constant 3.136000e+03 : f32
    %73 = arith.divf %67, %cst_24 : f32
    %cst_25 = arith.constant 3.136000e+03 : f32
    %74 = arith.divf %72, %cst_25 : f32
    %75 = arith.mulf %73, %73 : f32
    %76 = arith.subf %74, %75 : f32
    %77 = vector.broadcast %73 : f32 to vector<4x784xf32>
    %78 = arith.subf %61, %77 : vector<4x784xf32>
    %cst_26 = arith.constant 9.99999974E-6 : f32
    %79 = arith.addf %76, %cst_26 : f32
    %80 = math.rsqrt %79 : f32
    %81 = vector.broadcast %80 : f32 to vector<4x784xf32>
    %82 = arith.mulf %78, %81 : vector<4x784xf32>
    %83 = arith.mulf %82, %62 : vector<4x784xf32>
    %84 = arith.addf %83, %63 : vector<4x784xf32>
    %cst_27 = arith.constant 0.000000e+00 : f32
    %85 = vector.broadcast %cst_27 : f32 to vector<4x784xf32>
    %86 = arith.maximumf %84, %85 : vector<4x784xf32>
    %87 = tpu.concatenate %34, %60, %86 in 0 : vector<4x784xf32>, vector<4x784xf32>, vector<4x784xf32> -> vector<12x784xf32>
    %88 = arith.truncf %87 : vector<12x784xf32> to vector<12x784xbf16>
    %c0_28 = arith.constant 0 : index
    %c0_29 = arith.constant 0 : index
    %c0_30 = arith.constant 0 : index
    %89 = vector.load %arg6[%c0_28, %c0_29, %c0_30] : memref<1x12x784xbf16, #tpu.memory_space<vmem>>, vector<1x12x784xbf16>
    %90 = vector.shape_cast %89 : vector<1x12x784xbf16> to vector<12x784xbf16>
    %91 = vector.shape_cast %88 : vector<12x784xbf16> to vector<1x12x784xbf16>
    tpu.vector_store %arg6[%c0_28, %c0_29, %c0_30], %91 {strides = array<i32>} : memref<1x12x784xbf16, #tpu.memory_space<vmem>>, vector<1x12x784xbf16>,
    return
  }
  func.func @transform_0(%arg0: i32) -> (i32, i32, i32) {
    %c0_i32 = arith.constant 0 : i32
    %c0_i32_0 = arith.constant 0 : i32
    %c0_i32_1 = arith.constant 0 : i32
    return %arg0, %c0_i32, %c0_i32_0 : i32, i32, i32
  }
  func.func @transform_1(%arg0: i32) -> (i32, i32) {
    %c0_i32 = arith.constant 0 : i32
    %c0_i32_0 = arith.constant 0 : i32
    %c0_i32_1 = arith.constant 0 : i32
    return %c0_i32, %c0_i32_0 : i32, i32
  }
  func.func @transform_2(%arg0: i32) -> (i32, i32) {
    %c0_i32 = arith.constant 0 : i32
    %c0_i32_0 = arith.constant 0 : i32
    %c0_i32_1 = arith.constant 0 : i32
    return %c0_i32, %c0_i32_0 : i32, i32
  }
  func.func @transform_3(%arg0: i32) -> (i32, i32) {
    %c0_i32 = arith.constant 0 : i32
    %c0_i32_0 = arith.constant 0 : i32
    %c0_i32_1 = arith.constant 0 : i32
    return %c0_i32, %c0_i32_0 : i32, i32
  }
  func.func @transform_4(%arg0: i32) -> (i32, i32) {
    %c0_i32 = arith.constant 0 : i32
    %c0_i32_0 = arith.constant 0 : i32
    %c0_i32_1 = arith.constant 0 : i32
    return %c0_i32, %c0_i32_0 : i32, i32
  }
  func.func @transform_5(%arg0: i32) -> (i32, i32, i32) {
    %c0_i32 = arith.constant 0 : i32
    %c0_i32_0 = arith.constant 0 : i32
    %c0_i32_1 = arith.constant 0 : i32
    return %arg0, %c0_i32, %c0_i32_0 : i32, i32, i32
  }
}

module attributes {stable_mosaic.version = 11 : i64} {
  func.func @gates_conv1_kernel(%arg0: i32, %arg1: memref<1x108x784xbf16, #tpu.memory_space<vmem>>, %arg2: memref<12x108xbf16, #tpu.memory_space<vmem>>, %arg3: memref<12x1xf32, #tpu.memory_space<vmem>>, %arg4: memref<12x784xf32, #tpu.memory_space<vmem>>, %arg5: memref<12x784xf32, #tpu.memory_space<vmem>>, %arg6: memref<1x4x784xf32, #tpu.memory_space<vmem>>, %arg7: memref<1x4x784xf32, #tpu.memory_space<vmem>>) attributes {dimension_semantics = [#tpu.dimension_semantics<parallel>], iteration_bounds = array<i64: 2>, scalar_prefetch = 0 : i64, scratch_operands = 0 : i64, tpu.core_type = #tpu.core_type<tc>, window_params = [{transform_indices = @transform_0, window_bounds = array<i64: 1, 108, 784>}, {pipeline_mode = #tpu.pipeline_mode<synchronous>, transform_indices = @transform_1, window_bounds = array<i64: 12, 108>}, {pipeline_mode = #tpu.pipeline_mode<synchronous>, transform_indices = @transform_2, window_bounds = array<i64: 12, 1>}, {pipeline_mode = #tpu.pipeline_mode<synchronous>, transform_indices = @transform_3, window_bounds = array<i64: 12, 784>}, {pipeline_mode = #tpu.pipeline_mode<synchronous>, transform_indices = @transform_4, window_bounds = array<i64: 12, 784>}, {transform_indices = @transform_5, window_bounds = array<i64: 1, 4, 784>}, {transform_indices = @transform_6, window_bounds = array<i64: 1, 4, 784>}]} {
    %c0 = arith.constant 0 : index
    %c0_0 = arith.constant 0 : index
    %0 = vector.load %arg2[%c0, %c0_0] : memref<12x108xbf16, #tpu.memory_space<vmem>>, vector<12x108xbf16>
    %c0_1 = arith.constant 0 : index
    %c0_2 = arith.constant 0 : index
    %c0_3 = arith.constant 0 : index
    %1 = vector.load %arg1[%c0_1, %c0_2, %c0_3] : memref<1x108x784xbf16, #tpu.memory_space<vmem>>, vector<1x108x784xbf16>
    %2 = vector.shape_cast %1 : vector<1x108x784xbf16> to vector<108x784xbf16>
    %cst = arith.constant dense<0.000000e+00> : vector<12x784xf32>
    %3 = tpu.matmul %0, %2, %cst {dimension_numbers = #tpu.dot_dimension_numbers<[1], [0], [0], [1], [0, 0, 1, 1], [], []>} : vector<12x108xbf16>, vector<108x784xbf16>, vector<12x784xf32> -> vector<12x784xf32>
    %c0_4 = arith.constant 0 : index
    %c0_5 = arith.constant 0 : index
    %4 = vector.load %arg3[%c0_4, %c0_5] : memref<12x1xf32, #tpu.memory_space<vmem>>, vector<12x1xf32>
    %5 = vector.broadcast %4 : vector<12x1xf32> to vector<12x784xf32>
    %6 = arith.addf %3, %5 : vector<12x784xf32>
    %c0_6 = arith.constant 0 : index
    %c0_7 = arith.constant 0 : index
    %7 = vector.load %arg4[%c0_6, %c0_7] : memref<12x784xf32, #tpu.memory_space<vmem>>, vector<12x784xf32>
    %c0_8 = arith.constant 0 : index
    %c0_9 = arith.constant 0 : index
    %8 = vector.load %arg5[%c0_8, %c0_9] : memref<12x784xf32, #tpu.memory_space<vmem>>, vector<12x784xf32>
    %9 = vector.extract_strided_slice %6 {offsets = [0, 0], sizes = [4, 784], strides = [1, 1]} : vector<12x784xf32> to vector<4x784xf32>
    %10 = vector.extract_strided_slice %7 {offsets = [0, 0], sizes = [4, 784], strides = [1, 1]} : vector<12x784xf32> to vector<4x784xf32>
    %11 = vector.extract_strided_slice %8 {offsets = [0, 0], sizes = [4, 784], strides = [1, 1]} : vector<12x784xf32> to vector<4x784xf32>
    %12 = vector.shape_cast %9 : vector<4x784xf32> to vector<1x4x784xf32>
    %cst_10 = arith.constant dense<0.000000e+00> : vector<1xf32>
    %13 = vector.multi_reduction <add>, %12, %cst_10 [1, 2] : vector<1x4x784xf32> to vector<1xf32>
    %14 = vector.shape_cast %13 : vector<1xf32> to vector<1x1x1xf32>
    %15 = vector.extract %14[0, 0, 0] : f32 from vector<1x1x1xf32>
    %16 = arith.mulf %9, %9 : vector<4x784xf32>
    %17 = vector.shape_cast %16 : vector<4x784xf32> to vector<1x4x784xf32>
    %cst_11 = arith.constant dense<0.000000e+00> : vector<1xf32>
    %18 = vector.multi_reduction <add>, %17, %cst_11 [1, 2] : vector<1x4x784xf32> to vector<1xf32>
    %19 = vector.shape_cast %18 : vector<1xf32> to vector<1x1x1xf32>
    %20 = vector.extract %19[0, 0, 0] : f32 from vector<1x1x1xf32>
    %cst_12 = arith.constant 3.136000e+03 : f32
    %21 = arith.divf %15, %cst_12 : f32
    %cst_13 = arith.constant 3.136000e+03 : f32
    %22 = arith.divf %20, %cst_13 : f32
    %23 = arith.mulf %21, %21 : f32
    %24 = arith.subf %22, %23 : f32
    %25 = vector.broadcast %21 : f32 to vector<4x784xf32>
    %26 = arith.subf %9, %25 : vector<4x784xf32>
    %cst_14 = arith.constant 9.99999974E-6 : f32
    %27 = arith.addf %24, %cst_14 : f32
    %28 = math.rsqrt %27 : f32
    %29 = vector.broadcast %28 : f32 to vector<4x784xf32>
    %30 = arith.mulf %26, %29 : vector<4x784xf32>
    %31 = arith.mulf %30, %10 : vector<4x784xf32>
    %32 = arith.addf %31, %11 : vector<4x784xf32>
    %33 = arith.negf %32 : vector<4x784xf32>
    %34 = math.exp %33 : vector<4x784xf32>
    %cst_15 = arith.constant 1.000000e+00 : f32
    %35 = vector.broadcast %cst_15 : f32 to vector<4x784xf32>
    %36 = arith.addf %35, %34 : vector<4x784xf32>
    %37 = arith.divf %35, %36 : vector<4x784xf32>
    %38 = vector.extract_strided_slice %6 {offsets = [4, 0], sizes = [4, 784], strides = [1, 1]} : vector<12x784xf32> to vector<4x784xf32>
    %39 = vector.extract_strided_slice %7 {offsets = [4, 0], sizes = [4, 784], strides = [1, 1]} : vector<12x784xf32> to vector<4x784xf32>
    %40 = vector.extract_strided_slice %8 {offsets = [4, 0], sizes = [4, 784], strides = [1, 1]} : vector<12x784xf32> to vector<4x784xf32>
    %41 = vector.shape_cast %38 : vector<4x784xf32> to vector<1x4x784xf32>
    %cst_16 = arith.constant dense<0.000000e+00> : vector<1xf32>
    %42 = vector.multi_reduction <add>, %41, %cst_16 [1, 2] : vector<1x4x784xf32> to vector<1xf32>
    %43 = vector.shape_cast %42 : vector<1xf32> to vector<1x1x1xf32>
    %44 = vector.extract %43[0, 0, 0] : f32 from vector<1x1x1xf32>
    %45 = arith.mulf %38, %38 : vector<4x784xf32>
    %46 = vector.shape_cast %45 : vector<4x784xf32> to vector<1x4x784xf32>
    %cst_17 = arith.constant dense<0.000000e+00> : vector<1xf32>
    %47 = vector.multi_reduction <add>, %46, %cst_17 [1, 2] : vector<1x4x784xf32> to vector<1xf32>
    %48 = vector.shape_cast %47 : vector<1xf32> to vector<1x1x1xf32>
    %49 = vector.extract %48[0, 0, 0] : f32 from vector<1x1x1xf32>
    %cst_18 = arith.constant 3.136000e+03 : f32
    %50 = arith.divf %44, %cst_18 : f32
    %cst_19 = arith.constant 3.136000e+03 : f32
    %51 = arith.divf %49, %cst_19 : f32
    %52 = arith.mulf %50, %50 : f32
    %53 = arith.subf %51, %52 : f32
    %54 = vector.broadcast %50 : f32 to vector<4x784xf32>
    %55 = arith.subf %38, %54 : vector<4x784xf32>
    %cst_20 = arith.constant 9.99999974E-6 : f32
    %56 = arith.addf %53, %cst_20 : f32
    %57 = math.rsqrt %56 : f32
    %58 = vector.broadcast %57 : f32 to vector<4x784xf32>
    %59 = arith.mulf %55, %58 : vector<4x784xf32>
    %60 = arith.mulf %59, %39 : vector<4x784xf32>
    %61 = arith.addf %60, %40 : vector<4x784xf32>
    %62 = arith.negf %61 : vector<4x784xf32>
    %63 = math.exp %62 : vector<4x784xf32>
    %cst_21 = arith.constant 1.000000e+00 : f32
    %64 = vector.broadcast %cst_21 : f32 to vector<4x784xf32>
    %65 = arith.addf %64, %63 : vector<4x784xf32>
    %66 = arith.divf %64, %65 : vector<4x784xf32>
    %67 = vector.extract_strided_slice %6 {offsets = [8, 0], sizes = [4, 784], strides = [1, 1]} : vector<12x784xf32> to vector<4x784xf32>
    %68 = vector.extract_strided_slice %7 {offsets = [8, 0], sizes = [4, 784], strides = [1, 1]} : vector<12x784xf32> to vector<4x784xf32>
    %69 = vector.extract_strided_slice %8 {offsets = [8, 0], sizes = [4, 784], strides = [1, 1]} : vector<12x784xf32> to vector<4x784xf32>
    %70 = vector.shape_cast %67 : vector<4x784xf32> to vector<1x4x784xf32>
    %cst_22 = arith.constant dense<0.000000e+00> : vector<1xf32>
    %71 = vector.multi_reduction <add>, %70, %cst_22 [1, 2] : vector<1x4x784xf32> to vector<1xf32>
    %72 = vector.shape_cast %71 : vector<1xf32> to vector<1x1x1xf32>
    %73 = vector.extract %72[0, 0, 0] : f32 from vector<1x1x1xf32>
    %74 = arith.mulf %67, %67 : vector<4x784xf32>
    %75 = vector.shape_cast %74 : vector<4x784xf32> to vector<1x4x784xf32>
    %cst_23 = arith.constant dense<0.000000e+00> : vector<1xf32>
    %76 = vector.multi_reduction <add>, %75, %cst_23 [1, 2] : vector<1x4x784xf32> to vector<1xf32>
    %77 = vector.shape_cast %76 : vector<1xf32> to vector<1x1x1xf32>
    %78 = vector.extract %77[0, 0, 0] : f32 from vector<1x1x1xf32>
    %cst_24 = arith.constant 3.136000e+03 : f32
    %79 = arith.divf %73, %cst_24 : f32
    %cst_25 = arith.constant 3.136000e+03 : f32
    %80 = arith.divf %78, %cst_25 : f32
    %81 = arith.mulf %79, %79 : f32
    %82 = arith.subf %80, %81 : f32
    %83 = vector.broadcast %79 : f32 to vector<4x784xf32>
    %84 = arith.subf %67, %83 : vector<4x784xf32>
    %cst_26 = arith.constant 9.99999974E-6 : f32
    %85 = arith.addf %82, %cst_26 : f32
    %86 = math.rsqrt %85 : f32
    %87 = vector.broadcast %86 : f32 to vector<4x784xf32>
    %88 = arith.mulf %84, %87 : vector<4x784xf32>
    %89 = arith.mulf %88, %68 : vector<4x784xf32>
    %90 = arith.addf %89, %69 : vector<4x784xf32>
    %91 = math.tanh %90 : vector<4x784xf32>
    %92 = arith.mulf %37, %91 : vector<4x784xf32>
    %c0_27 = arith.constant 0 : index
    %c0_28 = arith.constant 0 : index
    %c0_29 = arith.constant 0 : index
    %93 = vector.load %arg6[%c0_27, %c0_28, %c0_29] : memref<1x4x784xf32, #tpu.memory_space<vmem>>, vector<1x4x784xf32>
    %94 = vector.shape_cast %93 : vector<1x4x784xf32> to vector<4x784xf32>
    %95 = arith.mulf %66, %94 : vector<4x784xf32>
    %96 = arith.addf %92, %95 : vector<4x784xf32>
    %c0_30 = arith.constant 0 : index
    %c0_31 = arith.constant 0 : index
    %c0_32 = arith.constant 0 : index
    %97 = vector.load %arg7[%c0_30, %c0_31, %c0_32] : memref<1x4x784xf32, #tpu.memory_space<vmem>>, vector<1x4x784xf32>
    %98 = vector.shape_cast %97 : vector<1x4x784xf32> to vector<4x784xf32>
    %99 = vector.shape_cast %96 : vector<4x784xf32> to vector<1x4x784xf32>
    tpu.vector_store %arg7[%c0_30, %c0_31, %c0_32], %99 {strides = array<i32>} : memref<1x4x784xf32, #tpu.memory_space<vmem>>, vector<1x4x784xf32>,
    return
  }
  func.func @transform_0(%arg0: i32) -> (i32, i32, i32) {
    %c0_i32 = arith.constant 0 : i32
    %c0_i32_0 = arith.constant 0 : i32
    %c0_i32_1 = arith.constant 0 : i32
    return %arg0, %c0_i32, %c0_i32_0 : i32, i32, i32
  }
  func.func @transform_1(%arg0: i32) -> (i32, i32) {
    %c0_i32 = arith.constant 0 : i32
    %c0_i32_0 = arith.constant 0 : i32
    %c0_i32_1 = arith.constant 0 : i32
    return %c0_i32, %c0_i32_0 : i32, i32
  }
  func.func @transform_2(%arg0: i32) -> (i32, i32) {
    %c0_i32 = arith.constant 0 : i32
    %c0_i32_0 = arith.constant 0 : i32
    %c0_i32_1 = arith.constant 0 : i32
    return %c0_i32, %c0_i32_0 : i32, i32
  }
  func.func @transform_3(%arg0: i32) -> (i32, i32) {
    %c0_i32 = arith.constant 0 : i32
    %c0_i32_0 = arith.constant 0 : i32
    %c0_i32_1 = arith.constant 0 : i32
    return %c0_i32, %c0_i32_0 : i32, i32
  }
  func.func @transform_4(%arg0: i32) -> (i32, i32) {
    %c0_i32 = arith.constant 0 : i32
    %c0_i32_0 = arith.constant 0 : i32
    %c0_i32_1 = arith.constant 0 : i32
    return %c0_i32, %c0_i32_0 : i32, i32
  }
  func.func @transform_5(%arg0: i32) -> (i32, i32, i32) {
    %c0_i32 = arith.constant 0 : i32
    %c0_i32_0 = arith.constant 0 : i32
    %c0_i32_1 = arith.constant 0 : i32
    return %arg0, %c0_i32, %c0_i32_0 : i32, i32, i32
  }
  func.func @transform_6(%arg0: i32) -> (i32, i32, i32) {
    %c0_i32 = arith.constant 0 : i32
    %c0_i32_0 = arith.constant 0 : i32
    %c0_i32_1 = arith.constant 0 : i32
    return %arg0, %c0_i32, %c0_i32_0 : i32, i32, i32
  }
}

module attributes {stable_mosaic.version = 11 : i64} {
  func.func @conv_ln_relu_kernel(%arg0: i32, %arg1: memref<1x72x784xbf16, #tpu.memory_space<vmem>>, %arg2: memref<4x72xbf16, #tpu.memory_space<vmem>>, %arg3: memref<4x1xf32, #tpu.memory_space<vmem>>, %arg4: memref<4x784xf32, #tpu.memory_space<vmem>>, %arg5: memref<4x784xf32, #tpu.memory_space<vmem>>, %arg6: memref<1x4x784xbf16, #tpu.memory_space<vmem>>) attributes {dimension_semantics = [#tpu.dimension_semantics<parallel>], iteration_bounds = array<i64: 2>, scalar_prefetch = 0 : i64, scratch_operands = 0 : i64, tpu.core_type = #tpu.core_type<tc>, window_params = [{transform_indices = @transform_0, window_bounds = array<i64: 1, 72, 784>}, {pipeline_mode = #tpu.pipeline_mode<synchronous>, transform_indices = @transform_1, window_bounds = array<i64: 4, 72>}, {pipeline_mode = #tpu.pipeline_mode<synchronous>, transform_indices = @transform_2, window_bounds = array<i64: 4, 1>}, {pipeline_mode = #tpu.pipeline_mode<synchronous>, transform_indices = @transform_3, window_bounds = array<i64: 4, 784>}, {pipeline_mode = #tpu.pipeline_mode<synchronous>, transform_indices = @transform_4, window_bounds = array<i64: 4, 784>}, {transform_indices = @transform_5, window_bounds = array<i64: 1, 4, 784>}]} {
    %c0 = arith.constant 0 : index
    %c0_0 = arith.constant 0 : index
    %0 = vector.load %arg2[%c0, %c0_0] : memref<4x72xbf16, #tpu.memory_space<vmem>>, vector<4x72xbf16>
    %c0_1 = arith.constant 0 : index
    %c0_2 = arith.constant 0 : index
    %c0_3 = arith.constant 0 : index
    %1 = vector.load %arg1[%c0_1, %c0_2, %c0_3] : memref<1x72x784xbf16, #tpu.memory_space<vmem>>, vector<1x72x784xbf16>
    %2 = vector.shape_cast %1 : vector<1x72x784xbf16> to vector<72x784xbf16>
    %cst = arith.constant dense<0.000000e+00> : vector<4x784xf32>
    %3 = tpu.matmul %0, %2, %cst {dimension_numbers = #tpu.dot_dimension_numbers<[1], [0], [0], [1], [0, 0, 1, 1], [], []>} : vector<4x72xbf16>, vector<72x784xbf16>, vector<4x784xf32> -> vector<4x784xf32>
    %c0_4 = arith.constant 0 : index
    %c0_5 = arith.constant 0 : index
    %4 = vector.load %arg3[%c0_4, %c0_5] : memref<4x1xf32, #tpu.memory_space<vmem>>, vector<4x1xf32>
    %5 = vector.broadcast %4 : vector<4x1xf32> to vector<4x784xf32>
    %6 = arith.addf %3, %5 : vector<4x784xf32>
    %c0_6 = arith.constant 0 : index
    %c0_7 = arith.constant 0 : index
    %7 = vector.load %arg4[%c0_6, %c0_7] : memref<4x784xf32, #tpu.memory_space<vmem>>, vector<4x784xf32>
    %c0_8 = arith.constant 0 : index
    %c0_9 = arith.constant 0 : index
    %8 = vector.load %arg5[%c0_8, %c0_9] : memref<4x784xf32, #tpu.memory_space<vmem>>, vector<4x784xf32>
    %9 = vector.shape_cast %6 : vector<4x784xf32> to vector<1x4x784xf32>
    %cst_10 = arith.constant dense<0.000000e+00> : vector<1xf32>
    %10 = vector.multi_reduction <add>, %9, %cst_10 [1, 2] : vector<1x4x784xf32> to vector<1xf32>
    %11 = vector.shape_cast %10 : vector<1xf32> to vector<1x1x1xf32>
    %12 = vector.extract %11[0, 0, 0] : f32 from vector<1x1x1xf32>
    %13 = arith.mulf %6, %6 : vector<4x784xf32>
    %14 = vector.shape_cast %13 : vector<4x784xf32> to vector<1x4x784xf32>
    %cst_11 = arith.constant dense<0.000000e+00> : vector<1xf32>
    %15 = vector.multi_reduction <add>, %14, %cst_11 [1, 2] : vector<1x4x784xf32> to vector<1xf32>
    %16 = vector.shape_cast %15 : vector<1xf32> to vector<1x1x1xf32>
    %17 = vector.extract %16[0, 0, 0] : f32 from vector<1x1x1xf32>
    %cst_12 = arith.constant 3.136000e+03 : f32
    %18 = arith.divf %12, %cst_12 : f32
    %cst_13 = arith.constant 3.136000e+03 : f32
    %19 = arith.divf %17, %cst_13 : f32
    %20 = arith.mulf %18, %18 : f32
    %21 = arith.subf %19, %20 : f32
    %22 = vector.broadcast %18 : f32 to vector<4x784xf32>
    %23 = arith.subf %6, %22 : vector<4x784xf32>
    %cst_14 = arith.constant 9.99999974E-6 : f32
    %24 = arith.addf %21, %cst_14 : f32
    %25 = math.rsqrt %24 : f32
    %26 = vector.broadcast %25 : f32 to vector<4x784xf32>
    %27 = arith.mulf %23, %26 : vector<4x784xf32>
    %28 = arith.mulf %27, %7 : vector<4x784xf32>
    %29 = arith.addf %28, %8 : vector<4x784xf32>
    %cst_15 = arith.constant 0.000000e+00 : f32
    %30 = vector.broadcast %cst_15 : f32 to vector<4x784xf32>
    %31 = arith.maximumf %29, %30 : vector<4x784xf32>
    %32 = arith.truncf %31 : vector<4x784xf32> to vector<4x784xbf16>
    %c0_16 = arith.constant 0 : index
    %c0_17 = arith.constant 0 : index
    %c0_18 = arith.constant 0 : index
    %33 = vector.load %arg6[%c0_16, %c0_17, %c0_18] : memref<1x4x784xbf16, #tpu.memory_space<vmem>>, vector<1x4x784xbf16>
    %34 = vector.shape_cast %33 : vector<1x4x784xbf16> to vector<4x784xbf16>
    %35 = vector.shape_cast %32 : vector<4x784xbf16> to vector<1x4x784xbf16>
    tpu.vector_store %arg6[%c0_16, %c0_17, %c0_18], %35 {strides = array<i32>} : memref<1x4x784xbf16, #tpu.memory_space<vmem>>, vector<1x4x784xbf16>,
    return
  }
  func.func @transform_0(%arg0: i32) -> (i32, i32, i32) {
    %c0_i32 = arith.constant 0 : i32
    %c0_i32_0 = arith.constant 0 : i32
    %c0_i32_1 = arith.constant 0 : i32
    return %arg0, %c0_i32, %c0_i32_0 : i32, i32, i32
  }
  func.func @transform_1(%arg0: i32) -> (i32, i32) {
    %c0_i32 = arith.constant 0 : i32
    %c0_i32_0 = arith.constant 0 : i32
    %c0_i32_1 = arith.constant 0 : i32
    return %c0_i32, %c0_i32_0 : i32, i32
  }
  func.func @transform_2(%arg0: i32) -> (i32, i32) {
    %c0_i32 = arith.constant 0 : i32
    %c0_i32_0 = arith.constant 0 : i32
    %c0_i32_1 = arith.constant 0 : i32
    return %c0_i32, %c0_i32_0 : i32, i32
  }
  func.func @transform_3(%arg0: i32) -> (i32, i32) {
    %c0_i32 = arith.constant 0 : i32
    %c0_i32_0 = arith.constant 0 : i32
    %c0_i32_1 = arith.constant 0 : i32
    return %c0_i32, %c0_i32_0 : i32, i32
  }
  func.func @transform_4(%arg0: i32) -> (i32, i32) {
    %c0_i32 = arith.constant 0 : i32
    %c0_i32_0 = arith.constant 0 : i32
    %c0_i32_1 = arith.constant 0 : i32
    return %c0_i32, %c0_i32_0 : i32, i32
  }
  func.func @transform_5(%arg0: i32) -> (i32, i32, i32) {
    %c0_i32 = arith.constant 0 : i32
    %c0_i32_0 = arith.constant 0 : i32
    %c0_i32_1 = arith.constant 0 : i32
    return %arg0, %c0_i32, %c0_i32_0 : i32, i32, i32
  }
}

module attributes {stable_mosaic.version = 11 : i64} {
  func.func @forward_conv1_kernel(%arg0: i32, %arg1: memref<1x36x784xbf16, #tpu.memory_space<vmem>>, %arg2: memref<4x36xbf16, #tpu.memory_space<vmem>>, %arg3: memref<4x1xf32, #tpu.memory_space<vmem>>, %arg4: memref<4x784xf32, #tpu.memory_space<vmem>>, %arg5: memref<4x784xf32, #tpu.memory_space<vmem>>, %arg6: memref<1x4x784xf32, #tpu.memory_space<vmem>>, %arg7: memref<1x4x784xf32, #tpu.memory_space<vmem>>) attributes {dimension_semantics = [#tpu.dimension_semantics<parallel>], iteration_bounds = array<i64: 2>, scalar_prefetch = 0 : i64, scratch_operands = 0 : i64, tpu.core_type = #tpu.core_type<tc>, window_params = [{transform_indices = @transform_0, window_bounds = array<i64: 1, 36, 784>}, {pipeline_mode = #tpu.pipeline_mode<synchronous>, transform_indices = @transform_1, window_bounds = array<i64: 4, 36>}, {pipeline_mode = #tpu.pipeline_mode<synchronous>, transform_indices = @transform_2, window_bounds = array<i64: 4, 1>}, {pipeline_mode = #tpu.pipeline_mode<synchronous>, transform_indices = @transform_3, window_bounds = array<i64: 4, 784>}, {pipeline_mode = #tpu.pipeline_mode<synchronous>, transform_indices = @transform_4, window_bounds = array<i64: 4, 784>}, {transform_indices = @transform_5, window_bounds = array<i64: 1, 4, 784>}, {transform_indices = @transform_6, window_bounds = array<i64: 1, 4, 784>}]} {
    %c0 = arith.constant 0 : index
    %c0_0 = arith.constant 0 : index
    %0 = vector.load %arg2[%c0, %c0_0] : memref<4x36xbf16, #tpu.memory_space<vmem>>, vector<4x36xbf16>
    %c0_1 = arith.constant 0 : index
    %c0_2 = arith.constant 0 : index
    %c0_3 = arith.constant 0 : index
    %1 = vector.load %arg1[%c0_1, %c0_2, %c0_3] : memref<1x36x784xbf16, #tpu.memory_space<vmem>>, vector<1x36x784xbf16>
    %2 = vector.shape_cast %1 : vector<1x36x784xbf16> to vector<36x784xbf16>
    %cst = arith.constant dense<0.000000e+00> : vector<4x784xf32>
    %3 = tpu.matmul %0, %2, %cst {dimension_numbers = #tpu.dot_dimension_numbers<[1], [0], [0], [1], [0, 0, 1, 1], [], []>} : vector<4x36xbf16>, vector<36x784xbf16>, vector<4x784xf32> -> vector<4x784xf32>
    %c0_4 = arith.constant 0 : index
    %c0_5 = arith.constant 0 : index
    %4 = vector.load %arg3[%c0_4, %c0_5] : memref<4x1xf32, #tpu.memory_space<vmem>>, vector<4x1xf32>
    %5 = vector.broadcast %4 : vector<4x1xf32> to vector<4x784xf32>
    %6 = arith.addf %3, %5 : vector<4x784xf32>
    %c0_6 = arith.constant 0 : index
    %c0_7 = arith.constant 0 : index
    %7 = vector.load %arg4[%c0_6, %c0_7] : memref<4x784xf32, #tpu.memory_space<vmem>>, vector<4x784xf32>
    %c0_8 = arith.constant 0 : index
    %c0_9 = arith.constant 0 : index
    %8 = vector.load %arg5[%c0_8, %c0_9] : memref<4x784xf32, #tpu.memory_space<vmem>>, vector<4x784xf32>
    %9 = vector.shape_cast %6 : vector<4x784xf32> to vector<1x4x784xf32>
    %cst_10 = arith.constant dense<0.000000e+00> : vector<1xf32>
    %10 = vector.multi_reduction <add>, %9, %cst_10 [1, 2] : vector<1x4x784xf32> to vector<1xf32>
    %11 = vector.shape_cast %10 : vector<1xf32> to vector<1x1x1xf32>
    %12 = vector.extract %11[0, 0, 0] : f32 from vector<1x1x1xf32>
    %13 = arith.mulf %6, %6 : vector<4x784xf32>
    %14 = vector.shape_cast %13 : vector<4x784xf32> to vector<1x4x784xf32>
    %cst_11 = arith.constant dense<0.000000e+00> : vector<1xf32>
    %15 = vector.multi_reduction <add>, %14, %cst_11 [1, 2] : vector<1x4x784xf32> to vector<1xf32>
    %16 = vector.shape_cast %15 : vector<1xf32> to vector<1x1x1xf32>
    %17 = vector.extract %16[0, 0, 0] : f32 from vector<1x1x1xf32>
    %cst_12 = arith.constant 3.136000e+03 : f32
    %18 = arith.divf %12, %cst_12 : f32
    %cst_13 = arith.constant 3.136000e+03 : f32
    %19 = arith.divf %17, %cst_13 : f32
    %20 = arith.mulf %18, %18 : f32
    %21 = arith.subf %19, %20 : f32
    %22 = vector.broadcast %18 : f32 to vector<4x784xf32>
    %23 = arith.subf %6, %22 : vector<4x784xf32>
    %cst_14 = arith.constant 9.99999974E-6 : f32
    %24 = arith.addf %21, %cst_14 : f32
    %25 = math.rsqrt %24 : f32
    %26 = vector.broadcast %25 : f32 to vector<4x784xf32>
    %27 = arith.mulf %23, %26 : vector<4x784xf32>
    %28 = arith.mulf %27, %7 : vector<4x784xf32>
    %29 = arith.addf %28, %8 : vector<4x784xf32>
    %c0_15 = arith.constant 0 : index
    %c0_16 = arith.constant 0 : index
    %c0_17 = arith.constant 0 : index
    %30 = vector.load %arg6[%c0_15, %c0_16, %c0_17] : memref<1x4x784xf32, #tpu.memory_space<vmem>>, vector<1x4x784xf32>
    %31 = vector.shape_cast %30 : vector<1x4x784xf32> to vector<4x784xf32>
    %32 = arith.addf %31, %29 : vector<4x784xf32>
    %cst_18 = arith.constant 0.000000e+00 : f32
    %33 = vector.broadcast %cst_18 : f32 to vector<4x784xf32>
    %34 = arith.maximumf %32, %33 : vector<4x784xf32>
    %c0_19 = arith.constant 0 : index
    %c0_20 = arith.constant 0 : index
    %c0_21 = arith.constant 0 : index
    %35 = vector.load %arg7[%c0_19, %c0_20, %c0_21] : memref<1x4x784xf32, #tpu.memory_space<vmem>>, vector<1x4x784xf32>
    %36 = vector.shape_cast %35 : vector<1x4x784xf32> to vector<4x784xf32>
    %37 = vector.shape_cast %34 : vector<4x784xf32> to vector<1x4x784xf32>
    tpu.vector_store %arg7[%c0_19, %c0_20, %c0_21], %37 {strides = array<i32>} : memref<1x4x784xf32, #tpu.memory_space<vmem>>, vector<1x4x784xf32>,
    return
  }
  func.func @transform_0(%arg0: i32) -> (i32, i32, i32) {
    %c0_i32 = arith.constant 0 : i32
    %c0_i32_0 = arith.constant 0 : i32
    %c0_i32_1 = arith.constant 0 : i32
    return %arg0, %c0_i32, %c0_i32_0 : i32, i32, i32
  }
  func.func @transform_1(%arg0: i32) -> (i32, i32) {
    %c0_i32 = arith.constant 0 : i32
    %c0_i32_0 = arith.constant 0 : i32
    %c0_i32_1 = arith.constant 0 : i32
    return %c0_i32, %c0_i32_0 : i32, i32
  }
  func.func @transform_2(%arg0: i32) -> (i32, i32) {
    %c0_i32 = arith.constant 0 : i32
    %c0_i32_0 = arith.constant 0 : i32
    %c0_i32_1 = arith.constant 0 : i32
    return %c0_i32, %c0_i32_0 : i32, i32
  }
  func.func @transform_3(%arg0: i32) -> (i32, i32) {
    %c0_i32 = arith.constant 0 : i32
    %c0_i32_0 = arith.constant 0 : i32
    %c0_i32_1 = arith.constant 0 : i32
    return %c0_i32, %c0_i32_0 : i32, i32
  }
  func.func @transform_4(%arg0: i32) -> (i32, i32) {
    %c0_i32 = arith.constant 0 : i32
    %c0_i32_0 = arith.constant 0 : i32
    %c0_i32_1 = arith.constant 0 : i32
    return %c0_i32, %c0_i32_0 : i32, i32
  }
  func.func @transform_5(%arg0: i32) -> (i32, i32, i32) {
    %c0_i32 = arith.constant 0 : i32
    %c0_i32_0 = arith.constant 0 : i32
    %c0_i32_1 = arith.constant 0 : i32
    return %arg0, %c0_i32, %c0_i32_0 : i32, i32, i32
  }
  func.func @transform_6(%arg0: i32) -> (i32, i32, i32) {
    %c0_i32 = arith.constant 0 : i32
    %c0_i32_0 = arith.constant 0 : i32
    %c0_i32_1 = arith.constant 0 : i32
    return %arg0, %c0_i32, %c0_i32_0 : i32, i32, i32
  }
}

</mosaic_0001>

<llo_original>
// kernel: residual_block.4
$region0: #{residual_block.4}
  #allocation0 [shape = 'u32[]', space=smem, size = 0x4, offset = 0x4, fixed_abs, tag = 'smem constant byte address 0x4 - core index']
  #allocation1 [shape = 'u32[144,128]{1,0:T(1,128)}', space=vmem, size = 0x12000, scoped, tag = 'internal scratch']
  %s0 = inlined_call_operand.vmem [shape: bf16[2,72,784], index: 0, kind: input, shape index: {}]
  %s1 = inlined_call_operand.vmem [shape: bf16[12,72], index: 1, kind: input, shape index: {}]
  %s2 = inlined_call_operand.vmem [shape: f32[12,1], index: 2, kind: input, shape index: {}]
  %s3 = inlined_call_operand.vmem [shape: f32[12,784], index: 3, kind: input, shape index: {}]
  %s4 = inlined_call_operand.vmem [shape: f32[12,784], index: 4, kind: input, shape index: {}]
  %s5 = inlined_call_operand.vmem [shape: bf16[2,12,784], index: 5, kind: output, shape index: {}]
  %s6 = sld [smem:[#allocation0]]
  $region53: #{residual_block.4} parent=0
    _
  %s8 = ssub.s32 1, %s6
  %s9 = scalar_select 0, %s8, %s6
  loop: start=0, step=1, limit=4
  $region2: #{residual_block.4} parent=0 // loop_pre_header
    _
  $region3: #{residual_block.4} parent=0 // loop_header
    %s11 = sphi 0, %s15
    %p12 = scmp.ge.s32.totalorder %s11, 4
    %s21 = sphi 0, %s23
    %s24 = sphi 0, %s21
    %s25 = sphi 0, %s24
    %s41 = sphi 0, %s25
    %s45 = sphi 0, %s45
    %s47 = sphi 0, %s45
    %s48 = sphi 0, %s47
    %s62 = sphi 0, %s48
    %s66 = sphi 0, %s66
    %s68 = sphi 0, %s66
    %s69 = sphi 0, %s68
    %s83 = sphi 0, %s69
    %s87 = sphi 0, %s87
    %s89 = sphi 0, %s87
    %s90 = sphi 0, %s89
    %s104 = sphi 0, %s90
    %s108 = sphi 0, %s108
    %s110 = sphi 0, %s108
    %s111 = sphi 0, %s110
    %s125 = sphi 0, %s111
    %s131 = sphi 0, %s133
    %s134 = sphi 0, %s131
    %s135 = sphi 0, %s134
    %s151 = sphi 0, %s135
  $region4: #{residual_block.4} parent=0 // loop_header_branch
    %14 = sbr.rel (%p12) target = $region8
  $region5: #{residual_block.4} parent=0 // loop_body
    %s16 = ssub.s32 %s11, 1
    %s17 = ssub.s32 %s11, 2
    %s18 = sadd.s32 %s11, 1
    %s19 = ssub.s32 %s11, %s18
    %p20 = scmp.eq.s32.totalorder %s19, 0
    %s22 = sadd.s32 %s21, 1
    %s23 = scalar_select %p20, %s21, %s22
    %p26 = pneg %p20
    %p27 = scmp.eq.s32.totalorder %s11, 1
    %p28 = por %p26, %p27
    %p29 = scmp.ne.s32.totalorder %s21, %s24
    %p30 = scmp.eq.s32.totalorder %s11, 0
    %p31 = por %p29, %p30
    %p32 = scmp.ne.s32.totalorder %s21, %s24
    %p33 = scmp.eq.s32.totalorder %s16, 1
    %p34 = por %p32, %p33
    %p35 = scmp.ne.s32.totalorder %s24, %s25
    %p36 = scmp.eq.s32.totalorder %s16, 0
    %p37 = por %p35, %p36
    %p38 = scmp.ne.s32.totalorder %s24, %s25
    %p39 = scmp.eq.s32.totalorder %s17, 1
    %p40 = por %p38, %p39
    %p42 = scmp.ne.s32.totalorder %s25, %s41
    %p43 = scmp.eq.s32.totalorder %s17, 0
    %p44 = por %p42, %p43
    %s46 = sadd.s32 %s45, 1
    %p49 = scmp.eq.s32.totalorder %s11, 1
    %p50 = scmp.ne.s32.totalorder %s45, %s47
    %p51 = scmp.eq.s32.totalorder %s11, 0
    %p52 = por %p50, %p51
    %p53 = scmp.ne.s32.totalorder %s45, %s47
    %p54 = scmp.eq.s32.totalorder %s16, 1
    %p55 = por %p53, %p54
    %p56 = scmp.ne.s32.totalorder %s47, %s48
    %p57 = scmp.eq.s32.totalorder %s16, 0
    %p58 = por %p56, %p57
    %p59 = scmp.ne.s32.totalorder %s47, %s48
    %p60 = scmp.eq.s32.totalorder %s17, 1
    %p61 = por %p59, %p60
    %p63 = scmp.ne.s32.totalorder %s48, %s62
    %p64 = scmp.eq.s32.totalorder %s17, 0
    %p65 = por %p63, %p64
    %s67 = sadd.s32 %s66, 1
    %p70 = scmp.eq.s32.totalorder %s11, 1
    %p71 = scmp.ne.s32.totalorder %s66, %s68
    %p72 = scmp.eq.s32.totalorder %s11, 0
    %p73 = por %p71, %p72
    %p74 = scmp.ne.s32.totalorder %s66, %s68
    %p75 = scmp.eq.s32.totalorder %s16, 1
    %p76 = por %p74, %p75
    %p77 = scmp.ne.s32.totalorder %s68, %s69
    %p78 = scmp.eq.s32.totalorder %s16, 0
    %p79 = por %p77, %p78
    %p80 = scmp.ne.s32.totalorder %s68, %s69
    %p81 = scmp.eq.s32.totalorder %s17, 1
    %p82 = por %p80, %p81
    %p84 = scmp.ne.s32.totalorder %s69, %s83
    %p85 = scmp.eq.s32.totalorder %s17, 0
    %p86 = por %p84, %p85
    %s88 = sadd.s32 %s87, 1
    %p91 = scmp.eq.s32.totalorder %s11, 1
    %p92 = scmp.ne.s32.totalorder %s87, %s89
    %p93 = scmp.eq.s32.totalorder %s11, 0
    %p94 = por %p92, %p93
    %p95 = scmp.ne.s32.totalorder %s87, %s89
    %p96 = scmp.eq.s32.totalorder %s16, 1
    %p97 = por %p95, %p96
    %p98 = scmp.ne.s32.totalorder %s89, %s90
    %p99 = scmp.eq.s32.totalorder %s16, 0
    %p100 = por %p98, %p99
    %p101 = scmp.ne.s32.totalorder %s89, %s90
    %p102 = scmp.eq.s32.totalorder %s17, 1
    %p103 = por %p101, %p102
    %p105 = scmp.ne.s32.totalorder %s90, %s104
    %p106 = scmp.eq.s32.totalorder %s17, 0
    %p107 = por %p105, %p106
    %s109 = sadd.s32 %s108, 1
    %p112 = scmp.eq.s32.totalorder %s11, 1
    %p113 = scmp.ne.s32.totalorder %s108, %s110
    %p114 = scmp.eq.s32.totalorder %s11, 0
    %p115 = por %p113, %p114
    %p116 = scmp.ne.s32.totalorder %s108, %s110
    %p117 = scmp.eq.s32.totalorder %s16, 1
    %p118 = por %p116, %p117
    %p119 = scmp.ne.s32.totalorder %s110, %s111
    %p120 = scmp.eq.s32.totalorder %s16, 0
    %p121 = por %p119, %p120
    %p122 = scmp.ne.s32.totalorder %s110, %s111
    %p123 = scmp.eq.s32.totalorder %s17, 1
    %p124 = por %p122, %p123
    %p126 = scmp.ne.s32.totalorder %s111, %s125
    %p127 = scmp.eq.s32.totalorder %s17, 0
    %p128 = por %p126, %p127
    %s129 = ssub.s32 %s11, %s18
    %p130 = scmp.eq.s32.totalorder %s129, 0
    %s132 = sadd.s32 %s131, 1
    %s133 = scalar_select %p130, %s131, %s132
    %p136 = pneg %p130
    %p137 = scmp.eq.s32.totalorder %s11, 1
    %p138 = por %p136, %p137
    %p139 = scmp.ne.s32.totalorder %s131, %s134
    %p140 = scmp.eq.s32.totalorder %s11, 0
    %p141 = por %p139, %p140
    %p142 = scmp.ne.s32.totalorder %s131, %s134
    %p143 = scmp.eq.s32.totalorder %s16, 1
    %p144 = por %p142, %p143
    %p145 = scmp.ne.s32.totalorder %s134, %s135
    %p146 = scmp.eq.s32.totalorder %s16, 0
    %p147 = por %p145, %p146
    %p148 = scmp.ne.s32.totalorder %s134, %s135
    %p149 = scmp.eq.s32.totalorder %s17, 1
    %p150 = por %p148, %p149
    %p152 = scmp.ne.s32.totalorder %s135, %s151
    %p153 = scmp.eq.s32.totalorder %s17, 0
    %p154 = por %p152, %p153
    %p155 = scmp.le.s32.totalorder 1, %s11
    %p156 = scmp.lt.s32.totalorder %s11, 3
    %p157 = pnand %p155, %p156
    %p158 = pneg %p157
    // Predicated region
    $region9: #{residual_block.4} parent=5 // pred_check
      _
    $region10: #{residual_block.4} parent=5 // pred_check_branch
      %160 = sbr.rel (%p157) target = $region12
    $region11: #{residual_block.4} parent=5 // pred_region
      %s161 = ssub.s32 %s11, 1
      // Predicated region
      $region13: #{residual_block.4} parent=11 // pred_check
        %p162 = pneg %p58
      $region14: #{residual_block.4} parent=11 // pred_check_branch
        %164 = sbr.rel (%p162) target = $region16
      $region15: #{residual_block.4} parent=11 // pred_region
        _
      $region16: #{residual_block.4} parent=11 // pred_fallthru
        _
      // Predicated region
      $region17: #{residual_block.4} parent=11 // pred_check
        %p165 = pneg %p79
      $region18: #{residual_block.4} parent=11 // pred_check_branch
        %167 = sbr.rel (%p165) target = $region20
      $region19: #{residual_block.4} parent=11 // pred_region
        _
      $region20: #{residual_block.4} parent=11 // pred_fallthru
        _
      // Predicated region
      $region21: #{residual_block.4} parent=11 // pred_check
        %p168 = pneg %p100
      $region22: #{residual_block.4} parent=11 // pred_check_branch
        %170 = sbr.rel (%p168) target = $region24
      $region23: #{residual_block.4} parent=11 // pred_region
        _
      $region24: #{residual_block.4} parent=11 // pred_fallthru
        _
      // Predicated region
      $region25: #{residual_block.4} parent=11 // pred_check
        %p171 = pneg %p121
      $region26: #{residual_block.4} parent=11 // pred_check_branch
        %173 = sbr.rel (%p171) target = $region28
      $region27: #{residual_block.4} parent=11 // pred_region
        _
      $region28: #{residual_block.4} parent=11 // pred_fallthru
        _
    $region12: #{residual_block.4} parent=5 // pred_fallthru
      _
    %p174 = scmp.lt.s32.totalorder %s11, 2
    // Predicated region
    $region29: #{residual_block.4} parent=5 // pred_check
      %p175 = pneg %p174
    $region30: #{residual_block.4} parent=5 // pred_check_branch
      %177 = sbr.rel (%p175) target = $region32
    $region31: #{residual_block.4} parent=5 // pred_region
      // Predicated region
      $region33: #{residual_block.4} parent=31 // pred_check
        %p178 = pneg %p31
      $region34: #{residual_block.4} parent=31 // pred_check_branch
        %180 = sbr.rel (%p178) target = $region36
      $region35: #{residual_block.4} parent=31 // pred_region
        %p181 = scmp.lt.s32.totalorder %s11, 1
        %s182 = scalar_select %p181, %s11, 1
        %s183 = smul.addr %s182, 63
        %s184 = smul.addr %s183, 4
        %s185 = scalar_lea.vmem %s0, %s184
      $region36: #{residual_block.4} parent=31 // pred_fallthru
        _
    $region32: #{residual_block.4} parent=5 // pred_fallthru
      _
    %p186 = scmp.le.s32.totalorder 1, %s11
    %p187 = scmp.lt.s32.totalorder %s11, 3
    %p188 = pnand %p186, %p187
    %p189 = pneg %p188
    // Predicated region
    $region37: #{residual_block.4} parent=5 // pred_check
      _
    $region38: #{residual_block.4} parent=5 // pred_check_branch
      %191 = sbr.rel (%p188) target = $region40
    $region39: #{residual_block.4} parent=5 // pred_region
      %s192 = ssub.s32 %s11, 1
      %p193 = scmp.lt.s32.totalorder %s16, 1
      %s194 = scalar_select %p193, %s16, 1
      %s195 = smul.addr %s194, 63
      %s196 = smul.addr %s195, 4
      %s197 = scalar_lea.vmem %s0, %s196
      %p198 = pneg %p37
      %p199 = pneg %p34
      %p200 = pneg %p58
      %p201 = pneg %p55
      %p202 = pneg %p79
      %p203 = pneg %p76
      %p204 = pneg %p100
      %p205 = pneg %p97
      %p206 = pneg %p121
      %p207 = pneg %p118
      %p208 = pneg %p147
      %p209 = pneg %p144
      %p210 = scmp.lt.s32.totalorder %s16, 1
      %s211 = scalar_select %p210, %s16, 1
      %s212 = smul.addr %s211, 14
      %s213 = smul.addr %s212, 4
      %s214 = scalar_lea.vmem %s5, %s213
      %p215 = scmp.lt.s32.totalorder %s16, 1
      %s216 = scalar_select %p215, %s16, 1
      %s217 = smul.addr %s216, 63
      %s218 = smul.addr %s217, 4
      %s219 = scalar_lea.vmem %s0, %s218
      %p220 = scmp.lt.s32.totalorder %s16, 1
      %s221 = scalar_select %p220, %s16, 1
      %s222 = smul.addr %s221, 14
      %s223 = smul.addr %s222, 4
      %s224 = scalar_lea.vmem %s5, %s223
      %v226 = vld [vmem:[%s1] sm:$0xf]
      %v227 = vld [vmem:[%s1 + $0x4] sm:$0x3]
      %v228 = vld [vmem:[%s219] sm:$0xff]
      %v229 = vld [vmem:[%s219 + $0x8] sm:$0xff]
      %v230 = vld [vmem:[%s219 + $0x10] sm:$0xff]
      %v231 = vld [vmem:[%s219 + $0x18] sm:$0xf]
      %v232 = vld [vmem:[%s219 + $0x1c] sm:$0xff]
      %v233 = vld [vmem:[%s219 + $0x24] sm:$0xff]
      %v234 = vld [vmem:[%s219 + $0x2c] sm:$0xff]
      %v235 = vld [vmem:[%s219 + $0x34] sm:$0xf]
      %v236 = vld [vmem:[%s219 + $0x38] sm:$0xff]
      %v237 = vld [vmem:[%s219 + $0x40] sm:$0xff]
      %v238 = vld [vmem:[%s219 + $0x48] sm:$0xff]
      %v239 = vld [vmem:[%s219 + $0x50] sm:$0xf]
      %v240 = vld [vmem:[%s219 + $0x54] sm:$0xff]
      %v241 = vld [vmem:[%s219 + $0x5c] sm:$0xff]
      %v242 = vld [vmem:[%s219 + $0x64] sm:$0xff]
      %v243 = vld [vmem:[%s219 + $0x6c] sm:$0xf]
      %v244 = vld [vmem:[%s219 + $0x70] sm:$0xff]
      %v245 = vld [vmem:[%s219 + $0x78] sm:$0xff]
      %v246 = vld [vmem:[%s219 + $0x80] sm:$0xff]
      %v247 = vld [vmem:[%s219 + $0x88] sm:$0xf]
      %v248 = vld [vmem:[%s219 + $0x8c] sm:$0xff]
      %v249 = vld [vmem:[%s219 + $0x94] sm:$0xff]
      %v250 = vld [vmem:[%s219 + $0x9c] sm:$0xff]
      %v251 = vld [vmem:[%s219 + $0xa4] sm:$0xf]
      %v252 = vld [vmem:[%s219 + $0xa8] sm:$0xff]
      %v253 = vld [vmem:[%s219 + $0xb0] sm:$0xff]
      %v254 = vld [vmem:[%s219 + $0xb8] sm:$0xff]
      %v255 = vld [vmem:[%s219 + $0xc0] sm:$0xf]
      %v256 = vld [vmem:[%s219 + $0xc4] sm:$0xff]
      %v257 = vld [vmem:[%s219 + $0xcc] sm:$0xff]
      %v258 = vld [vmem:[%s219 + $0xd4] sm:$0xff]
      %v259 = vld [vmem:[%s219 + $0xdc] sm:$0xf]
      %v260 = vld [vmem:[%s219 + $0xe0] sm:$0xff]
      %v261 = vld [vmem:[%s219 + $0xe8] sm:$0xff]
      %v262 = vld [vmem:[%s219 + $0xf0] sm:$0xff]
      %v263 = vld [vmem:[%s219 + $0xf8] sm:$0xf]
      %v264 = vld [vmem:[%s2] sm:$0xff]
      %v265 = vld [vmem:[%s2 + $0x8] sm:$0xf]
      %267 = vset.pattern.permute.xlu0 0
      %268 = vperm.xlu0 %267, %v264
      %v269 = vpop.permute.xlu0 %268
      %272 = vset.pattern.permute.xlu0 0
      %273 = vperm.xlu0 %272, %v265
      %v274 = vpop.permute.xlu0 %273
      %v278 = vunpack.c.l.b16 %v226
      %v279 = vunpack.c.l.b16 %v227
      %v280 = vpack.c.b16 %v279, %v278
      %v317 = vunpack.c.l.b16 %v228
      %v318 = vunpack.c.h.b16 %v228
      %v319 = vunpack.c.l.b16 %v229
      %v320 = vunpack.c.h.b16 %v229
      %v321 = vunpack.c.l.b16 %v230
      %v322 = vunpack.c.h.b16 %v230
      %v323 = vunpack.c.l.b16 %v231
      %v324 = vunpack.c.l.b16 %v232
      %v325 = vunpack.c.h.b16 %v232
      %v326 = vunpack.c.l.b16 %v233
      %v327 = vunpack.c.h.b16 %v233
      %v328 = vunpack.c.l.b16 %v234
      %v329 = vunpack.c.h.b16 %v234
      %v330 = vunpack.c.l.b16 %v235
      %v331 = vunpack.c.l.b16 %v236
      %v332 = vunpack.c.h.b16 %v236
      %v333 = vunpack.c.l.b16 %v237
      %v334 = vunpack.c.h.b16 %v237
      %v335 = vunpack.c.l.b16 %v238
      %v336 = vunpack.c.h.b16 %v238
      %v337 = vunpack.c.l.b16 %v239
      %v338 = vunpack.c.l.b16 %v240
      %v339 = vunpack.c.h.b16 %v240
      %v340 = vunpack.c.l.b16 %v241
      %v341 = vunpack.c.h.b16 %v241
      %v342 = vunpack.c.l.b16 %v242
      %v343 = vunpack.c.h.b16 %v242
      %v344 = vunpack.c.l.b16 %v243
      %v345 = vunpack.c.l.b16 %v244
      %v346 = vunpack.c.h.b16 %v244
      %v347 = vunpack.c.l.b16 %v245
      %v348 = vunpack.c.h.b16 %v245
      %v349 = vunpack.c.l.b16 %v246
      %v350 = vunpack.c.h.b16 %v246
      %v351 = vunpack.c.l.b16 %v247
      %v352 = vunpack.c.l.b16 %v248
      %v353 = vunpack.c.h.b16 %v248
      %v354 = vunpack.c.l.b16 %v249
      %v355 = vunpack.c.h.b16 %v249
      %v356 = vunpack.c.l.b16 %v250
      %v357 = vunpack.c.h.b16 %v250
      %v358 = vunpack.c.l.b16 %v251
      %v359 = vunpack.c.l.b16 %v252
      %v360 = vunpack.c.h.b16 %v252
      %v361 = vunpack.c.l.b16 %v253
      %v362 = vunpack.c.h.b16 %v253
      %v363 = vunpack.c.l.b16 %v254
      %v364 = vunpack.c.h.b16 %v254
      %v365 = vunpack.c.l.b16 %v255
      %v366 = vunpack.c.l.b16 %v256
      %v367 = vunpack.c.h.b16 %v256
      %v368 = vunpack.c.l.b16 %v257
      %v369 = vunpack.c.h.b16 %v257
      %v370 = vunpack.c.l.b16 %v258
      %v371 = vunpack.c.h.b16 %v258
      %v372 = vunpack.c.l.b16 %v259
      %v373 = vunpack.c.l.b16 %v260
      %v374 = vunpack.c.h.b16 %v260
      %v375 = vunpack.c.l.b16 %v261
      %v376 = vunpack.c.h.b16 %v261
      %v377 = vunpack.c.l.b16 %v262
      %v378 = vunpack.c.h.b16 %v262
      %v379 = vunpack.c.l.b16 %v263
      %v380 = vpack.c.b16 %v324, %v317
      %v381 = vpack.c.b16 %v325, %v318
      %v382 = vpack.c.b16 %v326, %v319
      %v383 = vpack.c.b16 %v327, %v320
      %v384 = vpack.c.b16 %v328, %v321
      %v385 = vpack.c.b16 %v329, %v322
      %v386 = vpack.c.b16 %v330, %v323
      %v387 = vpack.c.b16 %v338, %v331
      %v388 = vpack.c.b16 %v339, %v332
      %v389 = vpack.c.b16 %v340, %v333
      %v390 = vpack.c.b16 %v341, %v334
      %v391 = vpack.c.b16 %v342, %v335
      %v392 = vpack.c.b16 %v343, %v336
      %v393 = vpack.c.b16 %v344, %v337
      %v394 = vpack.c.b16 %v352, %v345
      %v395 = vpack.c.b16 %v353, %v346
      %v396 = vpack.c.b16 %v354, %v347
      %v397 = vpack.c.b16 %v355, %v348
      %v398 = vpack.c.b16 %v356, %v349
      %v399 = vpack.c.b16 %v357, %v350
      %v400 = vpack.c.b16 %v358, %v351
      %v401 = vpack.c.b16 %v366, %v359
      %v402 = vpack.c.b16 %v367, %v360
      %v403 = vpack.c.b16 %v368, %v361
      %v404 = vpack.c.b16 %v369, %v362
      %v405 = vpack.c.b16 %v370, %v363
      %v406 = vpack.c.b16 %v371, %v364
      %v407 = vpack.c.b16 %v372, %v365
      %v408 = vpack.c.b16 %v373, %v373
      %v409 = vpack.c.b16 %v374, %v374
      %v410 = vpack.c.b16 %v375, %v375
      %v411 = vpack.c.b16 %v376, %v376
      %v412 = vpack.c.b16 %v377, %v377
      %v413 = vpack.c.b16 %v378, %v378
      %v414 = vpack.c.b16 %v379, %v379
      %vm443 = vcmask 588800
      %v445 = vsel %vm443, %v280, 0
      %vm447 = vcmask 1043456
      %v449 = vsel %vm447, %v408, 0
      %v452 = vsel %vm447, %v409, 0
      %v455 = vsel %vm447, %v410, 0
      %v458 = vsel %vm447, %v411, 0
      %v461 = vsel %vm447, %v412, 0
      %v464 = vsel %vm447, %v413, 0
      %v467 = vsel %vm447, %v414, 0
      %469 = vmatprep.subr.bf16.mxu0 %v381
      %470 = vmatpush1.bf16.msra.mxu0 %v380
      %471 = vmatprep.subr.bf16.mxu0 %v388
      %472 = vmatpush1.bf16.msra.mxu0 %v387
      %473 = vmatprep.subr.bf16.mxu0 %v395
      %474 = vmatpush1.bf16.msra.mxu0 %v394
      %475 = vmatprep.subr.bf16.mxu0 %v402
      %476 = vmatpush1.bf16.msra.mxu0 %v401
      %477 = vmatprep.subr.bf16.mxu0 %v452
      %478 = vmatpush1.bf16.msra.mxu0 %v449
      %479 = vmatprep.subr.bf16.mxu0 0
      %480 = vmatpush1.bf16.msra.mxu0 0
      %481 = vmatprep.subr.bf16.mxu0 0
      %482 = vmatpush1.bf16.msra.mxu0 0
      %483 = vmatprep.subr.bf16.mxu0 0
      %484 = vmatpush1.bf16.msra.mxu0 0
      %485 = vmatprep.subr.bf16.mxu0 0
      %486 = vmatpush1.bf16.msra.mxu0 0
      %487 = vmatprep.subr.bf16.mxu0 0
      %488 = vmatpush1.bf16.msra.mxu0 0
      %489 = vmatprep.subr.bf16.mxu0 0
      %490 = vmatpush1.bf16.msra.mxu0 0
      %491 = vmatprep.subr.bf16.mxu0 0
      %492 = vmatpush1.bf16.msra.mxu0 0
      %493 = vmatprep.subr.bf16.mxu0 0
      %494 = vmatpush1.bf16.msra.mxu0 0
      %495 = vmatprep.subr.bf16.mxu0 0
      %496 = vmatpush1.bf16.msra.mxu0 0
      %497 = vmatprep.subr.bf16.mxu0 0
      %498 = vmatpush1.bf16.msra.mxu0 0
      %499 = vmatprep.subr.bf16.mxu0 0
      %500 = vmatpush1.bf16.msra.mxu0 0
      %501 = vmatprep.mubr.bf16.mxu0 0
      %502 = vmatmul.mubr.bf16.gmra.mrb[0].mxu0 %v445
      %v503 = vpop.f32.mrb[0].mxu0
      %v504 = vadd.f32 %v269, %v503
      %v505 = vpop.f32.mrb[0].mxu0
      %v506 = vadd.f32 %v269, %v505
      %v507 = vpop.f32.mrb[0].mxu0
      %v508 = vadd.f32 %v274, %v507
      %v509 = vpop.f32.mrb[0].mxu0
      %v510 = vadd.f32 %v274, %v509
      %511 = vdwg.mxu0
      %512 = vmatprep.subr.bf16.mxu0 %v383
      %513 = vmatpush1.bf16.msra.mxu0 %v382
      %514 = vmatprep.subr.bf16.mxu0 %v390
      %515 = vmatpush1.bf16.msra.mxu0 %v389
      %516 = vmatprep.subr.bf16.mxu0 %v397
      %517 = vmatpush1.bf16.msra.mxu0 %v396
      %518 = vmatprep.subr.bf16.mxu0 %v404
      %519 = vmatpush1.bf16.msra.mxu0 %v403
      %520 = vmatprep.subr.bf16.mxu0 %v458
      %521 = vmatpush1.bf16.msra.mxu0 %v455
      %522 = vmatprep.subr.bf16.mxu0 0
      %523 = vmatpush1.bf16.msra.mxu0 0
      %524 = vmatprep.subr.bf16.mxu0 0
      %525 = vmatpush1.bf16.msra.mxu0 0
      %526 = vmatprep.subr.bf16.mxu0 0
      %527 = vmatpush1.bf16.msra.mxu0 0
      %528 = vmatprep.subr.bf16.mxu0 0
      %529 = vmatpush1.bf16.msra.mxu0 0
      %530 = vmatprep.subr.bf16.mxu0 0
      %531 = vmatpush1.bf16.msra.mxu0 0
      %532 = vmatprep.subr.bf16.mxu0 0
      %533 = vmatpush1.bf16.msra.mxu0 0
      %534 = vmatprep.subr.bf16.mxu0 0
      %535 = vmatpush1.bf16.msra.mxu0 0
      %536 = vmatprep.subr.bf16.mxu0 0
      %537 = vmatpush1.bf16.msra.mxu0 0
      %538 = vmatprep.subr.bf16.mxu0 0
      %539 = vmatpush1.bf16.msra.mxu0 0
      %540 = vmatprep.subr.bf16.mxu0 0
      %541 = vmatpush1.bf16.msra.mxu0 0
      %542 = vmatprep.subr.bf16.mxu0 0
      %543 = vmatpush1.bf16.msra.mxu0 0
      %544 = vmatprep.mubr.bf16.mxu0 0
      %545 = vmatmul.mubr.bf16.gmra.mrb[0].mxu0 %v445
      %v546 = vpop.f32.mrb[0].mxu0
      %v547 = vadd.f32 %v269, %v546
      %v548 = vpop.f32.mrb[0].mxu0
      %v549 = vadd.f32 %v269, %v548
      %v550 = vpop.f32.mrb[0].mxu0
      %v551 = vadd.f32 %v274, %v550
      %v552 = vpop.f32.mrb[0].mxu0
      %v553 = vadd.f32 %v274, %v552
      %554 = vdwg.mxu0
      %555 = vmatprep.subr.bf16.mxu0 %v385
      %556 = vmatpush1.bf16.msra.mxu0 %v384
      %557 = vmatprep.subr.bf16.mxu0 %v392
      %558 = vmatpush1.bf16.msra.mxu0 %v391
      %559 = vmatprep.subr.bf16.mxu0 %v399
      %560 = vmatpush1.bf16.msra.mxu0 %v398
      %561 = vmatprep.subr.bf16.mxu0 %v406
      %562 = vmatpush1.bf16.msra.mxu0 %v405
      %563 = vmatprep.subr.bf16.mxu0 %v464
      %564 = vmatpush1.bf16.msra.mxu0 %v461
      %565 = vmatprep.subr.bf16.mxu0 0
      %566 = vmatpush1.bf16.msra.mxu0 0
      %567 = vmatprep.subr.bf16.mxu0 0
      %568 = vmatpush1.bf16.msra.mxu0 0
      %569 = vmatprep.subr.bf16.mxu0 0
      %570 = vmatpush1.bf16.msra.mxu0 0
      %571 = vmatprep.subr.bf16.mxu0 0
      %572 = vmatpush1.bf16.msra.mxu0 0
      %573 = vmatprep.subr.bf16.mxu0 0
      %574 = vmatpush1.bf16.msra.mxu0 0
      %575 = vmatprep.subr.bf16.mxu0 0
      %576 = vmatpush1.bf16.msra.mxu0 0
      %577 = vmatprep.subr.bf16.mxu0 0
      %578 = vmatpush1.bf16.msra.mxu0 0
      %579 = vmatprep.subr.bf16.mxu0 0
      %580 = vmatpush1.bf16.msra.mxu0 0
      %581 = vmatprep.subr.bf16.mxu0 0
      %582 = vmatpush1.bf16.msra.mxu0 0
      %583 = vmatprep.subr.bf16.mxu0 0
      %584 = vmatpush1.bf16.msra.mxu0 0
      %585 = vmatprep.subr.bf16.mxu0 0
      %586 = vmatpush1.bf16.msra.mxu0 0
      %587 = vmatprep.mubr.bf16.mxu0 0
      %588 = vmatmul.mubr.bf16.gmra.mrb[0].mxu0 %v445
      %v589 = vpop.f32.mrb[0].mxu0
      %v590 = vadd.f32 %v269, %v589
      %v591 = vpop.f32.mrb[0].mxu0
      %v592 = vadd.f32 %v269, %v591
      %v593 = vpop.f32.mrb[0].mxu0
      %v594 = vadd.f32 %v274, %v593
      %v595 = vpop.f32.mrb[0].mxu0
      %v596 = vadd.f32 %v274, %v595
      %597 = vdwg.mxu0
      %598 = vmatprep.subr.bf16.mxu0 0
      %599 = vmatpush1.bf16.msra.mxu0 %v386
      %600 = vmatprep.subr.bf16.mxu0 0
      %601 = vmatpush1.bf16.msra.mxu0 %v393
      %602 = vmatprep.subr.bf16.mxu0 0
      %603 = vmatpush1.bf16.msra.mxu0 %v400
      %604 = vmatprep.subr.bf16.mxu0 0
      %605 = vmatpush1.bf16.msra.mxu0 %v407
      %606 = vmatprep.subr.bf16.mxu0 0
      %607 = vmatpush1.bf16.msra.mxu0 %v467
      %608 = vmatprep.subr.bf16.mxu0 0
      %609 = vmatpush1.bf16.msra.mxu0 0
      %610 = vmatprep.subr.bf16.mxu0 0
      %611 = vmatpush1.bf16.msra.mxu0 0
      %612 = vmatprep.subr.bf16.mxu0 0
      %613 = vmatpush1.bf16.msra.mxu0 0
      %614 = vmatprep.subr.bf16.mxu0 0
      %615 = vmatpush1.bf16.msra.mxu0 0
      %616 = vmatprep.subr.bf16.mxu0 0
      %617 = vmatpush1.bf16.msra.mxu0 0
      %618 = vmatprep.subr.bf16.mxu0 0
      %619 = vmatpush1.bf16.msra.mxu0 0
      %620 = vmatprep.subr.bf16.mxu0 0
      %621 = vmatpush1.bf16.msra.mxu0 0
      %622 = vmatprep.subr.bf16.mxu0 0
      %623 = vmatpush1.bf16.msra.mxu0 0
      %624 = vmatprep.subr.bf16.mxu0 0
      %625 = vmatpush1.bf16.msra.mxu0 0
      %626 = vmatprep.subr.bf16.mxu0 0
      %627 = vmatpush1.bf16.msra.mxu0 0
      %628 = vmatprep.subr.bf16.mxu0 0
      %629 = vmatpush1.bf16.msra.mxu0 0
      %630 = vmatprep.mubr.bf16.mxu0 0
      %631 = vmatmul.mubr.bf16.gmra.mrb[0].mxu0 %v445
      %v632 = vpop.f32.mrb[0].mxu0
      %v633 = vadd.f32 %v269, %v632
      %v634 = vpop.f32.mrb[0].mxu0
      %v635 = vpop.f32.mrb[0].mxu0
      %v636 = vadd.f32 %v274, %v635
      %v637 = vpop.f32.mrb[0].mxu0
      %638 = vdwg.mxu0
      %v639 = vld [vmem:[%s3] sm:$0xff]
      %v640 = vld [vmem:[%s3 + $0x8] sm:$0xff]
      %v641 = vld [vmem:[%s3 + $0x10] sm:$0xff]
      %v642 = vld [vmem:[%s3 + $0x18] sm:$0xff]
      %v643 = vld [vmem:[%s3 + $0x20] sm:$0xff]
      %v644 = vld [vmem:[%s3 + $0x28] sm:$0xff]
      %v645 = vld [vmem:[%s3 + $0x30] sm:$0xff]
      %v646 = vld [vmem:[%s3 + $0x38] sm:$0xf]
      %v647 = vld [vmem:[%s3 + $0x40] sm:$0xf]
      %v648 = vld [vmem:[%s3 + $0x48] sm:$0xf]
      %v649 = vld [vmem:[%s3 + $0x50] sm:$0xf]
      %v650 = vld [vmem:[%s3 + $0x58] sm:$0xf]
      %v651 = vld [vmem:[%s3 + $0x60] sm:$0xf]
      %v652 = vld [vmem:[%s3 + $0x68] sm:$0xf]
      %v653 = vld [vmem:[%s4] sm:$0xff]
      %v654 = vld [vmem:[%s4 + $0x8] sm:$0xff]
      %v655 = vld [vmem:[%s4 + $0x10] sm:$0xff]
      %v656 = vld [vmem:[%s4 + $0x18] sm:$0xff]
      %v657 = vld [vmem:[%s4 + $0x20] sm:$0xff]
      %v658 = vld [vmem:[%s4 + $0x28] sm:$0xff]
      %v659 = vld [vmem:[%s4 + $0x30] sm:$0xff]
      %v660 = vld [vmem:[%s4 + $0x38] sm:$0xf]
      %v661 = vld [vmem:[%s4 + $0x40] sm:$0xf]
      %v662 = vld [vmem:[%s4 + $0x48] sm:$0xf]
      %v663 = vld [vmem:[%s4 + $0x50] sm:$0xf]
      %v664 = vld [vmem:[%s4 + $0x58] sm:$0xf]
      %v665 = vld [vmem:[%s4 + $0x60] sm:$0xf]
      %v666 = vld [vmem:[%s4 + $0x68] sm:$0xf]
      %v667 = vsel %vm447, %v504, 0.0
      %v668 = vsel %vm447, %v506, 0.0
      %v669 = vadd.f32 %v667, %v668
      %v670 = vsel %vm447, %v547, 0.0
      %v671 = vadd.f32 %v669, %v670
      %v672 = vsel %vm447, %v549, 0.0
      %v673 = vadd.f32 %v671, %v672
      %v674 = vsel %vm447, %v590, 0.0
      %v675 = vadd.f32 %v673, %v674
      %v676 = vsel %vm447, %v592, 0.0
      %v677 = vadd.f32 %v675, %v676
      %vm678 = vcmask 125952
      %v679 = vsel %vm678, %v633, 0.0
      %v680 = vadd.f32 %v677, %v679
      %681 = vadd.xlane.f32.xlu0 %v680
      %v682 = vpop.xlane.xlu0 %681
      %v683 = vrot.slane %v682, 4
      %v684 = vadd.f32 %v682, %v683
      %v685 = vrot.slane %v684, 2
      %v686 = vadd.f32 %v684, %v685
      %v687 = vrot.slane %v686, 1
      %v688 = vadd.f32 %v686, %v687
      %s689 = vtos %v688
      %v690 = vmul.f32 %v504, %v504
      %v691 = vmul.f32 %v506, %v506
      %v692 = vmul.f32 %v547, %v547
      %v693 = vmul.f32 %v549, %v549
      %v694 = vmul.f32 %v590, %v590
      %v695 = vmul.f32 %v592, %v592
      %v696 = vmul.f32 %v633, %v633
      %v697 = vsel %vm447, %v690, 0.0
      %v698 = vsel %vm447, %v691, 0.0
      %v699 = vadd.f32 %v697, %v698
      %v700 = vsel %vm447, %v692, 0.0
      %v701 = vadd.f32 %v699, %v700
      %v702 = vsel %vm447, %v693, 0.0
      %v703 = vadd.f32 %v701, %v702
      %v704 = vsel %vm447, %v694, 0.0
      %v705 = vadd.f32 %v703, %v704
      %v706 = vsel %vm447, %v695, 0.0
      %v707 = vadd.f32 %v705, %v706
      %v708 = vsel %vm678, %v696, 0.0
      %v709 = vadd.f32 %v707, %v708
      %710 = vadd.xlane.f32.xlu0 %v709
      %v711 = vpop.xlane.xlu0 %710
      %v712 = vrot.slane %v711, 4
      %v713 = vadd.f32 %v711, %v712
      %v714 = vrot.slane %v713, 2
      %v715 = vadd.f32 %v713, %v714
      %v716 = vrot.slane %v715, 1
      %v717 = vadd.f32 %v715, %v716
      %s718 = vtos %v717
      %v719 = vrcp.pop 3136.0
      %s720 = vtos %v719
      %s721 = smul.f32 %s689, %s720
      %v722 = vrcp.pop 3136.0
      %s723 = vtos %v722
      %s724 = smul.f32 %s718, %s723
      %s725 = smul.f32 %s721, %s721
      %s726 = ssub.f32 %s724, %s725
      %v727 = vstv %s721
      %v728 = vsub.f32 %v504, %v727
      %v729 = vsub.f32 %v506, %v727
      %v730 = vsub.f32 %v547, %v727
      %v731 = vsub.f32 %v549, %v727
      %v732 = vsub.f32 %v590, %v727
      %v733 = vsub.f32 %v592, %v727
      %v734 = vsub.f32 %v633, %v727
      %s735 = sadd.f32 %s726, 1e-05
      %v736 = vstv %s735
      %v737 = vrsqrt.pop %v736
      %s738 = vtos %v737
      %v739 = vstv %s738
      %v740 = vmul.f32 %v728, %v739
      %v741 = vmul.f32 %v729, %v739
      %v742 = vmul.f32 %v730, %v739
      %v743 = vmul.f32 %v731, %v739
      %v744 = vmul.f32 %v732, %v739
      %v745 = vmul.f32 %v733, %v739
      %v746 = vmul.f32 %v734, %v739
      %v747 = vmul.f32 %v740, %v639
      %v748 = vmul.f32 %v741, %v640
      %v749 = vmul.f32 %v742, %v641
      %v750 = vmul.f32 %v743, %v642
      %v751 = vmul.f32 %v744, %v643
      %v752 = vmul.f32 %v745, %v644
      %v753 = vmul.f32 %v746, %v645
      %v754 = vadd.f32 %v747, %v653
      %v755 = vadd.f32 %v748, %v654
      %v756 = vadd.f32 %v749, %v655
      %v757 = vadd.f32 %v750, %v656
      %v758 = vadd.f32 %v751, %v657
      %v759 = vadd.f32 %v752, %v658
      %v760 = vadd.f32 %v753, %v659
      %v761 = vmax.f32 %v754, 0.0
      %v762 = vmax.f32 %v755, 0.0
      %v763 = vmax.f32 %v756, 0.0
      %v764 = vmax.f32 %v757, 0.0
      %v765 = vmax.f32 %v758, 0.0
      %v766 = vmax.f32 %v759, 0.0
      %v767 = vmax.f32 %v760, 0.0
      %v775 = vrot.slane %v504, 4
      %v776 = vrot.slane %v506, 4
      %v777 = vrot.slane %v547, 4
      %v778 = vrot.slane %v549, 4
      %v779 = vrot.slane %v590, 4
      %v780 = vrot.slane %v592, 4
      %v781 = vrot.slane %v633, 4
      %v789 = vsel %vm447, %v775, 0.0
      %v790 = vsel %vm447, %v776, 0.0
      %v791 = vadd.f32 %v789, %v790
      %v792 = vsel %vm447, %v777, 0.0
      %v793 = vadd.f32 %v791, %v792
      %v794 = vsel %vm447, %v778, 0.0
      %v795 = vadd.f32 %v793, %v794
      %v796 = vsel %vm447, %v779, 0.0
      %v797 = vadd.f32 %v795, %v796
      %v798 = vsel %vm447, %v780, 0.0
      %v799 = vadd.f32 %v797, %v798
      %v800 = vsel %vm678, %v781, 0.0
      %v801 = vadd.f32 %v799, %v800
      %802 = vadd.xlane.f32.xlu0 %v801
      %v803 = vpop.xlane.xlu0 %802
      %v804 = vrot.slane %v803, 4
      %v805 = vadd.f32 %v803, %v804
      %v806 = vrot.slane %v805, 2
      %v807 = vadd.f32 %v805, %v806
      %v808 = vrot.slane %v807, 1
      %v809 = vadd.f32 %v807, %v808
      %s810 = vtos %v809
      %v818 = vrot.slane %v690, 4
      %v819 = vrot.slane %v691, 4
      %v820 = vrot.slane %v692, 4
      %v821 = vrot.slane %v693, 4
      %v822 = vrot.slane %v694, 4
      %v823 = vrot.slane %v695, 4
      %v824 = vrot.slane %v696, 4
      %v832 = vsel %vm447, %v818, 0.0
      %v833 = vsel %vm447, %v819, 0.0
      %v834 = vadd.f32 %v832, %v833
      %v835 = vsel %vm447, %v820, 0.0
      %v836 = vadd.f32 %v834, %v835
      %v837 = vsel %vm447, %v821, 0.0
      %v838 = vadd.f32 %v836, %v837
      %v839 = vsel %vm447, %v822, 0.0
      %v840 = vadd.f32 %v838, %v839
      %v841 = vsel %vm447, %v823, 0.0
      %v842 = vadd.f32 %v840, %v841
      %v843 = vsel %vm678, %v824, 0.0
      %v844 = vadd.f32 %v842, %v843
      %845 = vadd.xlane.f32.xlu0 %v844
      %v846 = vpop.xlane.xlu0 %845
      %v847 = vrot.slane %v846, 4
      %v848 = vadd.f32 %v846, %v847
      %v849 = vrot.slane %v848, 2
      %v850 = vadd.f32 %v848, %v849
      %v851 = vrot.slane %v850, 1
      %v852 = vadd.f32 %v850, %v851
      %s853 = vtos %v852
      %v854 = vrcp.pop 3136.0
      %s855 = vtos %v854
      %s856 = smul.f32 %s810, %s855
      %v857 = vrcp.pop 3136.0
      %s858 = vtos %v857
      %s859 = smul.f32 %s853, %s858
      %s860 = smul.f32 %s856, %s856
      %s861 = ssub.f32 %s859, %s860
      %v862 = vstv %s856
      %v863 = vsub.f32 %v504, %v862
      %v864 = vsub.f32 %v506, %v862
      %v865 = vsub.f32 %v547, %v862
      %v866 = vsub.f32 %v549, %v862
      %v867 = vsub.f32 %v590, %v862
      %v868 = vsub.f32 %v592, %v862
      %v869 = vsub.f32 %v633, %v862
      %s870 = sadd.f32 %s861, 1e-05
      %v871 = vstv %s870
      %v872 = vrsqrt.pop %v871
      %s873 = vtos %v872
      %v874 = vstv %s873
      %v875 = vmul.f32 %v863, %v874
      %v876 = vmul.f32 %v864, %v874
      %v877 = vmul.f32 %v865, %v874
      %v878 = vmul.f32 %v866, %v874
      %v879 = vmul.f32 %v867, %v874
      %v880 = vmul.f32 %v868, %v874
      %v881 = vmul.f32 %v869, %v874
      %v882 = vmul.f32 %v875, %v639
      %v883 = vmul.f32 %v876, %v640
      %v884 = vmul.f32 %v877, %v641
      %v885 = vmul.f32 %v878, %v642
      %v886 = vmul.f32 %v879, %v643
      %v887 = vmul.f32 %v880, %v644
      %v888 = vmul.f32 %v881, %v645
      %v889 = vadd.f32 %v882, %v653
      %v890 = vadd.f32 %v883, %v654
      %v891 = vadd.f32 %v884, %v655
      %v892 = vadd.f32 %v885, %v656
      %v893 = vadd.f32 %v886, %v657
      %v894 = vadd.f32 %v887, %v658
      %v895 = vadd.f32 %v888, %v659
      %v896 = vmax.f32 %v889, 0.0
      %v897 = vmax.f32 %v890, 0.0
      %v898 = vmax.f32 %v891, 0.0
      %v899 = vmax.f32 %v892, 0.0
      %v900 = vmax.f32 %v893, 0.0
      %v901 = vmax.f32 %v894, 0.0
      %v902 = vmax.f32 %v895, 0.0
      %v903 = vsel %vm447, %v508, 0.0
      %v904 = vsel %vm447, %v510, 0.0
      %v905 = vadd.f32 %v903, %v904
      %v906 = vsel %vm447, %v551, 0.0
      %v907 = vadd.f32 %v905, %v906
      %v908 = vsel %vm447, %v553, 0.0
      %v909 = vadd.f32 %v907, %v908
      %v910 = vsel %vm447, %v594, 0.0
      %v911 = vadd.f32 %v909, %v910
      %v912 = vsel %vm447, %v596, 0.0
      %v913 = vadd.f32 %v911, %v912
      %v914 = vsel %vm678, %v636, 0.0
      %v915 = vadd.f32 %v913, %v914
      %916 = vadd.xlane.f32.xlu0 %v915
      %v917 = vpop.xlane.xlu0 %916
      %v918 = vrot.slane %v917, 4
      %v919 = vadd.f32 %v917, %v918
      %v920 = vrot.slane %v919, 2
      %v921 = vadd.f32 %v919, %v920
      %v922 = vrot.slane %v921, 1
      %v923 = vadd.f32 %v921, %v922
      %s924 = vtos %v923
      %v925 = vmul.f32 %v508, %v508
      %v926 = vmul.f32 %v510, %v510
      %v927 = vmul.f32 %v551, %v551
      %v928 = vmul.f32 %v553, %v553
      %v929 = vmul.f32 %v594, %v594
      %v930 = vmul.f32 %v596, %v596
      %v931 = vmul.f32 %v636, %v636
      %v932 = vsel %vm447, %v925, 0.0
      %v933 = vsel %vm447, %v926, 0.0
      %v934 = vadd.f32 %v932, %v933
      %v935 = vsel %vm447, %v927, 0.0
      %v936 = vadd.f32 %v934, %v935
      %v937 = vsel %vm447, %v928, 0.0
      %v938 = vadd.f32 %v936, %v937
      %v939 = vsel %vm447, %v929, 0.0
      %v940 = vadd.f32 %v938, %v939
      %v941 = vsel %vm447, %v930, 0.0
      %v942 = vadd.f32 %v940, %v941
      %v943 = vsel %vm678, %v931, 0.0
      %v944 = vadd.f32 %v942, %v943
      %945 = vadd.xlane.f32.xlu0 %v944
      %v946 = vpop.xlane.xlu0 %945
      %v947 = vrot.slane %v946, 4
      %v948 = vadd.f32 %v946, %v947
      %v949 = vrot.slane %v948, 2
      %v950 = vadd.f32 %v948, %v949
      %v951 = vrot.slane %v950, 1
      %v952 = vadd.f32 %v950, %v951
      %s953 = vtos %v952
      %v954 = vrcp.pop 3136.0
      %s955 = vtos %v954
      %s956 = smul.f32 %s924, %s955
      %v957 = vrcp.pop 3136.0
      %s958 = vtos %v957
      %s959 = smul.f32 %s953, %s958
      %s960 = smul.f32 %s956, %s956
      %s961 = ssub.f32 %s959, %s960
      %v962 = vstv %s956
      %v963 = vsub.f32 %v508, %v962
      %v964 = vsub.f32 %v510, %v962
      %v965 = vsub.f32 %v551, %v962
      %v966 = vsub.f32 %v553, %v962
      %v967 = vsub.f32 %v594, %v962
      %v968 = vsub.f32 %v596, %v962
      %v969 = vsub.f32 %v636, %v962
      %s970 = sadd.f32 %s961, 1e-05
      %v971 = vstv %s970
      %v972 = vrsqrt.pop %v971
      %s973 = vtos %v972
      %v974 = vstv %s973
      %v975 = vmul.f32 %v963, %v974
      %v976 = vmul.f32 %v964, %v974
      %v977 = vmul.f32 %v965, %v974
      %v978 = vmul.f32 %v966, %v974
      %v979 = vmul.f32 %v967, %v974
      %v980 = vmul.f32 %v968, %v974
      %v981 = vmul.f32 %v969, %v974
      %v982 = vmul.f32 %v975, %v646
      %v983 = vmul.f32 %v976, %v647
      %v984 = vmul.f32 %v977, %v648
      %v985 = vmul.f32 %v978, %v649
      %v986 = vmul.f32 %v979, %v650
      %v987 = vmul.f32 %v980, %v651
      %v988 = vmul.f32 %v981, %v652
      %v989 = vadd.f32 %v982, %v660
      %v990 = vadd.f32 %v983, %v661
      %v991 = vadd.f32 %v984, %v662
      %v992 = vadd.f32 %v985, %v663
      %v993 = vadd.f32 %v986, %v664
      %v994 = vadd.f32 %v987, %v665
      %v995 = vadd.f32 %v988, %v666
      %v996 = vmax.f32 %v989, 0.0
      %v997 = vmax.f32 %v990, 0.0
      %v998 = vmax.f32 %v991, 0.0
      %v999 = vmax.f32 %v992, 0.0
      %v1000 = vmax.f32 %v993, 0.0
      %v1001 = vmax.f32 %v994, 0.0
      %v1002 = vmax.f32 %v995, 0.0
      %v1003 = vsel %vm447, %v761, %v896
      %v1004 = vsel %vm447, %v762, %v897
      %v1005 = vsel %vm447, %v763, %v898
      %v1006 = vsel %vm447, %v764, %v899
      %v1007 = vsel %vm447, %v765, %v900
      %v1008 = vsel %vm447, %v766, %v901
      %v1009 = vsel %vm447, %v767, %v902
      %v1010 = vpack.c.bf16 %v996, %v1003
      %v1011 = vpack.c.bf16 %v997, %v1004
      %v1012 = vpack.c.bf16 %v998, %v1005
      %v1013 = vpack.c.bf16 %v999, %v1006
      %v1014 = vpack.c.bf16 %v1000, %v1007
      %v1015 = vpack.c.bf16 %v1001, %v1008
      %v1016 = vpack.c.bf16 %v1002, %v1009
      %v1024 = vunpack.c.l.b16 %v1010
      %v1025 = vunpack.c.l.b16 %v1011
      %v1026 = vunpack.c.l.b16 %v1012
      %v1027 = vunpack.c.l.b16 %v1013
      %v1028 = vunpack.c.l.b16 %v1014
      %v1029 = vunpack.c.l.b16 %v1015
      %v1030 = vunpack.c.l.b16 %v1016
      %v1031 = vunpack.c.h.b16 %v1010
      %v1032 = vunpack.c.h.b16 %v1011
      %v1033 = vunpack.c.h.b16 %v1012
      %v1034 = vunpack.c.h.b16 %v1013
      %v1035 = vunpack.c.h.b16 %v1014
      %v1036 = vunpack.c.h.b16 %v1015
      %v1037 = vunpack.c.h.b16 %v1016
      %v1038 = vpack.c.b16 %v1025, %v1024
      %v1039 = vpack.c.b16 %v1027, %v1026
      %v1040 = vpack.c.b16 %v1029, %v1028
      %v1041 = vpack.c.b16 %v1030, %v1030
      %v1042 = vpack.c.b16 %v1032, %v1031
      %v1043 = vpack.c.b16 %v1034, %v1033
      %v1044 = vpack.c.b16 %v1036, %v1035
      %v1045 = vpack.c.b16 %v1037, %v1037
      %1054 = vst [vmem:[%s224] sm:$0xff] %v1038
      %1055 = vst [vmem:[%s224 + $0x8] sm:$0xff] %v1039
      %1056 = vst [vmem:[%s224 + $0x10] sm:$0xff] %v1040
      %1057 = vst.msk [vmem:[%s224 + $0x18] sm:$0xf] %vm678, %v1041
      %1058 = vst [vmem:[%s224 + $0x1c] sm:$0x33] %v1042
      %1059 = vst [vmem:[%s224 + $0x24] sm:$0x33] %v1043
      %1060 = vst [vmem:[%s224 + $0x2c] sm:$0x33] %v1044
      %vm1061 = vcmask 123904
      %1062 = vst.msk [vmem:[%s224 + $0x34] sm:$0x3] %vm1061, %v1045
      %p1063 = scmp.lt.s32.totalorder %s16, 1
      %s1064 = scalar_select %p1063, %s16, 1
      %s1065 = smul.addr %s1064, 14
      %s1066 = smul.addr %s1065, 4
      %s1067 = scalar_lea.vmem %s5, %s1066
      // Predicated region
      $region41: #{residual_block.4} parent=39 // pred_check
        %p1068 = pneg %p144
      $region42: #{residual_block.4} parent=39 // pred_check_branch
        %1070 = sbr.rel (%p1068) target = $region44
      $region43: #{residual_block.4} parent=39 // pred_region
        _
      $region44: #{residual_block.4} parent=39 // pred_fallthru
        _
    $region40: #{residual_block.4} parent=5 // pred_fallthru
      _
    %p1071 = scmp.le.s32.totalorder 2, %s11
    // Predicated region
    $region45: #{residual_block.4} parent=5 // pred_check
      %p1072 = pneg %p1071
    $region46: #{residual_block.4} parent=5 // pred_check_branch
      %1074 = sbr.rel (%p1072) target = $region48
    $region47: #{residual_block.4} parent=5 // pred_region
      %s1075 = ssub.s32 %s11, 2
      // Predicated region
      $region49: #{residual_block.4} parent=47 // pred_check
        %p1076 = pneg %p150
      $region50: #{residual_block.4} parent=47 // pred_check_branch
        %1078 = sbr.rel (%p1076) target = $region52
      $region51: #{residual_block.4} parent=47 // pred_region
        %p1079 = scmp.lt.s32.totalorder %s17, 1
        %s1080 = scalar_select %p1079, %s17, 1
        %s1081 = smul.addr %s1080, 14
        %s1082 = smul.addr %s1081, 4
        %s1083 = scalar_lea.vmem %s5, %s1082
      $region52: #{residual_block.4} parent=47 // pred_fallthru
        _
    $region48: #{residual_block.4} parent=5 // pred_fallthru
      _
  $region6: #{residual_block.4} parent=0 // loop_footer
    %s15 = sadd.s32 1, %s11
  $region7: #{residual_block.4} parent=0 // loop_footer_branch
    %10 = sbr.rel target = $region3
  $region8: #{residual_block.4} parent=0 // loop_exit
    _

// kernel: residual_block.5
$region0: #{residual_block.5}
  #allocation0 [shape = 'u32[]', space=smem, size = 0x4, offset = 0x4, fixed_abs, tag = 'smem constant byte address 0x4 - core index']
  #allocation1 [shape = 'u32[144,128]{1,0:T(1,128)}', space=vmem, size = 0x12000, scoped, tag = 'internal scratch']
  %s0 = inlined_call_operand.vmem [shape: bf16[2,108,784], index: 0, kind: input, shape index: {}]
  %s1 = inlined_call_operand.vmem [shape: bf16[12,108], index: 1, kind: input, shape index: {}]
  %s2 = inlined_call_operand.vmem [shape: f32[12,1], index: 2, kind: input, shape index: {}]
  %s3 = inlined_call_operand.vmem [shape: f32[12,784], index: 3, kind: input, shape index: {}]
  %s4 = inlined_call_operand.vmem [shape: f32[12,784], index: 4, kind: input, shape index: {}]
  %s5 = inlined_call_operand.vmem [shape: f32[2,4,784], index: 5, kind: input, shape index: {}]
  %s6 = inlined_call_operand.vmem [shape: f32[2,4,784], index: 6, kind: output, shape index: {}]
  %s7 = sld [smem:[#allocation0]]
  $region57: #{residual_block.5} parent=0
    _
  %s9 = ssub.s32 1, %s7
  %s10 = scalar_select 0, %s9, %s7
  loop: start=0, step=1, limit=4
  $region2: #{residual_block.5} parent=0 // loop_pre_header
    _
  $region3: #{residual_block.5} parent=0 // loop_header
    %s12 = sphi 0, %s16
    %p13 = scmp.ge.s32.totalorder %s12, 4
    %s22 = sphi 0, %s24
    %s25 = sphi 0, %s22
    %s26 = sphi 0, %s25
    %s42 = sphi 0, %s26
    %s46 = sphi 0, %s46
    %s48 = sphi 0, %s46
    %s49 = sphi 0, %s48
    %s63 = sphi 0, %s49
    %s67 = sphi 0, %s67
    %s69 = sphi 0, %s67
    %s70 = sphi 0, %s69
    %s84 = sphi 0, %s70
    %s88 = sphi 0, %s88
    %s90 = sphi 0, %s88
    %s91 = sphi 0, %s90
    %s105 = sphi 0, %s91
    %s109 = sphi 0, %s109
    %s111 = sphi 0, %s109
    %s112 = sphi 0, %s111
    %s126 = sphi 0, %s112
    %s132 = sphi 0, %s134
    %s135 = sphi 0, %s132
    %s136 = sphi 0, %s135
    %s152 = sphi 0, %s136
    %s158 = sphi 0, %s160
    %s161 = sphi 0, %s158
    %s162 = sphi 0, %s161
    %s178 = sphi 0, %s162
  $region4: #{residual_block.5} parent=0 // loop_header_branch
    %15 = sbr.rel (%p13) target = $region8
  $region5: #{residual_block.5} parent=0 // loop_body
    %s17 = ssub.s32 %s12, 1
    %s18 = ssub.s32 %s12, 2
    %s19 = sadd.s32 %s12, 1
    %s20 = ssub.s32 %s12, %s19
    %p21 = scmp.eq.s32.totalorder %s20, 0
    %s23 = sadd.s32 %s22, 1
    %s24 = scalar_select %p21, %s22, %s23
    %p27 = pneg %p21
    %p28 = scmp.eq.s32.totalorder %s12, 1
    %p29 = por %p27, %p28
    %p30 = scmp.ne.s32.totalorder %s22, %s25
    %p31 = scmp.eq.s32.totalorder %s12, 0
    %p32 = por %p30, %p31
    %p33 = scmp.ne.s32.totalorder %s22, %s25
    %p34 = scmp.eq.s32.totalorder %s17, 1
    %p35 = por %p33, %p34
    %p36 = scmp.ne.s32.totalorder %s25, %s26
    %p37 = scmp.eq.s32.totalorder %s17, 0
    %p38 = por %p36, %p37
    %p39 = scmp.ne.s32.totalorder %s25, %s26
    %p40 = scmp.eq.s32.totalorder %s18, 1
    %p41 = por %p39, %p40
    %p43 = scmp.ne.s32.totalorder %s26, %s42
    %p44 = scmp.eq.s32.totalorder %s18, 0
    %p45 = por %p43, %p44
    %s47 = sadd.s32 %s46, 1
    %p50 = scmp.eq.s32.totalorder %s12, 1
    %p51 = scmp.ne.s32.totalorder %s46, %s48
    %p52 = scmp.eq.s32.totalorder %s12, 0
    %p53 = por %p51, %p52
    %p54 = scmp.ne.s32.totalorder %s46, %s48
    %p55 = scmp.eq.s32.totalorder %s17, 1
    %p56 = por %p54, %p55
    %p57 = scmp.ne.s32.totalorder %s48, %s49
    %p58 = scmp.eq.s32.totalorder %s17, 0
    %p59 = por %p57, %p58
    %p60 = scmp.ne.s32.totalorder %s48, %s49
    %p61 = scmp.eq.s32.totalorder %s18, 1
    %p62 = por %p60, %p61
    %p64 = scmp.ne.s32.totalorder %s49, %s63
    %p65 = scmp.eq.s32.totalorder %s18, 0
    %p66 = por %p64, %p65
    %s68 = sadd.s32 %s67, 1
    %p71 = scmp.eq.s32.totalorder %s12, 1
    %p72 = scmp.ne.s32.totalorder %s67, %s69
    %p73 = scmp.eq.s32.totalorder %s12, 0
    %p74 = por %p72, %p73
    %p75 = scmp.ne.s32.totalorder %s67, %s69
    %p76 = scmp.eq.s32.totalorder %s17, 1
    %p77 = por %p75, %p76
    %p78 = scmp.ne.s32.totalorder %s69, %s70
    %p79 = scmp.eq.s32.totalorder %s17, 0
    %p80 = por %p78, %p79
    %p81 = scmp.ne.s32.totalorder %s69, %s70
    %p82 = scmp.eq.s32.totalorder %s18, 1
    %p83 = por %p81, %p82
    %p85 = scmp.ne.s32.totalorder %s70, %s84
    %p86 = scmp.eq.s32.totalorder %s18, 0
    %p87 = por %p85, %p86
    %s89 = sadd.s32 %s88, 1
    %p92 = scmp.eq.s32.totalorder %s12, 1
    %p93 = scmp.ne.s32.totalorder %s88, %s90
    %p94 = scmp.eq.s32.totalorder %s12, 0
    %p95 = por %p93, %p94
    %p96 = scmp.ne.s32.totalorder %s88, %s90
    %p97 = scmp.eq.s32.totalorder %s17, 1
    %p98 = por %p96, %p97
    %p99 = scmp.ne.s32.totalorder %s90, %s91
    %p100 = scmp.eq.s32.totalorder %s17, 0
    %p101 = por %p99, %p100
    %p102 = scmp.ne.s32.totalorder %s90, %s91
    %p103 = scmp.eq.s32.totalorder %s18, 1
    %p104 = por %p102, %p103
    %p106 = scmp.ne.s32.totalorder %s91, %s105
    %p107 = scmp.eq.s32.totalorder %s18, 0
    %p108 = por %p106, %p107
    %s110 = sadd.s32 %s109, 1
    %p113 = scmp.eq.s32.totalorder %s12, 1
    %p114 = scmp.ne.s32.totalorder %s109, %s111
    %p115 = scmp.eq.s32.totalorder %s12, 0
    %p116 = por %p114, %p115
    %p117 = scmp.ne.s32.totalorder %s109, %s111
    %p118 = scmp.eq.s32.totalorder %s17, 1
    %p119 = por %p117, %p118
    %p120 = scmp.ne.s32.totalorder %s111, %s112
    %p121 = scmp.eq.s32.totalorder %s17, 0
    %p122 = por %p120, %p121
    %p123 = scmp.ne.s32.totalorder %s111, %s112
    %p124 = scmp.eq.s32.totalorder %s18, 1
    %p125 = por %p123, %p124
    %p127 = scmp.ne.s32.totalorder %s112, %s126
    %p128 = scmp.eq.s32.totalorder %s18, 0
    %p129 = por %p127, %p128
    %s130 = ssub.s32 %s12, %s19
    %p131 = scmp.eq.s32.totalorder %s130, 0
    %s133 = sadd.s32 %s132, 1
    %s134 = scalar_select %p131, %s132, %s133
    %p137 = pneg %p131
    %p138 = scmp.eq.s32.totalorder %s12, 1
    %p139 = por %p137, %p138
    %p140 = scmp.ne.s32.totalorder %s132, %s135
    %p141 = scmp.eq.s32.totalorder %s12, 0
    %p142 = por %p140, %p141
    %p143 = scmp.ne.s32.totalorder %s132, %s135
    %p144 = scmp.eq.s32.totalorder %s17, 1
    %p145 = por %p143, %p144
    %p146 = scmp.ne.s32.totalorder %s135, %s136
    %p147 = scmp.eq.s32.totalorder %s17, 0
    %p148 = por %p146, %p147
    %p149 = scmp.ne.s32.totalorder %s135, %s136
    %p150 = scmp.eq.s32.totalorder %s18, 1
    %p151 = por %p149, %p150
    %p153 = scmp.ne.s32.totalorder %s136, %s152
    %p154 = scmp.eq.s32.totalorder %s18, 0
    %p155 = por %p153, %p154
    %s156 = ssub.s32 %s12, %s19
    %p157 = scmp.eq.s32.totalorder %s156, 0
    %s159 = sadd.s32 %s158, 1
    %s160 = scalar_select %p157, %s158, %s159
    %p163 = pneg %p157
    %p164 = scmp.eq.s32.totalorder %s12, 1
    %p165 = por %p163, %p164
    %p166 = scmp.ne.s32.totalorder %s158, %s161
    %p167 = scmp.eq.s32.totalorder %s12, 0
    %p168 = por %p166, %p167
    %p169 = scmp.ne.s32.totalorder %s158, %s161
    %p170 = scmp.eq.s32.totalorder %s17, 1
    %p171 = por %p169, %p170
    %p172 = scmp.ne.s32.totalorder %s161, %s162
    %p173 = scmp.eq.s32.totalorder %s17, 0
    %p174 = por %p172, %p173
    %p175 = scmp.ne.s32.totalorder %s161, %s162
    %p176 = scmp.eq.s32.totalorder %s18, 1
    %p177 = por %p175, %p176
    %p179 = scmp.ne.s32.totalorder %s162, %s178
    %p180 = scmp.eq.s32.totalorder %s18, 0
    %p181 = por %p179, %p180
    %p182 = scmp.le.s32.totalorder 1, %s12
    %p183 = scmp.lt.s32.totalorder %s12, 3
    %p184 = pnand %p182, %p183
    %p185 = pneg %p184
    // Predicated region
    $region9: #{residual_block.5} parent=5 // pred_check
      _
    $region10: #{residual_block.5} parent=5 // pred_check_branch
      %187 = sbr.rel (%p184) target = $region12
    $region11: #{residual_block.5} parent=5 // pred_region
      %s188 = ssub.s32 %s12, 1
      // Predicated region
      $region13: #{residual_block.5} parent=11 // pred_check
        %p189 = pneg %p59
      $region14: #{residual_block.5} parent=11 // pred_check_branch
        %191 = sbr.rel (%p189) target = $region16
      $region15: #{residual_block.5} parent=11 // pred_region
        _
      $region16: #{residual_block.5} parent=11 // pred_fallthru
        _
      // Predicated region
      $region17: #{residual_block.5} parent=11 // pred_check
        %p192 = pneg %p80
      $region18: #{residual_block.5} parent=11 // pred_check_branch
        %194 = sbr.rel (%p192) target = $region20
      $region19: #{residual_block.5} parent=11 // pred_region
        _
      $region20: #{residual_block.5} parent=11 // pred_fallthru
        _
      // Predicated region
      $region21: #{residual_block.5} parent=11 // pred_check
        %p195 = pneg %p101
      $region22: #{residual_block.5} parent=11 // pred_check_branch
        %197 = sbr.rel (%p195) target = $region24
      $region23: #{residual_block.5} parent=11 // pred_region
        _
      $region24: #{residual_block.5} parent=11 // pred_fallthru
        _
      // Predicated region
      $region25: #{residual_block.5} parent=11 // pred_check
        %p198 = pneg %p122
      $region26: #{residual_block.5} parent=11 // pred_check_branch
        %200 = sbr.rel (%p198) target = $region28
      $region27: #{residual_block.5} parent=11 // pred_region
        _
      $region28: #{residual_block.5} parent=11 // pred_fallthru
        _
    $region12: #{residual_block.5} parent=5 // pred_fallthru
      _
    %p201 = scmp.lt.s32.totalorder %s12, 2
    // Predicated region
    $region29: #{residual_block.5} parent=5 // pred_check
      %p202 = pneg %p201
    $region30: #{residual_block.5} parent=5 // pred_check_branch
      %204 = sbr.rel (%p202) target = $region32
    $region31: #{residual_block.5} parent=5 // pred_region
      // Predicated region
      $region33: #{residual_block.5} parent=31 // pred_check
        %p205 = pneg %p32
      $region34: #{residual_block.5} parent=31 // pred_check_branch
        %207 = sbr.rel (%p205) target = $region36
      $region35: #{residual_block.5} parent=31 // pred_region
        %p208 = scmp.lt.s32.totalorder %s12, 1
        %s209 = scalar_select %p208, %s12, 1
        %s210 = smul.addr %s209, 98
        %s211 = smul.addr %s210, 4
        %s212 = scalar_lea.vmem %s0, %s211
      $region36: #{residual_block.5} parent=31 // pred_fallthru
        _
      // Predicated region
      $region37: #{residual_block.5} parent=31 // pred_check
        %p213 = pneg %p142
      $region38: #{residual_block.5} parent=31 // pred_check_branch
        %215 = sbr.rel (%p213) target = $region40
      $region39: #{residual_block.5} parent=31 // pred_region
        %p216 = scmp.lt.s32.totalorder %s12, 1
        %s217 = scalar_select %p216, %s12, 1
        %s218 = smul.addr %s217, 7
        %s219 = smul.addr %s218, 4
        %s220 = scalar_lea.vmem %s5, %s219
      $region40: #{residual_block.5} parent=31 // pred_fallthru
        _
    $region32: #{residual_block.5} parent=5 // pred_fallthru
      _
    %p221 = scmp.le.s32.totalorder 1, %s12
    %p222 = scmp.lt.s32.totalorder %s12, 3
    %p223 = pnand %p221, %p222
    %p224 = pneg %p223
    // Predicated region
    $region41: #{residual_block.5} parent=5 // pred_check
      _
    $region42: #{residual_block.5} parent=5 // pred_check_branch
      %226 = sbr.rel (%p223) target = $region44
    $region43: #{residual_block.5} parent=5 // pred_region
      %s227 = ssub.s32 %s12, 1
      %p228 = scmp.lt.s32.totalorder %s17, 1
      %s229 = scalar_select %p228, %s17, 1
      %s230 = smul.addr %s229, 98
      %s231 = smul.addr %s230, 4
      %s232 = scalar_lea.vmem %s0, %s231
      %p233 = pneg %p38
      %p234 = pneg %p35
      %p235 = pneg %p59
      %p236 = pneg %p56
      %p237 = pneg %p80
      %p238 = pneg %p77
      %p239 = pneg %p101
      %p240 = pneg %p98
      %p241 = pneg %p122
      %p242 = pneg %p119
      %p243 = scmp.lt.s32.totalorder %s17, 1
      %s244 = scalar_select %p243, %s17, 1
      %s245 = smul.addr %s244, 7
      %s246 = smul.addr %s245, 4
      %s247 = scalar_lea.vmem %s5, %s246
      %p248 = pneg %p148
      %p249 = pneg %p145
      %p250 = pneg %p174
      %p251 = pneg %p171
      %p252 = scmp.lt.s32.totalorder %s17, 1
      %s253 = scalar_select %p252, %s17, 1
      %s254 = smul.addr %s253, 7
      %s255 = smul.addr %s254, 4
      %s256 = scalar_lea.vmem %s6, %s255
      %p257 = scmp.lt.s32.totalorder %s17, 1
      %s258 = scalar_select %p257, %s17, 1
      %s259 = smul.addr %s258, 98
      %s260 = smul.addr %s259, 4
      %s261 = scalar_lea.vmem %s0, %s260
      %p262 = scmp.lt.s32.totalorder %s17, 1
      %s263 = scalar_select %p262, %s17, 1
      %s264 = smul.addr %s263, 7
      %s265 = smul.addr %s264, 4
      %s266 = scalar_lea.vmem %s5, %s265
      %p267 = scmp.lt.s32.totalorder %s17, 1
      %s268 = scalar_select %p267, %s17, 1
      %s269 = smul.addr %s268, 7
      %s270 = smul.addr %s269, 4
      %s271 = scalar_lea.vmem %s6, %s270
      %v273 = vld [vmem:[%s1] sm:$0xf]
      %v274 = vld [vmem:[%s1 + $0x4] sm:$0x3]
      %v275 = vld [vmem:[%s261] sm:$0xff]
      %v276 = vld [vmem:[%s261 + $0x8] sm:$0xff]
      %v277 = vld [vmem:[%s261 + $0x10] sm:$0xff]
      %v278 = vld [vmem:[%s261 + $0x18] sm:$0xf]
      %v279 = vld [vmem:[%s261 + $0x1c] sm:$0xff]
      %v280 = vld [vmem:[%s261 + $0x24] sm:$0xff]
      %v281 = vld [vmem:[%s261 + $0x2c] sm:$0xff]
      %v282 = vld [vmem:[%s261 + $0x34] sm:$0xf]
      %v283 = vld [vmem:[%s261 + $0x38] sm:$0xff]
      %v284 = vld [vmem:[%s261 + $0x40] sm:$0xff]
      %v285 = vld [vmem:[%s261 + $0x48] sm:$0xff]
      %v286 = vld [vmem:[%s261 + $0x50] sm:$0xf]
      %v287 = vld [vmem:[%s261 + $0x54] sm:$0xff]
      %v288 = vld [vmem:[%s261 + $0x5c] sm:$0xff]
      %v289 = vld [vmem:[%s261 + $0x64] sm:$0xff]
      %v290 = vld [vmem:[%s261 + $0x6c] sm:$0xf]
      %v291 = vld [vmem:[%s261 + $0x70] sm:$0xff]
      %v292 = vld [vmem:[%s261 + $0x78] sm:$0xff]
      %v293 = vld [vmem:[%s261 + $0x80] sm:$0xff]
      %v294 = vld [vmem:[%s261 + $0x88] sm:$0xf]
      %v295 = vld [vmem:[%s261 + $0x8c] sm:$0xff]
      %v296 = vld [vmem:[%s261 + $0x94] sm:$0xff]
      %v297 = vld [vmem:[%s261 + $0x9c] sm:$0xff]
      %v298 = vld [vmem:[%s261 + $0xa4] sm:$0xf]
      %v299 = vld [vmem:[%s261 + $0xa8] sm:$0xff]
      %v300 = vld [vmem:[%s261 + $0xb0] sm:$0xff]
      %v301 = vld [vmem:[%s261 + $0xb8] sm:$0xff]
      %v302 = vld [vmem:[%s261 + $0xc0] sm:$0xf]
      %v303 = vld [vmem:[%s261 + $0xc4] sm:$0xff]
      %v304 = vld [vmem:[%s261 + $0xcc] sm:$0xff]
      %v305 = vld [vmem:[%s261 + $0xd4] sm:$0xff]
      %v306 = vld [vmem:[%s261 + $0xdc] sm:$0xf]
      %v307 = vld [vmem:[%s261 + $0xe0] sm:$0xff]
      %v308 = vld [vmem:[%s261 + $0xe8] sm:$0xff]
      %v309 = vld [vmem:[%s261 + $0xf0] sm:$0xff]
      %v310 = vld [vmem:[%s261 + $0xf8] sm:$0xf]
      %v311 = vld [vmem:[%s261 + $0xfc] sm:$0xff]
      %v312 = vld [vmem:[%s261 + $0x104] sm:$0xff]
      %v313 = vld [vmem:[%s261 + $0x10c] sm:$0xff]
      %v314 = vld [vmem:[%s261 + $0x114] sm:$0xf]
      %v315 = vld [vmem:[%s261 + $0x118] sm:$0xff]
      %v316 = vld [vmem:[%s261 + $0x120] sm:$0xff]
      %v317 = vld [vmem:[%s261 + $0x128] sm:$0xff]
      %v318 = vld [vmem:[%s261 + $0x130] sm:$0xf]
      %v319 = vld [vmem:[%s261 + $0x134] sm:$0xff]
      %v320 = vld [vmem:[%s261 + $0x13c] sm:$0xff]
      %v321 = vld [vmem:[%s261 + $0x144] sm:$0xff]
      %v322 = vld [vmem:[%s261 + $0x14c] sm:$0xf]
      %v323 = vld [vmem:[%s261 + $0x150] sm:$0xff]
      %v324 = vld [vmem:[%s261 + $0x158] sm:$0xff]
      %v325 = vld [vmem:[%s261 + $0x160] sm:$0xff]
      %v326 = vld [vmem:[%s261 + $0x168] sm:$0xf]
      %v327 = vld [vmem:[%s261 + $0x16c] sm:$0x33]
      %v328 = vld [vmem:[%s261 + $0x174] sm:$0x33]
      %v329 = vld [vmem:[%s261 + $0x17c] sm:$0x33]
      %v330 = vld [vmem:[%s261 + $0x184] sm:$0x3]
      %v331 = vld [vmem:[%s2] sm:$0xff]
      %v332 = vld [vmem:[%s2 + $0x8] sm:$0xf]
      %334 = vset.pattern.permute.xlu0 0
      %335 = vperm.xlu0 %334, %v331
      %v336 = vpop.permute.xlu0 %335
      %339 = vset.pattern.permute.xlu0 0
      %340 = vperm.xlu0 %339, %v332
      %v341 = vpop.permute.xlu0 %340
      %v345 = vunpack.c.l.b16 %v273
      %v346 = vunpack.c.l.b16 %v274
      %v347 = vpack.c.b16 %v346, %v345
      %v404 = vunpack.c.l.b16 %v275
      %v405 = vunpack.c.h.b16 %v275
      %v406 = vunpack.c.l.b16 %v276
      %v407 = vunpack.c.h.b16 %v276
      %v408 = vunpack.c.l.b16 %v277
      %v409 = vunpack.c.h.b16 %v277
      %v410 = vunpack.c.l.b16 %v278
      %v411 = vunpack.c.l.b16 %v279
      %v412 = vunpack.c.h.b16 %v279
      %v413 = vunpack.c.l.b16 %v280
      %v414 = vunpack.c.h.b16 %v280
      %v415 = vunpack.c.l.b16 %v281
      %v416 = vunpack.c.h.b16 %v281
      %v417 = vunpack.c.l.b16 %v282
      %v418 = vunpack.c.l.b16 %v283
      %v419 = vunpack.c.h.b16 %v283
      %v420 = vunpack.c.l.b16 %v284
      %v421 = vunpack.c.h.b16 %v284
      %v422 = vunpack.c.l.b16 %v285
      %v423 = vunpack.c.h.b16 %v285
      %v424 = vunpack.c.l.b16 %v286
      %v425 = vunpack.c.l.b16 %v287
      %v426 = vunpack.c.h.b16 %v287
      %v427 = vunpack.c.l.b16 %v288
      %v428 = vunpack.c.h.b16 %v288
      %v429 = vunpack.c.l.b16 %v289
      %v430 = vunpack.c.h.b16 %v289
      %v431 = vunpack.c.l.b16 %v290
      %v432 = vunpack.c.l.b16 %v291
      %v433 = vunpack.c.h.b16 %v291
      %v434 = vunpack.c.l.b16 %v292
      %v435 = vunpack.c.h.b16 %v292
      %v436 = vunpack.c.l.b16 %v293
      %v437 = vunpack.c.h.b16 %v293
      %v438 = vunpack.c.l.b16 %v294
      %v439 = vunpack.c.l.b16 %v295
      %v440 = vunpack.c.h.b16 %v295
      %v441 = vunpack.c.l.b16 %v296
      %v442 = vunpack.c.h.b16 %v296
      %v443 = vunpack.c.l.b16 %v297
      %v444 = vunpack.c.h.b16 %v297
      %v445 = vunpack.c.l.b16 %v298
      %v446 = vunpack.c.l.b16 %v299
      %v447 = vunpack.c.h.b16 %v299
      %v448 = vunpack.c.l.b16 %v300
      %v449 = vunpack.c.h.b16 %v300
      %v450 = vunpack.c.l.b16 %v301
      %v451 = vunpack.c.h.b16 %v301
      %v452 = vunpack.c.l.b16 %v302
      %v453 = vunpack.c.l.b16 %v303
      %v454 = vunpack.c.h.b16 %v303
      %v455 = vunpack.c.l.b16 %v304
      %v456 = vunpack.c.h.b16 %v304
      %v457 = vunpack.c.l.b16 %v305
      %v458 = vunpack.c.h.b16 %v305
      %v459 = vunpack.c.l.b16 %v306
      %v460 = vunpack.c.l.b16 %v307
      %v461 = vunpack.c.h.b16 %v307
      %v462 = vunpack.c.l.b16 %v308
      %v463 = vunpack.c.h.b16 %v308
      %v464 = vunpack.c.l.b16 %v309
      %v465 = vunpack.c.h.b16 %v309
      %v466 = vunpack.c.l.b16 %v310
      %v467 = vunpack.c.l.b16 %v311
      %v468 = vunpack.c.h.b16 %v311
      %v469 = vunpack.c.l.b16 %v312
      %v470 = vunpack.c.h.b16 %v312
      %v471 = vunpack.c.l.b16 %v313
      %v472 = vunpack.c.h.b16 %v313
      %v473 = vunpack.c.l.b16 %v314
      %v474 = vunpack.c.l.b16 %v315
      %v475 = vunpack.c.h.b16 %v315
      %v476 = vunpack.c.l.b16 %v316
      %v477 = vunpack.c.h.b16 %v316
      %v478 = vunpack.c.l.b16 %v317
      %v479 = vunpack.c.h.b16 %v317
      %v480 = vunpack.c.l.b16 %v318
      %v481 = vunpack.c.l.b16 %v319
      %v482 = vunpack.c.h.b16 %v319
      %v483 = vunpack.c.l.b16 %v320
      %v484 = vunpack.c.h.b16 %v320
      %v485 = vunpack.c.l.b16 %v321
      %v486 = vunpack.c.h.b16 %v321
      %v487 = vunpack.c.l.b16 %v322
      %v488 = vunpack.c.l.b16 %v323
      %v489 = vunpack.c.h.b16 %v323
      %v490 = vunpack.c.l.b16 %v324
      %v491 = vunpack.c.h.b16 %v324
      %v492 = vunpack.c.l.b16 %v325
      %v493 = vunpack.c.h.b16 %v325
      %v494 = vunpack.c.l.b16 %v326
      %v495 = vunpack.c.l.b16 %v327
      %v496 = vunpack.c.h.b16 %v327
      %v497 = vunpack.c.l.b16 %v328
      %v498 = vunpack.c.h.b16 %v328
      %v499 = vunpack.c.l.b16 %v329
      %v500 = vunpack.c.h.b16 %v329
      %v501 = vunpack.c.l.b16 %v330
      %v502 = vpack.c.b16 %v411, %v404
      %v503 = vpack.c.b16 %v412, %v405
      %v504 = vpack.c.b16 %v413, %v406
      %v505 = vpack.c.b16 %v414, %v407
      %v506 = vpack.c.b16 %v415, %v408
      %v507 = vpack.c.b16 %v416, %v409
      %v508 = vpack.c.b16 %v417, %v410
      %v509 = vpack.c.b16 %v425, %v418
      %v510 = vpack.c.b16 %v426, %v419
      %v511 = vpack.c.b16 %v427, %v420
      %v512 = vpack.c.b16 %v428, %v421
      %v513 = vpack.c.b16 %v429, %v422
      %v514 = vpack.c.b16 %v430, %v423
      %v515 = vpack.c.b16 %v431, %v424
      %v516 = vpack.c.b16 %v439, %v432
      %v517 = vpack.c.b16 %v440, %v433
      %v518 = vpack.c.b16 %v441, %v434
      %v519 = vpack.c.b16 %v442, %v435
      %v520 = vpack.c.b16 %v443, %v436
      %v521 = vpack.c.b16 %v444, %v437
      %v522 = vpack.c.b16 %v445, %v438
      %v523 = vpack.c.b16 %v453, %v446
      %v524 = vpack.c.b16 %v454, %v447
      %v525 = vpack.c.b16 %v455, %v448
      %v526 = vpack.c.b16 %v456, %v449
      %v527 = vpack.c.b16 %v457, %v450
      %v528 = vpack.c.b16 %v458, %v451
      %v529 = vpack.c.b16 %v459, %v452
      %v530 = vpack.c.b16 %v467, %v460
      %v531 = vpack.c.b16 %v468, %v461
      %v532 = vpack.c.b16 %v469, %v462
      %v533 = vpack.c.b16 %v470, %v463
      %v534 = vpack.c.b16 %v471, %v464
      %v535 = vpack.c.b16 %v472, %v465
      %v536 = vpack.c.b16 %v473, %v466
      %v537 = vpack.c.b16 %v481, %v474
      %v538 = vpack.c.b16 %v482, %v475
      %v539 = vpack.c.b16 %v483, %v476
      %v540 = vpack.c.b16 %v484, %v477
      %v541 = vpack.c.b16 %v485, %v478
      %v542 = vpack.c.b16 %v486, %v479
      %v543 = vpack.c.b16 %v487, %v480
      %v544 = vpack.c.b16 %v495, %v488
      %v545 = vpack.c.b16 %v496, %v489
      %v546 = vpack.c.b16 %v497, %v490
      %v547 = vpack.c.b16 %v498, %v491
      %v548 = vpack.c.b16 %v499, %v492
      %v549 = vpack.c.b16 %v500, %v493
      %v550 = vpack.c.b16 %v501, %v494
      %vm593 = vcmask 883712
      %v595 = vsel %vm593, %v347, 0
      %vm597 = vcmask 1045504
      %v599 = vsel %vm597, %v544, 0
      %v602 = vsel %vm597, %v545, 0
      %v605 = vsel %vm597, %v546, 0
      %v608 = vsel %vm597, %v547, 0
      %v611 = vsel %vm597, %v548, 0
      %v614 = vsel %vm597, %v549, 0
      %v617 = vsel %vm597, %v550, 0
      %619 = vmatprep.subr.bf16.mxu0 %v503
      %620 = vmatpush1.bf16.msra.mxu0 %v502
      %621 = vmatprep.subr.bf16.mxu0 %v510
      %622 = vmatpush1.bf16.msra.mxu0 %v509
      %623 = vmatprep.subr.bf16.mxu0 %v517
      %624 = vmatpush1.bf16.msra.mxu0 %v516
      %625 = vmatprep.subr.bf16.mxu0 %v524
      %626 = vmatpush1.bf16.msra.mxu0 %v523
      %627 = vmatprep.subr.bf16.mxu0 %v531
      %628 = vmatpush1.bf16.msra.mxu0 %v530
      %629 = vmatprep.subr.bf16.mxu0 %v538
      %630 = vmatpush1.bf16.msra.mxu0 %v537
      %631 = vmatprep.subr.bf16.mxu0 %v602
      %632 = vmatpush1.bf16.msra.mxu0 %v599
      %633 = vmatprep.subr.bf16.mxu0 0
      %634 = vmatpush1.bf16.msra.mxu0 0
      %635 = vmatprep.subr.bf16.mxu0 0
      %636 = vmatpush1.bf16.msra.mxu0 0
      %637 = vmatprep.subr.bf16.mxu0 0
      %638 = vmatpush1.bf16.msra.mxu0 0
      %639 = vmatprep.subr.bf16.mxu0 0
      %640 = vmatpush1.bf16.msra.mxu0 0
      %641 = vmatprep.subr.bf16.mxu0 0
      %642 = vmatpush1.bf16.msra.mxu0 0
      %643 = vmatprep.subr.bf16.mxu0 0
      %644 = vmatpush1.bf16.msra.mxu0 0
      %645 = vmatprep.subr.bf16.mxu0 0
      %646 = vmatpush1.bf16.msra.mxu0 0
      %647 = vmatprep.subr.bf16.mxu0 0
      %648 = vmatpush1.bf16.msra.mxu0 0
      %649 = vmatprep.subr.bf16.mxu0 0
      %650 = vmatpush1.bf16.msra.mxu0 0
      %651 = vmatprep.mubr.bf16.mxu0 0
      %652 = vmatmul.mubr.bf16.gmra.mrb[0].mxu0 %v595
      %v653 = vpop.f32.mrb[0].mxu0
      %v654 = vadd.f32 %v336, %v653
      %v655 = vpop.f32.mrb[0].mxu0
      %v656 = vadd.f32 %v336, %v655
      %v657 = vpop.f32.mrb[0].mxu0
      %v658 = vadd.f32 %v341, %v657
      %v659 = vpop.f32.mrb[0].mxu0
      %v660 = vadd.f32 %v341, %v659
      %661 = vdwg.mxu0
      %662 = vmatprep.subr.bf16.mxu0 %v505
      %663 = vmatpush1.bf16.msra.mxu0 %v504
      %664 = vmatprep.subr.bf16.mxu0 %v512
      %665 = vmatpush1.bf16.msra.mxu0 %v511
      %666 = vmatprep.subr.bf16.mxu0 %v519
      %667 = vmatpush1.bf16.msra.mxu0 %v518
      %668 = vmatprep.subr.bf16.mxu0 %v526
      %669 = vmatpush1.bf16.msra.mxu0 %v525
      %670 = vmatprep.subr.bf16.mxu0 %v533
      %671 = vmatpush1.bf16.msra.mxu0 %v532
      %672 = vmatprep.subr.bf16.mxu0 %v540
      %673 = vmatpush1.bf16.msra.mxu0 %v539
      %674 = vmatprep.subr.bf16.mxu0 %v608
      %675 = vmatpush1.bf16.msra.mxu0 %v605
      %676 = vmatprep.subr.bf16.mxu0 0
      %677 = vmatpush1.bf16.msra.mxu0 0
      %678 = vmatprep.subr.bf16.mxu0 0
      %679 = vmatpush1.bf16.msra.mxu0 0
      %680 = vmatprep.subr.bf16.mxu0 0
      %681 = vmatpush1.bf16.msra.mxu0 0
      %682 = vmatprep.subr.bf16.mxu0 0
      %683 = vmatpush1.bf16.msra.mxu0 0
      %684 = vmatprep.subr.bf16.mxu0 0
      %685 = vmatpush1.bf16.msra.mxu0 0
      %686 = vmatprep.subr.bf16.mxu0 0
      %687 = vmatpush1.bf16.msra.mxu0 0
      %688 = vmatprep.subr.bf16.mxu0 0
      %689 = vmatpush1.bf16.msra.mxu0 0
      %690 = vmatprep.subr.bf16.mxu0 0
      %691 = vmatpush1.bf16.msra.mxu0 0
      %692 = vmatprep.subr.bf16.mxu0 0
      %693 = vmatpush1.bf16.msra.mxu0 0
      %694 = vmatprep.mubr.bf16.mxu0 0
      %695 = vmatmul.mubr.bf16.gmra.mrb[0].mxu0 %v595
      %v696 = vpop.f32.mrb[0].mxu0
      %v697 = vadd.f32 %v336, %v696
      %v698 = vpop.f32.mrb[0].mxu0
      %v699 = vadd.f32 %v336, %v698
      %v700 = vpop.f32.mrb[0].mxu0
      %v701 = vadd.f32 %v341, %v700
      %v702 = vpop.f32.mrb[0].mxu0
      %v703 = vadd.f32 %v341, %v702
      %704 = vdwg.mxu0
      %705 = vmatprep.subr.bf16.mxu0 %v507
      %706 = vmatpush1.bf16.msra.mxu0 %v506
      %707 = vmatprep.subr.bf16.mxu0 %v514
      %708 = vmatpush1.bf16.msra.mxu0 %v513
      %709 = vmatprep.subr.bf16.mxu0 %v521
      %710 = vmatpush1.bf16.msra.mxu0 %v520
      %711 = vmatprep.subr.bf16.mxu0 %v528
      %712 = vmatpush1.bf16.msra.mxu0 %v527
      %713 = vmatprep.subr.bf16.mxu0 %v535
      %714 = vmatpush1.bf16.msra.mxu0 %v534
      %715 = vmatprep.subr.bf16.mxu0 %v542
      %716 = vmatpush1.bf16.msra.mxu0 %v541
      %717 = vmatprep.subr.bf16.mxu0 %v614
      %718 = vmatpush1.bf16.msra.mxu0 %v611
      %719 = vmatprep.subr.bf16.mxu0 0
      %720 = vmatpush1.bf16.msra.mxu0 0
      %721 = vmatprep.subr.bf16.mxu0 0
      %722 = vmatpush1.bf16.msra.mxu0 0
      %723 = vmatprep.subr.bf16.mxu0 0
      %724 = vmatpush1.bf16.msra.mxu0 0
      %725 = vmatprep.subr.bf16.mxu0 0
      %726 = vmatpush1.bf16.msra.mxu0 0
      %727 = vmatprep.subr.bf16.mxu0 0
      %728 = vmatpush1.bf16.msra.mxu0 0
      %729 = vmatprep.subr.bf16.mxu0 0
      %730 = vmatpush1.bf16.msra.mxu0 0
      %731 = vmatprep.subr.bf16.mxu0 0
      %732 = vmatpush1.bf16.msra.mxu0 0
      %733 = vmatprep.subr.bf16.mxu0 0
      %734 = vmatpush1.bf16.msra.mxu0 0
      %735 = vmatprep.subr.bf16.mxu0 0
      %736 = vmatpush1.bf16.msra.mxu0 0
      %737 = vmatprep.mubr.bf16.mxu0 0
      %738 = vmatmul.mubr.bf16.gmra.mrb[0].mxu0 %v595
      %v739 = vpop.f32.mrb[0].mxu0
      %v740 = vadd.f32 %v336, %v739
      %v741 = vpop.f32.mrb[0].mxu0
      %v742 = vadd.f32 %v336, %v741
      %v743 = vpop.f32.mrb[0].mxu0
      %v744 = vadd.f32 %v341, %v743
      %v745 = vpop.f32.mrb[0].mxu0
      %v746 = vadd.f32 %v341, %v745
      %747 = vdwg.mxu0
      %748 = vmatprep.subr.bf16.mxu0 0
      %749 = vmatpush1.bf16.msra.mxu0 %v508
      %750 = vmatprep.subr.bf16.mxu0 0
      %751 = vmatpush1.bf16.msra.mxu0 %v515
      %752 = vmatprep.subr.bf16.mxu0 0
      %753 = vmatpush1.bf16.msra.mxu0 %v522
      %754 = vmatprep.subr.bf16.mxu0 0
      %755 = vmatpush1.bf16.msra.mxu0 %v529
      %756 = vmatprep.subr.bf16.mxu0 0
      %757 = vmatpush1.bf16.msra.mxu0 %v536
      %758 = vmatprep.subr.bf16.mxu0 0
      %759 = vmatpush1.bf16.msra.mxu0 %v543
      %760 = vmatprep.subr.bf16.mxu0 0
      %761 = vmatpush1.bf16.msra.mxu0 %v617
      %762 = vmatprep.subr.bf16.mxu0 0
      %763 = vmatpush1.bf16.msra.mxu0 0
      %764 = vmatprep.subr.bf16.mxu0 0
      %765 = vmatpush1.bf16.msra.mxu0 0
      %766 = vmatprep.subr.bf16.mxu0 0
      %767 = vmatpush1.bf16.msra.mxu0 0
      %768 = vmatprep.subr.bf16.mxu0 0
      %769 = vmatpush1.bf16.msra.mxu0 0
      %770 = vmatprep.subr.bf16.mxu0 0
      %771 = vmatpush1.bf16.msra.mxu0 0
      %772 = vmatprep.subr.bf16.mxu0 0
      %773 = vmatpush1.bf16.msra.mxu0 0
      %774 = vmatprep.subr.bf16.mxu0 0
      %775 = vmatpush1.bf16.msra.mxu0 0
      %776 = vmatprep.subr.bf16.mxu0 0
      %777 = vmatpush1.bf16.msra.mxu0 0
      %778 = vmatprep.subr.bf16.mxu0 0
      %779 = vmatpush1.bf16.msra.mxu0 0
      %780 = vmatprep.mubr.bf16.mxu0 0
      %781 = vmatmul.mubr.bf16.gmra.mrb[0].mxu0 %v595
      %v782 = vpop.f32.mrb[0].mxu0
      %v783 = vadd.f32 %v336, %v782
      %v784 = vpop.f32.mrb[0].mxu0
      %v785 = vpop.f32.mrb[0].mxu0
      %v786 = vadd.f32 %v341, %v785
      %v787 = vpop.f32.mrb[0].mxu0
      %788 = vdwg.mxu0
      %v789 = vld [vmem:[%s3] sm:$0xff]
      %v790 = vld [vmem:[%s3 + $0x8] sm:$0xff]
      %v791 = vld [vmem:[%s3 + $0x10] sm:$0xff]
      %v792 = vld [vmem:[%s3 + $0x18] sm:$0xff]
      %v793 = vld [vmem:[%s3 + $0x20] sm:$0xff]
      %v794 = vld [vmem:[%s3 + $0x28] sm:$0xff]
      %v795 = vld [vmem:[%s3 + $0x30] sm:$0xff]
      %v796 = vld [vmem:[%s3 + $0x38] sm:$0xf]
      %v797 = vld [vmem:[%s3 + $0x40] sm:$0xf]
      %v798 = vld [vmem:[%s3 + $0x48] sm:$0xf]
      %v799 = vld [vmem:[%s3 + $0x50] sm:$0xf]
      %v800 = vld [vmem:[%s3 + $0x58] sm:$0xf]
      %v801 = vld [vmem:[%s3 + $0x60] sm:$0xf]
      %v802 = vld [vmem:[%s3 + $0x68] sm:$0xf]
      %v803 = vld [vmem:[%s4] sm:$0xff]
      %v804 = vld [vmem:[%s4 + $0x8] sm:$0xff]
      %v805 = vld [vmem:[%s4 + $0x10] sm:$0xff]
      %v806 = vld [vmem:[%s4 + $0x18] sm:$0xff]
      %v807 = vld [vmem:[%s4 + $0x20] sm:$0xff]
      %v808 = vld [vmem:[%s4 + $0x28] sm:$0xff]
      %v809 = vld [vmem:[%s4 + $0x30] sm:$0xff]
      %v810 = vld [vmem:[%s4 + $0x38] sm:$0xf]
      %v811 = vld [vmem:[%s4 + $0x40] sm:$0xf]
      %v812 = vld [vmem:[%s4 + $0x48] sm:$0xf]
      %v813 = vld [vmem:[%s4 + $0x50] sm:$0xf]
      %v814 = vld [vmem:[%s4 + $0x58] sm:$0xf]
      %v815 = vld [vmem:[%s4 + $0x60] sm:$0xf]
      %v816 = vld [vmem:[%s4 + $0x68] sm:$0xf]
      %vm817 = vcmask 1043456
      %v818 = vsel %vm817, %v654, 0.0
      %v819 = vsel %vm817, %v656, 0.0
      %v820 = vadd.f32 %v818, %v819
      %v821 = vsel %vm817, %v697, 0.0
      %v822 = vadd.f32 %v820, %v821
      %v823 = vsel %vm817, %v699, 0.0
      %v824 = vadd.f32 %v822, %v823
      %v825 = vsel %vm817, %v740, 0.0
      %v826 = vadd.f32 %v824, %v825
      %v827 = vsel %vm817, %v742, 0.0
      %v828 = vadd.f32 %v826, %v827
      %vm829 = vcmask 125952
      %v830 = vsel %vm829, %v783, 0.0
      %v831 = vadd.f32 %v828, %v830
      %832 = vadd.xlane.f32.xlu0 %v831
      %v833 = vpop.xlane.xlu0 %832
      %v834 = vrot.slane %v833, 4
      %v835 = vadd.f32 %v833, %v834
      %v836 = vrot.slane %v835, 2
      %v837 = vadd.f32 %v835, %v836
      %v838 = vrot.slane %v837, 1
      %v839 = vadd.f32 %v837, %v838
      %s840 = vtos %v839
      %v841 = vmul.f32 %v654, %v654
      %v842 = vmul.f32 %v656, %v656
      %v843 = vmul.f32 %v697, %v697
      %v844 = vmul.f32 %v699, %v699
      %v845 = vmul.f32 %v740, %v740
      %v846 = vmul.f32 %v742, %v742
      %v847 = vmul.f32 %v783, %v783
      %v848 = vsel %vm817, %v841, 0.0
      %v849 = vsel %vm817, %v842, 0.0
      %v850 = vadd.f32 %v848, %v849
      %v851 = vsel %vm817, %v843, 0.0
      %v852 = vadd.f32 %v850, %v851
      %v853 = vsel %vm817, %v844, 0.0
      %v854 = vadd.f32 %v852, %v853
      %v855 = vsel %vm817, %v845, 0.0
      %v856 = vadd.f32 %v854, %v855
      %v857 = vsel %vm817, %v846, 0.0
      %v858 = vadd.f32 %v856, %v857
      %v859 = vsel %vm829, %v847, 0.0
      %v860 = vadd.f32 %v858, %v859
      %861 = vadd.xlane.f32.xlu0 %v860
      %v862 = vpop.xlane.xlu0 %861
      %v863 = vrot.slane %v862, 4
      %v864 = vadd.f32 %v862, %v863
      %v865 = vrot.slane %v864, 2
      %v866 = vadd.f32 %v864, %v865
      %v867 = vrot.slane %v866, 1
      %v868 = vadd.f32 %v866, %v867
      %s869 = vtos %v868
      %v870 = vrcp.pop 3136.0
      %s871 = vtos %v870
      %s872 = smul.f32 %s840, %s871
      %v873 = vrcp.pop 3136.0
      %s874 = vtos %v873
      %s875 = smul.f32 %s869, %s874
      %s876 = smul.f32 %s872, %s872
      %s877 = ssub.f32 %s875, %s876
      %v878 = vstv %s872
      %v879 = vsub.f32 %v654, %v878
      %v880 = vsub.f32 %v656, %v878
      %v881 = vsub.f32 %v697, %v878
      %v882 = vsub.f32 %v699, %v878
      %v883 = vsub.f32 %v740, %v878
      %v884 = vsub.f32 %v742, %v878
      %v885 = vsub.f32 %v783, %v878
      %s886 = sadd.f32 %s877, 1e-05
      %v887 = vstv %s886
      %v888 = vrsqrt.pop %v887
      %s889 = vtos %v888
      %v890 = vstv %s889
      %v891 = vmul.f32 %v879, %v890
      %v892 = vmul.f32 %v880, %v890
      %v893 = vmul.f32 %v881, %v890
      %v894 = vmul.f32 %v882, %v890
      %v895 = vmul.f32 %v883, %v890
      %v896 = vmul.f32 %v884, %v890
      %v897 = vmul.f32 %v885, %v890
      %v898 = vmul.f32 %v891, %v789
      %v899 = vmul.f32 %v892, %v790
      %v900 = vmul.f32 %v893, %v791
      %v901 = vmul.f32 %v894, %v792
      %v902 = vmul.f32 %v895, %v793
      %v903 = vmul.f32 %v896, %v794
      %v904 = vmul.f32 %v897, %v795
      %v905 = vadd.f32 %v898, %v803
      %v906 = vadd.f32 %v899, %v804
      %v907 = vadd.f32 %v900, %v805
      %v908 = vadd.f32 %v901, %v806
      %v909 = vadd.f32 %v902, %v807
      %v910 = vadd.f32 %v903, %v808
      %v911 = vadd.f32 %v904, %v809
      %v912 = vxor.u32 %v905, 2147483648
      %v913 = vxor.u32 %v906, 2147483648
      %v914 = vxor.u32 %v907, 2147483648
      %v915 = vxor.u32 %v908, 2147483648
      %v916 = vxor.u32 %v909, 2147483648
      %v917 = vxor.u32 %v910, 2147483648
      %v918 = vxor.u32 %v911, 2147483648
      %v919 = vmul.f32 %v912, 1.442695
      %v920 = vpow.pop %v919
      %v921 = vmul.f32 %v913, 1.442695
      %v922 = vpow.pop %v921
      %v923 = vmul.f32 %v914, 1.442695
      %v924 = vpow.pop %v923
      %v925 = vmul.f32 %v915, 1.442695
      %v926 = vpow.pop %v925
      %v927 = vmul.f32 %v916, 1.442695
      %v928 = vpow.pop %v927
      %v929 = vmul.f32 %v917, 1.442695
      %v930 = vpow.pop %v929
      %v931 = vmul.f32 %v918, 1.442695
      %v932 = vpow.pop %v931
      %v933 = vadd.f32 %v920, 1.0
      %v934 = vadd.f32 %v922, 1.0
      %v935 = vadd.f32 %v924, 1.0
      %v936 = vadd.f32 %v926, 1.0
      %v937 = vadd.f32 %v928, 1.0
      %v938 = vadd.f32 %v930, 1.0
      %v939 = vadd.f32 %v932, 1.0
      %v940 = vrcp.pop %v933
      %v941 = vmul.f32 1.0, %v940
      %v942 = vrcp.pop %v934
      %v943 = vmul.f32 1.0, %v942
      %v944 = vrcp.pop %v935
      %v945 = vmul.f32 1.0, %v944
      %v946 = vrcp.pop %v936
      %v947 = vmul.f32 1.0, %v946
      %v948 = vrcp.pop %v937
      %v949 = vmul.f32 1.0, %v948
      %v950 = vrcp.pop %v938
      %v951 = vmul.f32 1.0, %v950
      %v952 = vrcp.pop %v939
      %v953 = vmul.f32 1.0, %v952
      %v961 = vrot.slane %v654, 4
      %v962 = vrot.slane %v656, 4
      %v963 = vrot.slane %v697, 4
      %v964 = vrot.slane %v699, 4
      %v965 = vrot.slane %v740, 4
      %v966 = vrot.slane %v742, 4
      %v967 = vrot.slane %v783, 4
      %v975 = vsel %vm817, %v961, 0.0
      %v976 = vsel %vm817, %v962, 0.0
      %v977 = vadd.f32 %v975, %v976
      %v978 = vsel %vm817, %v963, 0.0
      %v979 = vadd.f32 %v977, %v978
      %v980 = vsel %vm817, %v964, 0.0
      %v981 = vadd.f32 %v979, %v980
      %v982 = vsel %vm817, %v965, 0.0
      %v983 = vadd.f32 %v981, %v982
      %v984 = vsel %vm817, %v966, 0.0
      %v985 = vadd.f32 %v983, %v984
      %v986 = vsel %vm829, %v967, 0.0
      %v987 = vadd.f32 %v985, %v986
      %988 = vadd.xlane.f32.xlu0 %v987
      %v989 = vpop.xlane.xlu0 %988
      %v990 = vrot.slane %v989, 4
      %v991 = vadd.f32 %v989, %v990
      %v992 = vrot.slane %v991, 2
      %v993 = vadd.f32 %v991, %v992
      %v994 = vrot.slane %v993, 1
      %v995 = vadd.f32 %v993, %v994
      %s996 = vtos %v995
      %v1004 = vrot.slane %v841, 4
      %v1005 = vrot.slane %v842, 4
      %v1006 = vrot.slane %v843, 4
      %v1007 = vrot.slane %v844, 4
      %v1008 = vrot.slane %v845, 4
      %v1009 = vrot.slane %v846, 4
      %v1010 = vrot.slane %v847, 4
      %v1018 = vsel %vm817, %v1004, 0.0
      %v1019 = vsel %vm817, %v1005, 0.0
      %v1020 = vadd.f32 %v1018, %v1019
      %v1021 = vsel %vm817, %v1006, 0.0
      %v1022 = vadd.f32 %v1020, %v1021
      %v1023 = vsel %vm817, %v1007, 0.0
      %v1024 = vadd.f32 %v1022, %v1023
      %v1025 = vsel %vm817, %v1008, 0.0
      %v1026 = vadd.f32 %v1024, %v1025
      %v1027 = vsel %vm817, %v1009, 0.0
      %v1028 = vadd.f32 %v1026, %v1027
      %v1029 = vsel %vm829, %v1010, 0.0
      %v1030 = vadd.f32 %v1028, %v1029
      %1031 = vadd.xlane.f32.xlu0 %v1030
      %v1032 = vpop.xlane.xlu0 %1031
      %v1033 = vrot.slane %v1032, 4
      %v1034 = vadd.f32 %v1032, %v1033
      %v1035 = vrot.slane %v1034, 2
      %v1036 = vadd.f32 %v1034, %v1035
      %v1037 = vrot.slane %v1036, 1
      %v1038 = vadd.f32 %v1036, %v1037
      %s1039 = vtos %v1038
      %v1040 = vrcp.pop 3136.0
      %s1041 = vtos %v1040
      %s1042 = smul.f32 %s996, %s1041
      %v1043 = vrcp.pop 3136.0
      %s1044 = vtos %v1043
      %s1045 = smul.f32 %s1039, %s1044
      %s1046 = smul.f32 %s1042, %s1042
      %s1047 = ssub.f32 %s1045, %s1046
      %v1048 = vstv %s1042
      %v1049 = vsub.f32 %v654, %v1048
      %v1050 = vsub.f32 %v656, %v1048
      %v1051 = vsub.f32 %v697, %v1048
      %v1052 = vsub.f32 %v699, %v1048
      %v1053 = vsub.f32 %v740, %v1048
      %v1054 = vsub.f32 %v742, %v1048
      %v1055 = vsub.f32 %v783, %v1048
      %s1056 = sadd.f32 %s1047, 1e-05
      %v1057 = vstv %s1056
      %v1058 = vrsqrt.pop %v1057
      %s1059 = vtos %v1058
      %v1060 = vstv %s1059
      %v1061 = vmul.f32 %v1049, %v1060
      %v1062 = vmul.f32 %v1050, %v1060
      %v1063 = vmul.f32 %v1051, %v1060
      %v1064 = vmul.f32 %v1052, %v1060
      %v1065 = vmul.f32 %v1053, %v1060
      %v1066 = vmul.f32 %v1054, %v1060
      %v1067 = vmul.f32 %v1055, %v1060
      %v1068 = vmul.f32 %v1061, %v789
      %v1069 = vmul.f32 %v1062, %v790
      %v1070 = vmul.f32 %v1063, %v791
      %v1071 = vmul.f32 %v1064, %v792
      %v1072 = vmul.f32 %v1065, %v793
      %v1073 = vmul.f32 %v1066, %v794
      %v1074 = vmul.f32 %v1067, %v795
      %v1075 = vadd.f32 %v1068, %v803
      %v1076 = vadd.f32 %v1069, %v804
      %v1077 = vadd.f32 %v1070, %v805
      %v1078 = vadd.f32 %v1071, %v806
      %v1079 = vadd.f32 %v1072, %v807
      %v1080 = vadd.f32 %v1073, %v808
      %v1081 = vadd.f32 %v1074, %v809
      %v1082 = vxor.u32 %v1075, 2147483648
      %v1083 = vxor.u32 %v1076, 2147483648
      %v1084 = vxor.u32 %v1077, 2147483648
      %v1085 = vxor.u32 %v1078, 2147483648
      %v1086 = vxor.u32 %v1079, 2147483648
      %v1087 = vxor.u32 %v1080, 2147483648
      %v1088 = vxor.u32 %v1081, 2147483648
      %v1089 = vmul.f32 %v1082, 1.442695
      %v1090 = vpow.pop %v1089
      %v1091 = vmul.f32 %v1083, 1.442695
      %v1092 = vpow.pop %v1091
      %v1093 = vmul.f32 %v1084, 1.442695
      %v1094 = vpow.pop %v1093
      %v1095 = vmul.f32 %v1085, 1.442695
      %v1096 = vpow.pop %v1095
      %v1097 = vmul.f32 %v1086, 1.442695
      %v1098 = vpow.pop %v1097
      %v1099 = vmul.f32 %v1087, 1.442695
      %v1100 = vpow.pop %v1099
      %v1101 = vmul.f32 %v1088, 1.442695
      %v1102 = vpow.pop %v1101
      %v1103 = vadd.f32 %v1090, 1.0
      %v1104 = vadd.f32 %v1092, 1.0
      %v1105 = vadd.f32 %v1094, 1.0
      %v1106 = vadd.f32 %v1096, 1.0
      %v1107 = vadd.f32 %v1098, 1.0
      %v1108 = vadd.f32 %v1100, 1.0
      %v1109 = vadd.f32 %v1102, 1.0
      %v1110 = vrcp.pop %v1103
      %v1111 = vmul.f32 1.0, %v1110
      %v1112 = vrcp.pop %v1104
      %v1113 = vmul.f32 1.0, %v1112
      %v1114 = vrcp.pop %v1105
      %v1115 = vmul.f32 1.0, %v1114
      %v1116 = vrcp.pop %v1106
      %v1117 = vmul.f32 1.0, %v1116
      %v1118 = vrcp.pop %v1107
      %v1119 = vmul.f32 1.0, %v1118
      %v1120 = vrcp.pop %v1108
      %v1121 = vmul.f32 1.0, %v1120
      %v1122 = vrcp.pop %v1109
      %v1123 = vmul.f32 1.0, %v1122
      %v1124 = vsel %vm817, %v658, 0.0
      %v1125 = vsel %vm817, %v660, 0.0
      %v1126 = vadd.f32 %v1124, %v1125
      %v1127 = vsel %vm817, %v701, 0.0
      %v1128 = vadd.f32 %v1126, %v1127
      %v1129 = vsel %vm817, %v703, 0.0
      %v1130 = vadd.f32 %v1128, %v1129
      %v1131 = vsel %vm817, %v744, 0.0
      %v1132 = vadd.f32 %v1130, %v1131
      %v1133 = vsel %vm817, %v746, 0.0
      %v1134 = vadd.f32 %v1132, %v1133
      %v1135 = vsel %vm829, %v786, 0.0
      %v1136 = vadd.f32 %v1134, %v1135
      %1137 = vadd.xlane.f32.xlu0 %v1136
      %v1138 = vpop.xlane.xlu0 %1137
      %v1139 = vrot.slane %v1138, 4
      %v1140 = vadd.f32 %v1138, %v1139
      %v1141 = vrot.slane %v1140, 2
      %v1142 = vadd.f32 %v1140, %v1141
      %v1143 = vrot.slane %v1142, 1
      %v1144 = vadd.f32 %v1142, %v1143
      %s1145 = vtos %v1144
      %v1146 = vmul.f32 %v658, %v658
      %v1147 = vmul.f32 %v660, %v660
      %v1148 = vmul.f32 %v701, %v701
      %v1149 = vmul.f32 %v703, %v703
      %v1150 = vmul.f32 %v744, %v744
      %v1151 = vmul.f32 %v746, %v746
      %v1152 = vmul.f32 %v786, %v786
      %v1153 = vsel %vm817, %v1146, 0.0
      %v1154 = vsel %vm817, %v1147, 0.0
      %v1155 = vadd.f32 %v1153, %v1154
      %v1156 = vsel %vm817, %v1148, 0.0
      %v1157 = vadd.f32 %v1155, %v1156
      %v1158 = vsel %vm817, %v1149, 0.0
      %v1159 = vadd.f32 %v1157, %v1158
      %v1160 = vsel %vm817, %v1150, 0.0
      %v1161 = vadd.f32 %v1159, %v1160
      %v1162 = vsel %vm817, %v1151, 0.0
      %v1163 = vadd.f32 %v1161, %v1162
      %v1164 = vsel %vm829, %v1152, 0.0
      %v1165 = vadd.f32 %v1163, %v1164
      %1166 = vadd.xlane.f32.xlu0 %v1165
      %v1167 = vpop.xlane.xlu0 %1166
      %v1168 = vrot.slane %v1167, 4
      %v1169 = vadd.f32 %v1167, %v1168
      %v1170 = vrot.slane %v1169, 2
      %v1171 = vadd.f32 %v1169, %v1170
      %v1172 = vrot.slane %v1171, 1
      %v1173 = vadd.f32 %v1171, %v1172
      %s1174 = vtos %v1173
      %v1175 = vrcp.pop 3136.0
      %s1176 = vtos %v1175
      %s1177 = smul.f32 %s1145, %s1176
      %v1178 = vrcp.pop 3136.0
      %s1179 = vtos %v1178
      %s1180 = smul.f32 %s1174, %s1179
      %s1181 = smul.f32 %s1177, %s1177
      %s1182 = ssub.f32 %s1180, %s1181
      %v1183 = vstv %s1177
      %v1184 = vsub.f32 %v658, %v1183
      %v1185 = vsub.f32 %v660, %v1183
      %v1186 = vsub.f32 %v701, %v1183
      %v1187 = vsub.f32 %v703, %v1183
      %v1188 = vsub.f32 %v744, %v1183
      %v1189 = vsub.f32 %v746, %v1183
      %v1190 = vsub.f32 %v786, %v1183
      %s1191 = sadd.f32 %s1182, 1e-05
      %v1192 = vstv %s1191
      %v1193 = vrsqrt.pop %v1192
      %s1194 = vtos %v1193
      %v1195 = vstv %s1194
      %v1196 = vmul.f32 %v1184, %v1195
      %v1197 = vmul.f32 %v1185, %v1195
      %v1198 = vmul.f32 %v1186, %v1195
      %v1199 = vmul.f32 %v1187, %v1195
      %v1200 = vmul.f32 %v1188, %v1195
      %v1201 = vmul.f32 %v1189, %v1195
      %v1202 = vmul.f32 %v1190, %v1195
      %v1203 = vmul.f32 %v1196, %v796
      %v1204 = vmul.f32 %v1197, %v797
      %v1205 = vmul.f32 %v1198, %v798
      %v1206 = vmul.f32 %v1199, %v799
      %v1207 = vmul.f32 %v1200, %v800
      %v1208 = vmul.f32 %v1201, %v801
      %v1209 = vmul.f32 %v1202, %v802
      %v1210 = vadd.f32 %v1203, %v810
      %v1211 = vadd.f32 %v1204, %v811
      %v1212 = vadd.f32 %v1205, %v812
      %v1213 = vadd.f32 %v1206, %v813
      %v1214 = vadd.f32 %v1207, %v814
      %v1215 = vadd.f32 %v1208, %v815
      %v1216 = vadd.f32 %v1209, %v816
      %v1217 = vtanh.pop %v1210
      %v1218 = vtanh.pop %v1211
      %v1219 = vtanh.pop %v1212
      %v1220 = vtanh.pop %v1213
      %v1221 = vtanh.pop %v1214
      %v1222 = vtanh.pop %v1215
      %v1223 = vtanh.pop %v1216
      %v1224 = vmul.f32 %v941, %v1217
      %v1225 = vmul.f32 %v943, %v1218
      %v1226 = vmul.f32 %v945, %v1219
      %v1227 = vmul.f32 %v947, %v1220
      %v1228 = vmul.f32 %v949, %v1221
      %v1229 = vmul.f32 %v951, %v1222
      %v1230 = vmul.f32 %v953, %v1223
      %v1231 = vld [vmem:[%s266] sm:$0xff]
      %v1232 = vld [vmem:[%s266 + $0x8] sm:$0xff]
      %v1233 = vld [vmem:[%s266 + $0x10] sm:$0xff]
      %v1234 = vld [vmem:[%s266 + $0x18] sm:$0xf]
      %v1239 = vcombine.low %v1231, %v1231
      %v1240 = vcombine.low %v1232, %v1232
      %v1241 = vcombine.low %v1233, %v1233
      %v1242 = vcombine.low %v1234, %v1234
      %v1247 = vmul.f32 %v1111, %v1239
      %v1248 = vmul.f32 %v1113, %v1231
      %v1249 = vmul.f32 %v1115, %v1240
      %v1250 = vmul.f32 %v1117, %v1232
      %v1251 = vmul.f32 %v1119, %v1241
      %v1252 = vmul.f32 %v1121, %v1233
      %v1253 = vmul.f32 %v1123, %v1242
      %v1261 = vrot.slane %v1247, 4
      %v1262 = vrot.slane %v1248, 4
      %v1263 = vrot.slane %v1249, 4
      %v1264 = vrot.slane %v1250, 4
      %v1265 = vrot.slane %v1251, 4
      %v1266 = vrot.slane %v1252, 4
      %v1267 = vrot.slane %v1253, 4
      %v1275 = vadd.f32 %v1224, %v1261
      %v1276 = vadd.f32 %v1225, %v1262
      %v1277 = vadd.f32 %v1226, %v1263
      %v1278 = vadd.f32 %v1227, %v1264
      %v1279 = vadd.f32 %v1228, %v1265
      %v1280 = vadd.f32 %v1229, %v1266
      %v1281 = vadd.f32 %v1230, %v1267
      %v1288 = vcombine.low %v1275, %v1276
      %v1289 = vcombine.low %v1277, %v1278
      %v1290 = vcombine.low %v1279, %v1280
      %1294 = vst [vmem:[%s271] sm:$0xff] %v1288
      %1295 = vst [vmem:[%s271 + $0x8] sm:$0xff] %v1289
      %1296 = vst [vmem:[%s271 + $0x10] sm:$0xff] %v1290
      %1297 = vst.msk [vmem:[%s271 + $0x18] sm:$0xf] %vm829, %v1281
      %p1298 = scmp.lt.s32.totalorder %s17, 1
      %s1299 = scalar_select %p1298, %s17, 1
      %s1300 = smul.addr %s1299, 7
      %s1301 = smul.addr %s1300, 4
      %s1302 = scalar_lea.vmem %s6, %s1301
      // Predicated region
      $region45: #{residual_block.5} parent=43 // pred_check
        %p1303 = pneg %p171
      $region46: #{residual_block.5} parent=43 // pred_check_branch
        %1305 = sbr.rel (%p1303) target = $region48
      $region47: #{residual_block.5} parent=43 // pred_region
        _
      $region48: #{residual_block.5} parent=43 // pred_fallthru
        _
    $region44: #{residual_block.5} parent=5 // pred_fallthru
      _
    %p1306 = scmp.le.s32.totalorder 2, %s12
    // Predicated region
    $region49: #{residual_block.5} parent=5 // pred_check
      %p1307 = pneg %p1306
    $region50: #{residual_block.5} parent=5 // pred_check_branch
      %1309 = sbr.rel (%p1307) target = $region52
    $region51: #{residual_block.5} parent=5 // pred_region
      %s1310 = ssub.s32 %s12, 2
      // Predicated region
      $region53: #{residual_block.5} parent=51 // pred_check
        %p1311 = pneg %p177
      $region54: #{residual_block.5} parent=51 // pred_check_branch
        %1313 = sbr.rel (%p1311) target = $region56
      $region55: #{residual_block.5} parent=51 // pred_region
        %p1314 = scmp.lt.s32.totalorder %s18, 1
        %s1315 = scalar_select %p1314, %s18, 1
        %s1316 = smul.addr %s1315, 7
        %s1317 = smul.addr %s1316, 4
        %s1318 = scalar_lea.vmem %s6, %s1317
      $region56: #{residual_block.5} parent=51 // pred_fallthru
        _
    $region52: #{residual_block.5} parent=5 // pred_fallthru
      _
  $region6: #{residual_block.5} parent=0 // loop_footer
    %s16 = sadd.s32 1, %s12
  $region7: #{residual_block.5} parent=0 // loop_footer_branch
    %11 = sbr.rel target = $region3
  $region8: #{residual_block.5} parent=0 // loop_exit
    _

// kernel: residual_block.6
$region0: #{residual_block.6}
  #allocation0 [shape = 'u32[]', space=smem, size = 0x4, offset = 0x4, fixed_abs, tag = 'smem constant byte address 0x4 - core index']
  #allocation1 [shape = 'u32[144,128]{1,0:T(1,128)}', space=vmem, size = 0x12000, scoped, tag = 'internal scratch']
  %s0 = inlined_call_operand.vmem [shape: bf16[2,72,784], index: 0, kind: input, shape index: {}]
  %s1 = inlined_call_operand.vmem [shape: bf16[4,72], index: 1, kind: input, shape index: {}]
  %s2 = inlined_call_operand.vmem [shape: f32[4,1], index: 2, kind: input, shape index: {}]
  %s3 = inlined_call_operand.vmem [shape: f32[4,784], index: 3, kind: input, shape index: {}]
  %s4 = inlined_call_operand.vmem [shape: f32[4,784], index: 4, kind: input, shape index: {}]
  %s5 = inlined_call_operand.vmem [shape: bf16[2,4,784], index: 5, kind: output, shape index: {}]
  %s6 = sld [smem:[#allocation0]]
  $region53: #{residual_block.6} parent=0
    _
  %s8 = ssub.s32 1, %s6
  %s9 = scalar_select 0, %s8, %s6
  loop: start=0, step=1, limit=4
  $region2: #{residual_block.6} parent=0 // loop_pre_header
    _
  $region3: #{residual_block.6} parent=0 // loop_header
    %s11 = sphi 0, %s15
    %p12 = scmp.ge.s32.totalorder %s11, 4
    %s21 = sphi 0, %s23
    %s24 = sphi 0, %s21
    %s25 = sphi 0, %s24
    %s41 = sphi 0, %s25
    %s45 = sphi 0, %s45
    %s47 = sphi 0, %s45
    %s48 = sphi 0, %s47
    %s62 = sphi 0, %s48
    %s66 = sphi 0, %s66
    %s68 = sphi 0, %s66
    %s69 = sphi 0, %s68
    %s83 = sphi 0, %s69
    %s87 = sphi 0, %s87
    %s89 = sphi 0, %s87
    %s90 = sphi 0, %s89
    %s104 = sphi 0, %s90
    %s108 = sphi 0, %s108
    %s110 = sphi 0, %s108
    %s111 = sphi 0, %s110
    %s125 = sphi 0, %s111
    %s131 = sphi 0, %s133
    %s134 = sphi 0, %s131
    %s135 = sphi 0, %s134
    %s151 = sphi 0, %s135
  $region4: #{residual_block.6} parent=0 // loop_header_branch
    %14 = sbr.rel (%p12) target = $region8
  $region5: #{residual_block.6} parent=0 // loop_body
    %s16 = ssub.s32 %s11, 1
    %s17 = ssub.s32 %s11, 2
    %s18 = sadd.s32 %s11, 1
    %s19 = ssub.s32 %s11, %s18
    %p20 = scmp.eq.s32.totalorder %s19, 0
    %s22 = sadd.s32 %s21, 1
    %s23 = scalar_select %p20, %s21, %s22
    %p26 = pneg %p20
    %p27 = scmp.eq.s32.totalorder %s11, 1
    %p28 = por %p26, %p27
    %p29 = scmp.ne.s32.totalorder %s21, %s24
    %p30 = scmp.eq.s32.totalorder %s11, 0
    %p31 = por %p29, %p30
    %p32 = scmp.ne.s32.totalorder %s21, %s24
    %p33 = scmp.eq.s32.totalorder %s16, 1
    %p34 = por %p32, %p33
    %p35 = scmp.ne.s32.totalorder %s24, %s25
    %p36 = scmp.eq.s32.totalorder %s16, 0
    %p37 = por %p35, %p36
    %p38 = scmp.ne.s32.totalorder %s24, %s25
    %p39 = scmp.eq.s32.totalorder %s17, 1
    %p40 = por %p38, %p39
    %p42 = scmp.ne.s32.totalorder %s25, %s41
    %p43 = scmp.eq.s32.totalorder %s17, 0
    %p44 = por %p42, %p43
    %s46 = sadd.s32 %s45, 1
    %p49 = scmp.eq.s32.totalorder %s11, 1
    %p50 = scmp.ne.s32.totalorder %s45, %s47
    %p51 = scmp.eq.s32.totalorder %s11, 0
    %p52 = por %p50, %p51
    %p53 = scmp.ne.s32.totalorder %s45, %s47
    %p54 = scmp.eq.s32.totalorder %s16, 1
    %p55 = por %p53, %p54
    %p56 = scmp.ne.s32.totalorder %s47, %s48
    %p57 = scmp.eq.s32.totalorder %s16, 0
    %p58 = por %p56, %p57
    %p59 = scmp.ne.s32.totalorder %s47, %s48
    %p60 = scmp.eq.s32.totalorder %s17, 1
    %p61 = por %p59, %p60
    %p63 = scmp.ne.s32.totalorder %s48, %s62
    %p64 = scmp.eq.s32.totalorder %s17, 0
    %p65 = por %p63, %p64
    %s67 = sadd.s32 %s66, 1
    %p70 = scmp.eq.s32.totalorder %s11, 1
    %p71 = scmp.ne.s32.totalorder %s66, %s68
    %p72 = scmp.eq.s32.totalorder %s11, 0
    %p73 = por %p71, %p72
    %p74 = scmp.ne.s32.totalorder %s66, %s68
    %p75 = scmp.eq.s32.totalorder %s16, 1
    %p76 = por %p74, %p75
    %p77 = scmp.ne.s32.totalorder %s68, %s69
    %p78 = scmp.eq.s32.totalorder %s16, 0
    %p79 = por %p77, %p78
    %p80 = scmp.ne.s32.totalorder %s68, %s69
    %p81 = scmp.eq.s32.totalorder %s17, 1
    %p82 = por %p80, %p81
    %p84 = scmp.ne.s32.totalorder %s69, %s83
    %p85 = scmp.eq.s32.totalorder %s17, 0
    %p86 = por %p84, %p85
    %s88 = sadd.s32 %s87, 1
    %p91 = scmp.eq.s32.totalorder %s11, 1
    %p92 = scmp.ne.s32.totalorder %s87, %s89
    %p93 = scmp.eq.s32.totalorder %s11, 0
    %p94 = por %p92, %p93
    %p95 = scmp.ne.s32.totalorder %s87, %s89
    %p96 = scmp.eq.s32.totalorder %s16, 1
    %p97 = por %p95, %p96
    %p98 = scmp.ne.s32.totalorder %s89, %s90
    %p99 = scmp.eq.s32.totalorder %s16, 0
    %p100 = por %p98, %p99
    %p101 = scmp.ne.s32.totalorder %s89, %s90
    %p102 = scmp.eq.s32.totalorder %s17, 1
    %p103 = por %p101, %p102
    %p105 = scmp.ne.s32.totalorder %s90, %s104
    %p106 = scmp.eq.s32.totalorder %s17, 0
    %p107 = por %p105, %p106
    %s109 = sadd.s32 %s108, 1
    %p112 = scmp.eq.s32.totalorder %s11, 1
    %p113 = scmp.ne.s32.totalorder %s108, %s110
    %p114 = scmp.eq.s32.totalorder %s11, 0
    %p115 = por %p113, %p114
    %p116 = scmp.ne.s32.totalorder %s108, %s110
    %p117 = scmp.eq.s32.totalorder %s16, 1
    %p118 = por %p116, %p117
    %p119 = scmp.ne.s32.totalorder %s110, %s111
    %p120 = scmp.eq.s32.totalorder %s16, 0
    %p121 = por %p119, %p120
    %p122 = scmp.ne.s32.totalorder %s110, %s111
    %p123 = scmp.eq.s32.totalorder %s17, 1
    %p124 = por %p122, %p123
    %p126 = scmp.ne.s32.totalorder %s111, %s125
    %p127 = scmp.eq.s32.totalorder %s17, 0
    %p128 = por %p126, %p127
    %s129 = ssub.s32 %s11, %s18
    %p130 = scmp.eq.s32.totalorder %s129, 0
    %s132 = sadd.s32 %s131, 1
    %s133 = scalar_select %p130, %s131, %s132
    %p136 = pneg %p130
    %p137 = scmp.eq.s32.totalorder %s11, 1
    %p138 = por %p136, %p137
    %p139 = scmp.ne.s32.totalorder %s131, %s134
    %p140 = scmp.eq.s32.totalorder %s11, 0
    %p141 = por %p139, %p140
    %p142 = scmp.ne.s32.totalorder %s131, %s134
    %p143 = scmp.eq.s32.totalorder %s16, 1
    %p144 = por %p142, %p143
    %p145 = scmp.ne.s32.totalorder %s134, %s135
    %p146 = scmp.eq.s32.totalorder %s16, 0
    %p147 = por %p145, %p146
    %p148 = scmp.ne.s32.totalorder %s134, %s135
    %p149 = scmp.eq.s32.totalorder %s17, 1
    %p150 = por %p148, %p149
    %p152 = scmp.ne.s32.totalorder %s135, %s151
    %p153 = scmp.eq.s32.totalorder %s17, 0
    %p154 = por %p152, %p153
    %p155 = scmp.le.s32.totalorder 1, %s11
    %p156 = scmp.lt.s32.totalorder %s11, 3
    %p157 = pnand %p155, %p156
    %p158 = pneg %p157
    // Predicated region
    $region9: #{residual_block.6} parent=5 // pred_check
      _
    $region10: #{residual_block.6} parent=5 // pred_check_branch
      %160 = sbr.rel (%p157) target = $region12
    $region11: #{residual_block.6} parent=5 // pred_region
      %s161 = ssub.s32 %s11, 1
      // Predicated region
      $region13: #{residual_block.6} parent=11 // pred_check
        %p162 = pneg %p58
      $region14: #{residual_block.6} parent=11 // pred_check_branch
        %164 = sbr.rel (%p162) target = $region16
      $region15: #{residual_block.6} parent=11 // pred_region
        _
      $region16: #{residual_block.6} parent=11 // pred_fallthru
        _
      // Predicated region
      $region17: #{residual_block.6} parent=11 // pred_check
        %p165 = pneg %p79
      $region18: #{residual_block.6} parent=11 // pred_check_branch
        %167 = sbr.rel (%p165) target = $region20
      $region19: #{residual_block.6} parent=11 // pred_region
        _
      $region20: #{residual_block.6} parent=11 // pred_fallthru
        _
      // Predicated region
      $region21: #{residual_block.6} parent=11 // pred_check
        %p168 = pneg %p100
      $region22: #{residual_block.6} parent=11 // pred_check_branch
        %170 = sbr.rel (%p168) target = $region24
      $region23: #{residual_block.6} parent=11 // pred_region
        _
      $region24: #{residual_block.6} parent=11 // pred_fallthru
        _
      // Predicated region
      $region25: #{residual_block.6} parent=11 // pred_check
        %p171 = pneg %p121
      $region26: #{residual_block.6} parent=11 // pred_check_branch
        %173 = sbr.rel (%p171) target = $region28
      $region27: #{residual_block.6} parent=11 // pred_region
        _
      $region28: #{residual_block.6} parent=11 // pred_fallthru
        _
    $region12: #{residual_block.6} parent=5 // pred_fallthru
      _
    %p174 = scmp.lt.s32.totalorder %s11, 2
    // Predicated region
    $region29: #{residual_block.6} parent=5 // pred_check
      %p175 = pneg %p174
    $region30: #{residual_block.6} parent=5 // pred_check_branch
      %177 = sbr.rel (%p175) target = $region32
    $region31: #{residual_block.6} parent=5 // pred_region
      // Predicated region
      $region33: #{residual_block.6} parent=31 // pred_check
        %p178 = pneg %p31
      $region34: #{residual_block.6} parent=31 // pred_check_branch
        %180 = sbr.rel (%p178) target = $region36
      $region35: #{residual_block.6} parent=31 // pred_region
        %p181 = scmp.lt.s32.totalorder %s11, 1
        %s182 = scalar_select %p181, %s11, 1
        %s183 = smul.addr %s182, 63
        %s184 = smul.addr %s183, 4
        %s185 = scalar_lea.vmem %s0, %s184
      $region36: #{residual_block.6} parent=31 // pred_fallthru
        _
    $region32: #{residual_block.6} parent=5 // pred_fallthru
      _
    %p186 = scmp.le.s32.totalorder 1, %s11
    %p187 = scmp.lt.s32.totalorder %s11, 3
    %p188 = pnand %p186, %p187
    %p189 = pneg %p188
    // Predicated region
    $region37: #{residual_block.6} parent=5 // pred_check
      _
    $region38: #{residual_block.6} parent=5 // pred_check_branch
      %191 = sbr.rel (%p188) target = $region40
    $region39: #{residual_block.6} parent=5 // pred_region
      %s192 = ssub.s32 %s11, 1
      %p193 = scmp.lt.s32.totalorder %s16, 1
      %s194 = scalar_select %p193, %s16, 1
      %s195 = smul.addr %s194, 63
      %s196 = smul.addr %s195, 4
      %s197 = scalar_lea.vmem %s0, %s196
      %p198 = pneg %p37
      %p199 = pneg %p34
      %p200 = pneg %p58
      %p201 = pneg %p55
      %p202 = pneg %p79
      %p203 = pneg %p76
      %p204 = pneg %p100
      %p205 = pneg %p97
      %p206 = pneg %p121
      %p207 = pneg %p118
      %p208 = pneg %p147
      %p209 = pneg %p144
      %p210 = scmp.lt.s32.totalorder %s16, 1
      %s211 = scalar_select %p210, %s16, 1
      %s212 = smul.addr %s211, 7
      %s213 = smul.addr %s212, 2
      %s214 = scalar_lea.vmem %s5, %s213
      %p215 = scmp.lt.s32.totalorder %s16, 1
      %s216 = scalar_select %p215, %s16, 1
      %s217 = smul.addr %s216, 63
      %s218 = smul.addr %s217, 4
      %s219 = scalar_lea.vmem %s0, %s218
      %p220 = scmp.lt.s32.totalorder %s16, 1
      %s221 = scalar_select %p220, %s16, 1
      %s222 = smul.addr %s221, 7
      %s223 = smul.addr %s222, 2
      %s224 = scalar_lea.vmem %s5, %s223
      %v226 = vld [vmem:[%s1] sm:$0x3]
      %v227 = vld [vmem:[%s219] sm:$0xff]
      %v228 = vld [vmem:[%s219 + $0x8] sm:$0xff]
      %v229 = vld [vmem:[%s219 + $0x10] sm:$0xff]
      %v230 = vld [vmem:[%s219 + $0x18] sm:$0xf]
      %v231 = vld [vmem:[%s219 + $0x1c] sm:$0xff]
      %v232 = vld [vmem:[%s219 + $0x24] sm:$0xff]
      %v233 = vld [vmem:[%s219 + $0x2c] sm:$0xff]
      %v234 = vld [vmem:[%s219 + $0x34] sm:$0xf]
      %v235 = vld [vmem:[%s219 + $0x38] sm:$0xff]
      %v236 = vld [vmem:[%s219 + $0x40] sm:$0xff]
      %v237 = vld [vmem:[%s219 + $0x48] sm:$0xff]
      %v238 = vld [vmem:[%s219 + $0x50] sm:$0xf]
      %v239 = vld [vmem:[%s219 + $0x54] sm:$0xff]
      %v240 = vld [vmem:[%s219 + $0x5c] sm:$0xff]
      %v241 = vld [vmem:[%s219 + $0x64] sm:$0xff]
      %v242 = vld [vmem:[%s219 + $0x6c] sm:$0xf]
      %v243 = vld [vmem:[%s219 + $0x70] sm:$0xff]
      %v244 = vld [vmem:[%s219 + $0x78] sm:$0xff]
      %v245 = vld [vmem:[%s219 + $0x80] sm:$0xff]
      %v246 = vld [vmem:[%s219 + $0x88] sm:$0xf]
      %v247 = vld [vmem:[%s219 + $0x8c] sm:$0xff]
      %v248 = vld [vmem:[%s219 + $0x94] sm:$0xff]
      %v249 = vld [vmem:[%s219 + $0x9c] sm:$0xff]
      %v250 = vld [vmem:[%s219 + $0xa4] sm:$0xf]
      %v251 = vld [vmem:[%s219 + $0xa8] sm:$0xff]
      %v252 = vld [vmem:[%s219 + $0xb0] sm:$0xff]
      %v253 = vld [vmem:[%s219 + $0xb8] sm:$0xff]
      %v254 = vld [vmem:[%s219 + $0xc0] sm:$0xf]
      %v255 = vld [vmem:[%s219 + $0xc4] sm:$0xff]
      %v256 = vld [vmem:[%s219 + $0xcc] sm:$0xff]
      %v257 = vld [vmem:[%s219 + $0xd4] sm:$0xff]
      %v258 = vld [vmem:[%s219 + $0xdc] sm:$0xf]
      %v259 = vld [vmem:[%s219 + $0xe0] sm:$0xff]
      %v260 = vld [vmem:[%s219 + $0xe8] sm:$0xff]
      %v261 = vld [vmem:[%s219 + $0xf0] sm:$0xff]
      %v262 = vld [vmem:[%s219 + $0xf8] sm:$0xf]
      %v263 = vld [vmem:[%s2] sm:$0xf]
      %265 = vset.pattern.permute.xlu0 0
      %266 = vperm.xlu0 %265, %v263
      %v267 = vpop.permute.xlu0 %266
      %v305 = vunpack.c.l.b16 %v227
      %v306 = vunpack.c.h.b16 %v227
      %v307 = vunpack.c.l.b16 %v228
      %v308 = vunpack.c.h.b16 %v228
      %v309 = vunpack.c.l.b16 %v229
      %v310 = vunpack.c.h.b16 %v229
      %v311 = vunpack.c.l.b16 %v230
      %v312 = vunpack.c.l.b16 %v231
      %v313 = vunpack.c.h.b16 %v231
      %v314 = vunpack.c.l.b16 %v232
      %v315 = vunpack.c.h.b16 %v232
      %v316 = vunpack.c.l.b16 %v233
      %v317 = vunpack.c.h.b16 %v233
      %v318 = vunpack.c.l.b16 %v234
      %v319 = vunpack.c.l.b16 %v235
      %v320 = vunpack.c.h.b16 %v235
      %v321 = vunpack.c.l.b16 %v236
      %v322 = vunpack.c.h.b16 %v236
      %v323 = vunpack.c.l.b16 %v237
      %v324 = vunpack.c.h.b16 %v237
      %v325 = vunpack.c.l.b16 %v238
      %v326 = vunpack.c.l.b16 %v239
      %v327 = vunpack.c.h.b16 %v239
      %v328 = vunpack.c.l.b16 %v240
      %v329 = vunpack.c.h.b16 %v240
      %v330 = vunpack.c.l.b16 %v241
      %v331 = vunpack.c.h.b16 %v241
      %v332 = vunpack.c.l.b16 %v242
      %v333 = vunpack.c.l.b16 %v243
      %v334 = vunpack.c.h.b16 %v243
      %v335 = vunpack.c.l.b16 %v244
      %v336 = vunpack.c.h.b16 %v244
      %v337 = vunpack.c.l.b16 %v245
      %v338 = vunpack.c.h.b16 %v245
      %v339 = vunpack.c.l.b16 %v246
      %v340 = vunpack.c.l.b16 %v247
      %v341 = vunpack.c.h.b16 %v247
      %v342 = vunpack.c.l.b16 %v248
      %v343 = vunpack.c.h.b16 %v248
      %v344 = vunpack.c.l.b16 %v249
      %v345 = vunpack.c.h.b16 %v249
      %v346 = vunpack.c.l.b16 %v250
      %v347 = vunpack.c.l.b16 %v251
      %v348 = vunpack.c.h.b16 %v251
      %v349 = vunpack.c.l.b16 %v252
      %v350 = vunpack.c.h.b16 %v252
      %v351 = vunpack.c.l.b16 %v253
      %v352 = vunpack.c.h.b16 %v253
      %v353 = vunpack.c.l.b16 %v254
      %v354 = vunpack.c.l.b16 %v255
      %v355 = vunpack.c.h.b16 %v255
      %v356 = vunpack.c.l.b16 %v256
      %v357 = vunpack.c.h.b16 %v256
      %v358 = vunpack.c.l.b16 %v257
      %v359 = vunpack.c.h.b16 %v257
      %v360 = vunpack.c.l.b16 %v258
      %v361 = vunpack.c.l.b16 %v259
      %v362 = vunpack.c.h.b16 %v259
      %v363 = vunpack.c.l.b16 %v260
      %v364 = vunpack.c.h.b16 %v260
      %v365 = vunpack.c.l.b16 %v261
      %v366 = vunpack.c.h.b16 %v261
      %v367 = vunpack.c.l.b16 %v262
      %v368 = vpack.c.b16 %v312, %v305
      %v369 = vpack.c.b16 %v313, %v306
      %v370 = vpack.c.b16 %v314, %v307
      %v371 = vpack.c.b16 %v315, %v308
      %v372 = vpack.c.b16 %v316, %v309
      %v373 = vpack.c.b16 %v317, %v310
      %v374 = vpack.c.b16 %v318, %v311
      %v375 = vpack.c.b16 %v326, %v319
      %v376 = vpack.c.b16 %v327, %v320
      %v377 = vpack.c.b16 %v328, %v321
      %v378 = vpack.c.b16 %v329, %v322
      %v379 = vpack.c.b16 %v330, %v323
      %v380 = vpack.c.b16 %v331, %v324
      %v381 = vpack.c.b16 %v332, %v325
      %v382 = vpack.c.b16 %v340, %v333
      %v383 = vpack.c.b16 %v341, %v334
      %v384 = vpack.c.b16 %v342, %v335
      %v385 = vpack.c.b16 %v343, %v336
      %v386 = vpack.c.b16 %v344, %v337
      %v387 = vpack.c.b16 %v345, %v338
      %v388 = vpack.c.b16 %v346, %v339
      %v389 = vpack.c.b16 %v354, %v347
      %v390 = vpack.c.b16 %v355, %v348
      %v391 = vpack.c.b16 %v356, %v349
      %v392 = vpack.c.b16 %v357, %v350
      %v393 = vpack.c.b16 %v358, %v351
      %v394 = vpack.c.b16 %v359, %v352
      %v395 = vpack.c.b16 %v360, %v353
      %v396 = vpack.c.b16 %v361, %v361
      %v397 = vpack.c.b16 %v362, %v362
      %v398 = vpack.c.b16 %v363, %v363
      %v399 = vpack.c.b16 %v364, %v364
      %v400 = vpack.c.b16 %v365, %v365
      %v401 = vpack.c.b16 %v366, %v366
      %v402 = vpack.c.b16 %v367, %v367
      %vm431 = vcmask 588800
      %v433 = vsel %vm431, %v226, 0
      %vm435 = vcmask 1043456
      %v437 = vsel %vm435, %v396, 0
      %v440 = vsel %vm435, %v397, 0
      %v443 = vsel %vm435, %v398, 0
      %v446 = vsel %vm435, %v399, 0
      %v449 = vsel %vm435, %v400, 0
      %v452 = vsel %vm435, %v401, 0
      %v455 = vsel %vm435, %v402, 0
      %457 = vmatprep.subr.bf16.mxu0 %v369
      %458 = vmatpush1.bf16.msra.mxu0 %v368
      %459 = vmatprep.subr.bf16.mxu0 %v376
      %460 = vmatpush1.bf16.msra.mxu0 %v375
      %461 = vmatprep.subr.bf16.mxu0 %v383
      %462 = vmatpush1.bf16.msra.mxu0 %v382
      %463 = vmatprep.subr.bf16.mxu0 %v390
      %464 = vmatpush1.bf16.msra.mxu0 %v389
      %465 = vmatprep.subr.bf16.mxu0 %v440
      %466 = vmatpush1.bf16.msra.mxu0 %v437
      %467 = vmatprep.subr.bf16.mxu0 0
      %468 = vmatpush1.bf16.msra.mxu0 0
      %469 = vmatprep.subr.bf16.mxu0 0
      %470 = vmatpush1.bf16.msra.mxu0 0
      %471 = vmatprep.subr.bf16.mxu0 0
      %472 = vmatpush1.bf16.msra.mxu0 0
      %473 = vmatprep.subr.bf16.mxu0 0
      %474 = vmatpush1.bf16.msra.mxu0 0
      %475 = vmatprep.subr.bf16.mxu0 0
      %476 = vmatpush1.bf16.msra.mxu0 0
      %477 = vmatprep.subr.bf16.mxu0 0
      %478 = vmatpush1.bf16.msra.mxu0 0
      %479 = vmatprep.subr.bf16.mxu0 0
      %480 = vmatpush1.bf16.msra.mxu0 0
      %481 = vmatprep.subr.bf16.mxu0 0
      %482 = vmatpush1.bf16.msra.mxu0 0
      %483 = vmatprep.subr.bf16.mxu0 0
      %484 = vmatpush1.bf16.msra.mxu0 0
      %485 = vmatprep.subr.bf16.mxu0 0
      %486 = vmatpush1.bf16.msra.mxu0 0
      %487 = vmatprep.subr.bf16.mxu0 0
      %488 = vmatpush1.bf16.msra.mxu0 0
      %489 = vmatprep.mubr.bf16.mxu0 0
      %490 = vmatmul.mubr.bf16.gmra.mrb[0].mxu0 %v433
      %v491 = vpop.f32.mrb[0].mxu0
      %v492 = vadd.f32 %v267, %v491
      %v493 = vpop.f32.mrb[0].mxu0
      %v494 = vadd.f32 %v267, %v493
      %v495 = vpop.f32.mrb[0].mxu0
      %v496 = vpop.f32.mrb[0].mxu0
      %497 = vdwg.mxu0
      %498 = vmatprep.subr.bf16.mxu0 %v371
      %499 = vmatpush1.bf16.msra.mxu0 %v370
      %500 = vmatprep.subr.bf16.mxu0 %v378
      %501 = vmatpush1.bf16.msra.mxu0 %v377
      %502 = vmatprep.subr.bf16.mxu0 %v385
      %503 = vmatpush1.bf16.msra.mxu0 %v384
      %504 = vmatprep.subr.bf16.mxu0 %v392
      %505 = vmatpush1.bf16.msra.mxu0 %v391
      %506 = vmatprep.subr.bf16.mxu0 %v446
      %507 = vmatpush1.bf16.msra.mxu0 %v443
      %508 = vmatprep.subr.bf16.mxu0 0
      %509 = vmatpush1.bf16.msra.mxu0 0
      %510 = vmatprep.subr.bf16.mxu0 0
      %511 = vmatpush1.bf16.msra.mxu0 0
      %512 = vmatprep.subr.bf16.mxu0 0
      %513 = vmatpush1.bf16.msra.mxu0 0
      %514 = vmatprep.subr.bf16.mxu0 0
      %515 = vmatpush1.bf16.msra.mxu0 0
      %516 = vmatprep.subr.bf16.mxu0 0
      %517 = vmatpush1.bf16.msra.mxu0 0
      %518 = vmatprep.subr.bf16.mxu0 0
      %519 = vmatpush1.bf16.msra.mxu0 0
      %520 = vmatprep.subr.bf16.mxu0 0
      %521 = vmatpush1.bf16.msra.mxu0 0
      %522 = vmatprep.subr.bf16.mxu0 0
      %523 = vmatpush1.bf16.msra.mxu0 0
      %524 = vmatprep.subr.bf16.mxu0 0
      %525 = vmatpush1.bf16.msra.mxu0 0
      %526 = vmatprep.subr.bf16.mxu0 0
      %527 = vmatpush1.bf16.msra.mxu0 0
      %528 = vmatprep.subr.bf16.mxu0 0
      %529 = vmatpush1.bf16.msra.mxu0 0
      %530 = vmatprep.mubr.bf16.mxu0 0
      %531 = vmatmul.mubr.bf16.gmra.mrb[0].mxu0 %v433
      %v532 = vpop.f32.mrb[0].mxu0
      %v533 = vadd.f32 %v267, %v532
      %v534 = vpop.f32.mrb[0].mxu0
      %v535 = vadd.f32 %v267, %v534
      %v536 = vpop.f32.mrb[0].mxu0
      %v537 = vpop.f32.mrb[0].mxu0
      %538 = vdwg.mxu0
      %539 = vmatprep.subr.bf16.mxu0 %v373
      %540 = vmatpush1.bf16.msra.mxu0 %v372
      %541 = vmatprep.subr.bf16.mxu0 %v380
      %542 = vmatpush1.bf16.msra.mxu0 %v379
      %543 = vmatprep.subr.bf16.mxu0 %v387
      %544 = vmatpush1.bf16.msra.mxu0 %v386
      %545 = vmatprep.subr.bf16.mxu0 %v394
      %546 = vmatpush1.bf16.msra.mxu0 %v393
      %547 = vmatprep.subr.bf16.mxu0 %v452
      %548 = vmatpush1.bf16.msra.mxu0 %v449
      %549 = vmatprep.subr.bf16.mxu0 0
      %550 = vmatpush1.bf16.msra.mxu0 0
      %551 = vmatprep.subr.bf16.mxu0 0
      %552 = vmatpush1.bf16.msra.mxu0 0
      %553 = vmatprep.subr.bf16.mxu0 0
      %554 = vmatpush1.bf16.msra.mxu0 0
      %555 = vmatprep.subr.bf16.mxu0 0
      %556 = vmatpush1.bf16.msra.mxu0 0
      %557 = vmatprep.subr.bf16.mxu0 0
      %558 = vmatpush1.bf16.msra.mxu0 0
      %559 = vmatprep.subr.bf16.mxu0 0
      %560 = vmatpush1.bf16.msra.mxu0 0
      %561 = vmatprep.subr.bf16.mxu0 0
      %562 = vmatpush1.bf16.msra.mxu0 0
      %563 = vmatprep.subr.bf16.mxu0 0
      %564 = vmatpush1.bf16.msra.mxu0 0
      %565 = vmatprep.subr.bf16.mxu0 0
      %566 = vmatpush1.bf16.msra.mxu0 0
      %567 = vmatprep.subr.bf16.mxu0 0
      %568 = vmatpush1.bf16.msra.mxu0 0
      %569 = vmatprep.subr.bf16.mxu0 0
      %570 = vmatpush1.bf16.msra.mxu0 0
      %571 = vmatprep.mubr.bf16.mxu0 0
      %572 = vmatmul.mubr.bf16.gmra.mrb[0].mxu0 %v433
      %v573 = vpop.f32.mrb[0].mxu0
      %v574 = vadd.f32 %v267, %v573
      %v575 = vpop.f32.mrb[0].mxu0
      %v576 = vadd.f32 %v267, %v575
      %v577 = vpop.f32.mrb[0].mxu0
      %v578 = vpop.f32.mrb[0].mxu0
      %579 = vdwg.mxu0
      %580 = vmatprep.subr.bf16.mxu0 0
      %581 = vmatpush1.bf16.msra.mxu0 %v374
      %582 = vmatprep.subr.bf16.mxu0 0
      %583 = vmatpush1.bf16.msra.mxu0 %v381
      %584 = vmatprep.subr.bf16.mxu0 0
      %585 = vmatpush1.bf16.msra.mxu0 %v388
      %586 = vmatprep.subr.bf16.mxu0 0
      %587 = vmatpush1.bf16.msra.mxu0 %v395
      %588 = vmatprep.subr.bf16.mxu0 0
      %589 = vmatpush1.bf16.msra.mxu0 %v455
      %590 = vmatprep.subr.bf16.mxu0 0
      %591 = vmatpush1.bf16.msra.mxu0 0
      %592 = vmatprep.subr.bf16.mxu0 0
      %593 = vmatpush1.bf16.msra.mxu0 0
      %594 = vmatprep.subr.bf16.mxu0 0
      %595 = vmatpush1.bf16.msra.mxu0 0
      %596 = vmatprep.subr.bf16.mxu0 0
      %597 = vmatpush1.bf16.msra.mxu0 0
      %598 = vmatprep.subr.bf16.mxu0 0
      %599 = vmatpush1.bf16.msra.mxu0 0
      %600 = vmatprep.subr.bf16.mxu0 0
      %601 = vmatpush1.bf16.msra.mxu0 0
      %602 = vmatprep.subr.bf16.mxu0 0
      %603 = vmatpush1.bf16.msra.mxu0 0
      %604 = vmatprep.subr.bf16.mxu0 0
      %605 = vmatpush1.bf16.msra.mxu0 0
      %606 = vmatprep.subr.bf16.mxu0 0
      %607 = vmatpush1.bf16.msra.mxu0 0
      %608 = vmatprep.subr.bf16.mxu0 0
      %609 = vmatpush1.bf16.msra.mxu0 0
      %610 = vmatprep.subr.bf16.mxu0 0
      %611 = vmatpush1.bf16.msra.mxu0 0
      %612 = vmatprep.mubr.bf16.mxu0 0
      %613 = vmatmul.mubr.bf16.gmra.mrb[0].mxu0 %v433
      %v614 = vpop.f32.mrb[0].mxu0
      %v615 = vadd.f32 %v267, %v614
      %v616 = vpop.f32.mrb[0].mxu0
      %v617 = vpop.f32.mrb[0].mxu0
      %v618 = vpop.f32.mrb[0].mxu0
      %619 = vdwg.mxu0
      %v620 = vld [vmem:[%s3] sm:$0xff]
      %v621 = vld [vmem:[%s3 + $0x8] sm:$0xff]
      %v622 = vld [vmem:[%s3 + $0x10] sm:$0xff]
      %v623 = vld [vmem:[%s3 + $0x18] sm:$0xf]
      %v624 = vld [vmem:[%s4] sm:$0xff]
      %v625 = vld [vmem:[%s4 + $0x8] sm:$0xff]
      %v626 = vld [vmem:[%s4 + $0x10] sm:$0xff]
      %v627 = vld [vmem:[%s4 + $0x18] sm:$0xf]
      %v628 = vsel %vm435, %v492, 0.0
      %v629 = vsel %vm435, %v494, 0.0
      %v630 = vadd.f32 %v628, %v629
      %v631 = vsel %vm435, %v533, 0.0
      %v632 = vadd.f32 %v630, %v631
      %v633 = vsel %vm435, %v535, 0.0
      %v634 = vadd.f32 %v632, %v633
      %v635 = vsel %vm435, %v574, 0.0
      %v636 = vadd.f32 %v634, %v635
      %v637 = vsel %vm435, %v576, 0.0
      %v638 = vadd.f32 %v636, %v637
      %vm639 = vcmask 125952
      %v640 = vsel %vm639, %v615, 0.0
      %v641 = vadd.f32 %v638, %v640
      %642 = vadd.xlane.f32.xlu0 %v641
      %v643 = vpop.xlane.xlu0 %642
      %v644 = vrot.slane %v643, 4
      %v645 = vadd.f32 %v643, %v644
      %v646 = vrot.slane %v645, 2
      %v647 = vadd.f32 %v645, %v646
      %v648 = vrot.slane %v647, 1
      %v649 = vadd.f32 %v647, %v648
      %s650 = vtos %v649
      %v651 = vmul.f32 %v492, %v492
      %v652 = vmul.f32 %v494, %v494
      %v653 = vmul.f32 %v533, %v533
      %v654 = vmul.f32 %v535, %v535
      %v655 = vmul.f32 %v574, %v574
      %v656 = vmul.f32 %v576, %v576
      %v657 = vmul.f32 %v615, %v615
      %v658 = vsel %vm435, %v651, 0.0
      %v659 = vsel %vm435, %v652, 0.0
      %v660 = vadd.f32 %v658, %v659
      %v661 = vsel %vm435, %v653, 0.0
      %v662 = vadd.f32 %v660, %v661
      %v663 = vsel %vm435, %v654, 0.0
      %v664 = vadd.f32 %v662, %v663
      %v665 = vsel %vm435, %v655, 0.0
      %v666 = vadd.f32 %v664, %v665
      %v667 = vsel %vm435, %v656, 0.0
      %v668 = vadd.f32 %v666, %v667
      %v669 = vsel %vm639, %v657, 0.0
      %v670 = vadd.f32 %v668, %v669
      %671 = vadd.xlane.f32.xlu0 %v670
      %v672 = vpop.xlane.xlu0 %671
      %v673 = vrot.slane %v672, 4
      %v674 = vadd.f32 %v672, %v673
      %v675 = vrot.slane %v674, 2
      %v676 = vadd.f32 %v674, %v675
      %v677 = vrot.slane %v676, 1
      %v678 = vadd.f32 %v676, %v677
      %s679 = vtos %v678
      %v680 = vrcp.pop 3136.0
      %s681 = vtos %v680
      %s682 = smul.f32 %s650, %s681
      %v683 = vrcp.pop 3136.0
      %s684 = vtos %v683
      %s685 = smul.f32 %s679, %s684
      %s686 = smul.f32 %s682, %s682
      %s687 = ssub.f32 %s685, %s686
      %v688 = vstv %s682
      %v689 = vsub.f32 %v492, %v688
      %v690 = vsub.f32 %v494, %v688
      %v691 = vsub.f32 %v533, %v688
      %v692 = vsub.f32 %v535, %v688
      %v693 = vsub.f32 %v574, %v688
      %v694 = vsub.f32 %v576, %v688
      %v695 = vsub.f32 %v615, %v688
      %s696 = sadd.f32 %s687, 1e-05
      %v697 = vstv %s696
      %v698 = vrsqrt.pop %v697
      %s699 = vtos %v698
      %v700 = vstv %s699
      %v701 = vmul.f32 %v689, %v700
      %v702 = vmul.f32 %v690, %v700
      %v703 = vmul.f32 %v691, %v700
      %v704 = vmul.f32 %v692, %v700
      %v705 = vmul.f32 %v693, %v700
      %v706 = vmul.f32 %v694, %v700
      %v707 = vmul.f32 %v695, %v700
      %v711 = vcombine.high %v620, %v620
      %v712 = vcombine.high %v621, %v621
      %v713 = vcombine.high %v622, %v622
      %v717 = vmul.f32 %v701, %v620
      %v718 = vmul.f32 %v702, %v711
      %v719 = vmul.f32 %v703, %v621
      %v720 = vmul.f32 %v704, %v712
      %v721 = vmul.f32 %v705, %v622
      %v722 = vmul.f32 %v706, %v713
      %v723 = vmul.f32 %v707, %v623
      %v727 = vcombine.high %v624, %v624
      %v728 = vcombine.high %v625, %v625
      %v729 = vcombine.high %v626, %v626
      %v733 = vadd.f32 %v717, %v624
      %v734 = vadd.f32 %v718, %v727
      %v735 = vadd.f32 %v719, %v625
      %v736 = vadd.f32 %v720, %v728
      %v737 = vadd.f32 %v721, %v626
      %v738 = vadd.f32 %v722, %v729
      %v739 = vadd.f32 %v723, %v627
      %v740 = vmax.f32 %v733, 0.0
      %v741 = vmax.f32 %v734, 0.0
      %v742 = vmax.f32 %v735, 0.0
      %v743 = vmax.f32 %v736, 0.0
      %v744 = vmax.f32 %v737, 0.0
      %v745 = vmax.f32 %v738, 0.0
      %v746 = vmax.f32 %v739, 0.0
      %v747 = vpack.c.bf16 %v740, %v740
      %v748 = vpack.c.bf16 %v741, %v741
      %v749 = vpack.c.bf16 %v742, %v742
      %v750 = vpack.c.bf16 %v743, %v743
      %v751 = vpack.c.bf16 %v744, %v744
      %v752 = vpack.c.bf16 %v745, %v745
      %v753 = vpack.c.bf16 %v746, %v746
      %v761 = vcombine.low %v747, %v748
      %v762 = vcombine.low %v749, %v750
      %v764 = vunpack.c.l.s4 1983009808
      %v765 = vunpack.c.0.s8 %v764
      %v766 = vlaneseq
      %v767 = vshrl.u32 %v766, 7
      %v768 = vsub.s32 %v765, %v767
      %v769 = vrot.slane %v761, %v768
      %v771 = vunpack.c.l.s4 1983009808
      %v772 = vunpack.c.0.s8 %v771
      %v773 = vlaneseq
      %v774 = vshrl.u32 %v773, 7
      %v775 = vsub.s32 %v772, %v774
      %v776 = vrot.slane %v762, %v775
      %v777 = vcombine.low %v769, %v776
      %v778 = vcombine.low %v751, %v752
      %v780 = vunpack.c.l.s4 1983009808
      %v781 = vunpack.c.0.s8 %v780
      %v782 = vlaneseq
      %v783 = vshrl.u32 %v782, 7
      %v784 = vsub.s32 %v781, %v783
      %v785 = vrot.slane %v778, %v784
      %v787 = vunpack.c.l.s4 1983009808
      %v788 = vunpack.c.0.s8 %v787
      %v789 = vlaneseq
      %v790 = vshrl.u32 %v789, 7
      %v791 = vsub.s32 %v788, %v790
      %v792 = vrot.slane %v753, %v791
      %v793 = vcombine.low %v785, %v792
      %796 = vst [vmem:[%s224] sm:$0xff] %v777
      %vm797 = vcmask 1041408
      %vm798 = vcmask 1043458
      %vm799 = vmor %vm798, %vm797
      %vm800 = vcmask 128004
      %vm801 = vmor %vm800, %vm799
      %802 = vst.msk [vmem:[%s224 + $0x8] sm:$0x3f] %vm801, %v793
      %p803 = scmp.lt.s32.totalorder %s16, 1
      %s804 = scalar_select %p803, %s16, 1
      %s805 = smul.addr %s804, 7
      %s806 = smul.addr %s805, 2
      %s807 = scalar_lea.vmem %s5, %s806
      // Predicated region
      $region41: #{residual_block.6} parent=39 // pred_check
        %p808 = pneg %p144
      $region42: #{residual_block.6} parent=39 // pred_check_branch
        %810 = sbr.rel (%p808) target = $region44
      $region43: #{residual_block.6} parent=39 // pred_region
        _
      $region44: #{residual_block.6} parent=39 // pred_fallthru
        _
    $region40: #{residual_block.6} parent=5 // pred_fallthru
      _
    %p811 = scmp.le.s32.totalorder 2, %s11
    // Predicated region
    $region45: #{residual_block.6} parent=5 // pred_check
      %p812 = pneg %p811
    $region46: #{residual_block.6} parent=5 // pred_check_branch
      %814 = sbr.rel (%p812) target = $region48
    $region47: #{residual_block.6} parent=5 // pred_region
      %s815 = ssub.s32 %s11, 2
      // Predicated region
      $region49: #{residual_block.6} parent=47 // pred_check
        %p816 = pneg %p150
      $region50: #{residual_block.6} parent=47 // pred_check_branch
        %818 = sbr.rel (%p816) target = $region52
      $region51: #{residual_block.6} parent=47 // pred_region
        %p819 = scmp.lt.s32.totalorder %s17, 1
        %s820 = scalar_select %p819, %s17, 1
        %s821 = smul.addr %s820, 7
        %s822 = smul.addr %s821, 2
        %s823 = scalar_lea.vmem %s5, %s822
      $region52: #{residual_block.6} parent=47 // pred_fallthru
        _
    $region48: #{residual_block.6} parent=5 // pred_fallthru
      _
  $region6: #{residual_block.6} parent=0 // loop_footer
    %s15 = sadd.s32 1, %s11
  $region7: #{residual_block.6} parent=0 // loop_footer_branch
    %10 = sbr.rel target = $region3
  $region8: #{residual_block.6} parent=0 // loop_exit
    _

// kernel: residual_block.7
$region0: #{residual_block.7}
  #allocation0 [shape = 'u32[]', space=smem, size = 0x4, offset = 0x4, fixed_abs, tag = 'smem constant byte address 0x4 - core index']
  #allocation1 [shape = 'u32[144,128]{1,0:T(1,128)}', space=vmem, size = 0x12000, scoped, tag = 'internal scratch']
  %s0 = inlined_call_operand.vmem [shape: bf16[2,36,784], index: 0, kind: input, shape index: {}]
  %s1 = inlined_call_operand.vmem [shape: bf16[4,36], index: 1, kind: input, shape index: {}]
  %s2 = inlined_call_operand.vmem [shape: f32[4,1], index: 2, kind: input, shape index: {}]
  %s3 = inlined_call_operand.vmem [shape: f32[4,784], index: 3, kind: input, shape index: {}]
  %s4 = inlined_call_operand.vmem [shape: f32[4,784], index: 4, kind: input, shape index: {}]
  %s5 = inlined_call_operand.vmem [shape: f32[2,4,784], index: 5, kind: input, shape index: {}]
  %s6 = inlined_call_operand.vmem [shape: f32[2,4,784], index: 6, kind: output, shape index: {}]
  %s7 = sld [smem:[#allocation0]]
  $region57: #{residual_block.7} parent=0
    _
  %s9 = ssub.s32 1, %s7
  %s10 = scalar_select 0, %s9, %s7
  loop: start=0, step=1, limit=4
  $region2: #{residual_block.7} parent=0 // loop_pre_header
    _
  $region3: #{residual_block.7} parent=0 // loop_header
    %s12 = sphi 0, %s16
    %p13 = scmp.ge.s32.totalorder %s12, 4
    %s22 = sphi 0, %s24
    %s25 = sphi 0, %s22
    %s26 = sphi 0, %s25
    %s42 = sphi 0, %s26
    %s46 = sphi 0, %s46
    %s48 = sphi 0, %s46
    %s49 = sphi 0, %s48
    %s63 = sphi 0, %s49
    %s67 = sphi 0, %s67
    %s69 = sphi 0, %s67
    %s70 = sphi 0, %s69
    %s84 = sphi 0, %s70
    %s88 = sphi 0, %s88
    %s90 = sphi 0, %s88
    %s91 = sphi 0, %s90
    %s105 = sphi 0, %s91
    %s109 = sphi 0, %s109
    %s111 = sphi 0, %s109
    %s112 = sphi 0, %s111
    %s126 = sphi 0, %s112
    %s132 = sphi 0, %s134
    %s135 = sphi 0, %s132
    %s136 = sphi 0, %s135
    %s152 = sphi 0, %s136
    %s158 = sphi 0, %s160
    %s161 = sphi 0, %s158
    %s162 = sphi 0, %s161
    %s178 = sphi 0, %s162
  $region4: #{residual_block.7} parent=0 // loop_header_branch
    %15 = sbr.rel (%p13) target = $region8
  $region5: #{residual_block.7} parent=0 // loop_body
    %s17 = ssub.s32 %s12, 1
    %s18 = ssub.s32 %s12, 2
    %s19 = sadd.s32 %s12, 1
    %s20 = ssub.s32 %s12, %s19
    %p21 = scmp.eq.s32.totalorder %s20, 0
    %s23 = sadd.s32 %s22, 1
    %s24 = scalar_select %p21, %s22, %s23
    %p27 = pneg %p21
    %p28 = scmp.eq.s32.totalorder %s12, 1
    %p29 = por %p27, %p28
    %p30 = scmp.ne.s32.totalorder %s22, %s25
    %p31 = scmp.eq.s32.totalorder %s12, 0
    %p32 = por %p30, %p31
    %p33 = scmp.ne.s32.totalorder %s22, %s25
    %p34 = scmp.eq.s32.totalorder %s17, 1
    %p35 = por %p33, %p34
    %p36 = scmp.ne.s32.totalorder %s25, %s26
    %p37 = scmp.eq.s32.totalorder %s17, 0
    %p38 = por %p36, %p37
    %p39 = scmp.ne.s32.totalorder %s25, %s26
    %p40 = scmp.eq.s32.totalorder %s18, 1
    %p41 = por %p39, %p40
    %p43 = scmp.ne.s32.totalorder %s26, %s42
    %p44 = scmp.eq.s32.totalorder %s18, 0
    %p45 = por %p43, %p44
    %s47 = sadd.s32 %s46, 1
    %p50 = scmp.eq.s32.totalorder %s12, 1
    %p51 = scmp.ne.s32.totalorder %s46, %s48
    %p52 = scmp.eq.s32.totalorder %s12, 0
    %p53 = por %p51, %p52
    %p54 = scmp.ne.s32.totalorder %s46, %s48
    %p55 = scmp.eq.s32.totalorder %s17, 1
    %p56 = por %p54, %p55
    %p57 = scmp.ne.s32.totalorder %s48, %s49
    %p58 = scmp.eq.s32.totalorder %s17, 0
    %p59 = por %p57, %p58
    %p60 = scmp.ne.s32.totalorder %s48, %s49
    %p61 = scmp.eq.s32.totalorder %s18, 1
    %p62 = por %p60, %p61
    %p64 = scmp.ne.s32.totalorder %s49, %s63
    %p65 = scmp.eq.s32.totalorder %s18, 0
    %p66 = por %p64, %p65
    %s68 = sadd.s32 %s67, 1
    %p71 = scmp.eq.s32.totalorder %s12, 1
    %p72 = scmp.ne.s32.totalorder %s67, %s69
    %p73 = scmp.eq.s32.totalorder %s12, 0
    %p74 = por %p72, %p73
    %p75 = scmp.ne.s32.totalorder %s67, %s69
    %p76 = scmp.eq.s32.totalorder %s17, 1
    %p77 = por %p75, %p76
    %p78 = scmp.ne.s32.totalorder %s69, %s70
    %p79 = scmp.eq.s32.totalorder %s17, 0
    %p80 = por %p78, %p79
    %p81 = scmp.ne.s32.totalorder %s69, %s70
    %p82 = scmp.eq.s32.totalorder %s18, 1
    %p83 = por %p81, %p82
    %p85 = scmp.ne.s32.totalorder %s70, %s84
    %p86 = scmp.eq.s32.totalorder %s18, 0
    %p87 = por %p85, %p86
    %s89 = sadd.s32 %s88, 1
    %p92 = scmp.eq.s32.totalorder %s12, 1
    %p93 = scmp.ne.s32.totalorder %s88, %s90
    %p94 = scmp.eq.s32.totalorder %s12, 0
    %p95 = por %p93, %p94
    %p96 = scmp.ne.s32.totalorder %s88, %s90
    %p97 = scmp.eq.s32.totalorder %s17, 1
    %p98 = por %p96, %p97
    %p99 = scmp.ne.s32.totalorder %s90, %s91
    %p100 = scmp.eq.s32.totalorder %s17, 0
    %p101 = por %p99, %p100
    %p102 = scmp.ne.s32.totalorder %s90, %s91
    %p103 = scmp.eq.s32.totalorder %s18, 1
    %p104 = por %p102, %p103
    %p106 = scmp.ne.s32.totalorder %s91, %s105
    %p107 = scmp.eq.s32.totalorder %s18, 0
    %p108 = por %p106, %p107
    %s110 = sadd.s32 %s109, 1
    %p113 = scmp.eq.s32.totalorder %s12, 1
    %p114 = scmp.ne.s32.totalorder %s109, %s111
    %p115 = scmp.eq.s32.totalorder %s12, 0
    %p116 = por %p114, %p115
    %p117 = scmp.ne.s32.totalorder %s109, %s111
    %p118 = scmp.eq.s32.totalorder %s17, 1
    %p119 = por %p117, %p118
    %p120 = scmp.ne.s32.totalorder %s111, %s112
    %p121 = scmp.eq.s32.totalorder %s17, 0
    %p122 = por %p120, %p121
    %p123 = scmp.ne.s32.totalorder %s111, %s112
    %p124 = scmp.eq.s32.totalorder %s18, 1
    %p125 = por %p123, %p124
    %p127 = scmp.ne.s32.totalorder %s112, %s126
    %p128 = scmp.eq.s32.totalorder %s18, 0
    %p129 = por %p127, %p128
    %s130 = ssub.s32 %s12, %s19
    %p131 = scmp.eq.s32.totalorder %s130, 0
    %s133 = sadd.s32 %s132, 1
    %s134 = scalar_select %p131, %s132, %s133
    %p137 = pneg %p131
    %p138 = scmp.eq.s32.totalorder %s12, 1
    %p139 = por %p137, %p138
    %p140 = scmp.ne.s32.totalorder %s132, %s135
    %p141 = scmp.eq.s32.totalorder %s12, 0
    %p142 = por %p140, %p141
    %p143 = scmp.ne.s32.totalorder %s132, %s135
    %p144 = scmp.eq.s32.totalorder %s17, 1
    %p145 = por %p143, %p144
    %p146 = scmp.ne.s32.totalorder %s135, %s136
    %p147 = scmp.eq.s32.totalorder %s17, 0
    %p148 = por %p146, %p147
    %p149 = scmp.ne.s32.totalorder %s135, %s136
    %p150 = scmp.eq.s32.totalorder %s18, 1
    %p151 = por %p149, %p150
    %p153 = scmp.ne.s32.totalorder %s136, %s152
    %p154 = scmp.eq.s32.totalorder %s18, 0
    %p155 = por %p153, %p154
    %s156 = ssub.s32 %s12, %s19
    %p157 = scmp.eq.s32.totalorder %s156, 0
    %s159 = sadd.s32 %s158, 1
    %s160 = scalar_select %p157, %s158, %s159
    %p163 = pneg %p157
    %p164 = scmp.eq.s32.totalorder %s12, 1
    %p165 = por %p163, %p164
    %p166 = scmp.ne.s32.totalorder %s158, %s161
    %p167 = scmp.eq.s32.totalorder %s12, 0
    %p168 = por %p166, %p167
    %p169 = scmp.ne.s32.totalorder %s158, %s161
    %p170 = scmp.eq.s32.totalorder %s17, 1
    %p171 = por %p169, %p170
    %p172 = scmp.ne.s32.totalorder %s161, %s162
    %p173 = scmp.eq.s32.totalorder %s17, 0
    %p174 = por %p172, %p173
    %p175 = scmp.ne.s32.totalorder %s161, %s162
    %p176 = scmp.eq.s32.totalorder %s18, 1
    %p177 = por %p175, %p176
    %p179 = scmp.ne.s32.totalorder %s162, %s178
    %p180 = scmp.eq.s32.totalorder %s18, 0
    %p181 = por %p179, %p180
    %p182 = scmp.le.s32.totalorder 1, %s12
    %p183 = scmp.lt.s32.totalorder %s12, 3
    %p184 = pnand %p182, %p183
    %p185 = pneg %p184
    // Predicated region
    $region9: #{residual_block.7} parent=5 // pred_check
      _
    $region10: #{residual_block.7} parent=5 // pred_check_branch
      %187 = sbr.rel (%p184) target = $region12
    $region11: #{residual_block.7} parent=5 // pred_region
      %s188 = ssub.s32 %s12, 1
      // Predicated region
      $region13: #{residual_block.7} parent=11 // pred_check
        %p189 = pneg %p59
      $region14: #{residual_block.7} parent=11 // pred_check_branch
        %191 = sbr.rel (%p189) target = $region16
      $region15: #{residual_block.7} parent=11 // pred_region
        _
      $region16: #{residual_block.7} parent=11 // pred_fallthru
        _
      // Predicated region
      $region17: #{residual_block.7} parent=11 // pred_check
        %p192 = pneg %p80
      $region18: #{residual_block.7} parent=11 // pred_check_branch
        %194 = sbr.rel (%p192) target = $region20
      $region19: #{residual_block.7} parent=11 // pred_region
        _
      $region20: #{residual_block.7} parent=11 // pred_fallthru
        _
      // Predicated region
      $region21: #{residual_block.7} parent=11 // pred_check
        %p195 = pneg %p101
      $region22: #{residual_block.7} parent=11 // pred_check_branch
        %197 = sbr.rel (%p195) target = $region24
      $region23: #{residual_block.7} parent=11 // pred_region
        _
      $region24: #{residual_block.7} parent=11 // pred_fallthru
        _
      // Predicated region
      $region25: #{residual_block.7} parent=11 // pred_check
        %p198 = pneg %p122
      $region26: #{residual_block.7} parent=11 // pred_check_branch
        %200 = sbr.rel (%p198) target = $region28
      $region27: #{residual_block.7} parent=11 // pred_region
        _
      $region28: #{residual_block.7} parent=11 // pred_fallthru
        _
    $region12: #{residual_block.7} parent=5 // pred_fallthru
      _
    %p201 = scmp.lt.s32.totalorder %s12, 2
    // Predicated region
    $region29: #{residual_block.7} parent=5 // pred_check
      %p202 = pneg %p201
    $region30: #{residual_block.7} parent=5 // pred_check_branch
      %204 = sbr.rel (%p202) target = $region32
    $region31: #{residual_block.7} parent=5 // pred_region
      // Predicated region
      $region33: #{residual_block.7} parent=31 // pred_check
        %p205 = pneg %p32
      $region34: #{residual_block.7} parent=31 // pred_check_branch
        %207 = sbr.rel (%p205) target = $region36
      $region35: #{residual_block.7} parent=31 // pred_region
        %p208 = scmp.lt.s32.totalorder %s12, 1
        %s209 = scalar_select %p208, %s12, 1
        %s210 = smul.addr %s209, 35
        %s211 = smul.addr %s210, 4
        %s212 = scalar_lea.vmem %s0, %s211
      $region36: #{residual_block.7} parent=31 // pred_fallthru
        _
      // Predicated region
      $region37: #{residual_block.7} parent=31 // pred_check
        %p213 = pneg %p142
      $region38: #{residual_block.7} parent=31 // pred_check_branch
        %215 = sbr.rel (%p213) target = $region40
      $region39: #{residual_block.7} parent=31 // pred_region
        %p216 = scmp.lt.s32.totalorder %s12, 1
        %s217 = scalar_select %p216, %s12, 1
        %s218 = smul.addr %s217, 7
        %s219 = smul.addr %s218, 4
        %s220 = scalar_lea.vmem %s5, %s219
      $region40: #{residual_block.7} parent=31 // pred_fallthru
        _
    $region32: #{residual_block.7} parent=5 // pred_fallthru
      _
    %p221 = scmp.le.s32.totalorder 1, %s12
    %p222 = scmp.lt.s32.totalorder %s12, 3
    %p223 = pnand %p221, %p222
    %p224 = pneg %p223
    // Predicated region
    $region41: #{residual_block.7} parent=5 // pred_check
      _
    $region42: #{residual_block.7} parent=5 // pred_check_branch
      %226 = sbr.rel (%p223) target = $region44
    $region43: #{residual_block.7} parent=5 // pred_region
      %s227 = ssub.s32 %s12, 1
      %p228 = scmp.lt.s32.totalorder %s17, 1
      %s229 = scalar_select %p228, %s17, 1
      %s230 = smul.addr %s229, 35
      %s231 = smul.addr %s230, 4
      %s232 = scalar_lea.vmem %s0, %s231
      %p233 = pneg %p38
      %p234 = pneg %p35
      %p235 = pneg %p59
      %p236 = pneg %p56
      %p237 = pneg %p80
      %p238 = pneg %p77
      %p239 = pneg %p101
      %p240 = pneg %p98
      %p241 = pneg %p122
      %p242 = pneg %p119
      %p243 = scmp.lt.s32.totalorder %s17, 1
      %s244 = scalar_select %p243, %s17, 1
      %s245 = smul.addr %s244, 7
      %s246 = smul.addr %s245, 4
      %s247 = scalar_lea.vmem %s5, %s246
      %p248 = pneg %p148
      %p249 = pneg %p145
      %p250 = pneg %p174
      %p251 = pneg %p171
      %p252 = scmp.lt.s32.totalorder %s17, 1
      %s253 = scalar_select %p252, %s17, 1
      %s254 = smul.addr %s253, 7
      %s255 = smul.addr %s254, 4
      %s256 = scalar_lea.vmem %s6, %s255
      %p257 = scmp.lt.s32.totalorder %s17, 1
      %s258 = scalar_select %p257, %s17, 1
      %s259 = smul.addr %s258, 35
      %s260 = smul.addr %s259, 4
      %s261 = scalar_lea.vmem %s0, %s260
      %p262 = scmp.lt.s32.totalorder %s17, 1
      %s263 = scalar_select %p262, %s17, 1
      %s264 = smul.addr %s263, 7
      %s265 = smul.addr %s264, 4
      %s266 = scalar_lea.vmem %s5, %s265
      %p267 = scmp.lt.s32.totalorder %s17, 1
      %s268 = scalar_select %p267, %s17, 1
      %s269 = smul.addr %s268, 7
      %s270 = smul.addr %s269, 4
      %s271 = scalar_lea.vmem %s6, %s270
      %v273 = vld [vmem:[%s1] sm:$0x3]
      %v274 = vld [vmem:[%s261] sm:$0xff]
      %v275 = vld [vmem:[%s261 + $0x8] sm:$0xff]
      %v276 = vld [vmem:[%s261 + $0x10] sm:$0xff]
      %v277 = vld [vmem:[%s261 + $0x18] sm:$0xf]
      %v278 = vld [vmem:[%s261 + $0x1c] sm:$0xff]
      %v279 = vld [vmem:[%s261 + $0x24] sm:$0xff]
      %v280 = vld [vmem:[%s261 + $0x2c] sm:$0xff]
      %v281 = vld [vmem:[%s261 + $0x34] sm:$0xf]
      %v282 = vld [vmem:[%s261 + $0x38] sm:$0xff]
      %v283 = vld [vmem:[%s261 + $0x40] sm:$0xff]
      %v284 = vld [vmem:[%s261 + $0x48] sm:$0xff]
      %v285 = vld [vmem:[%s261 + $0x50] sm:$0xf]
      %v286 = vld [vmem:[%s261 + $0x54] sm:$0xff]
      %v287 = vld [vmem:[%s261 + $0x5c] sm:$0xff]
      %v288 = vld [vmem:[%s261 + $0x64] sm:$0xff]
      %v289 = vld [vmem:[%s261 + $0x6c] sm:$0xf]
      %v290 = vld [vmem:[%s261 + $0x70] sm:$0x33]
      %v291 = vld [vmem:[%s261 + $0x78] sm:$0x33]
      %v292 = vld [vmem:[%s261 + $0x80] sm:$0x33]
      %v293 = vld [vmem:[%s261 + $0x88] sm:$0x3]
      %v294 = vld [vmem:[%s2] sm:$0xf]
      %296 = vset.pattern.permute.xlu0 0
      %297 = vperm.xlu0 %296, %v294
      %v298 = vpop.permute.xlu0 %297
      %v320 = vunpack.c.l.b16 %v274
      %v321 = vunpack.c.h.b16 %v274
      %v322 = vunpack.c.l.b16 %v275
      %v323 = vunpack.c.h.b16 %v275
      %v324 = vunpack.c.l.b16 %v276
      %v325 = vunpack.c.h.b16 %v276
      %v326 = vunpack.c.l.b16 %v277
      %v327 = vunpack.c.l.b16 %v278
      %v328 = vunpack.c.h.b16 %v278
      %v329 = vunpack.c.l.b16 %v279
      %v330 = vunpack.c.h.b16 %v279
      %v331 = vunpack.c.l.b16 %v280
      %v332 = vunpack.c.h.b16 %v280
      %v333 = vunpack.c.l.b16 %v281
      %v334 = vunpack.c.l.b16 %v282
      %v335 = vunpack.c.h.b16 %v282
      %v336 = vunpack.c.l.b16 %v283
      %v337 = vunpack.c.h.b16 %v283
      %v338 = vunpack.c.l.b16 %v284
      %v339 = vunpack.c.h.b16 %v284
      %v340 = vunpack.c.l.b16 %v285
      %v341 = vunpack.c.l.b16 %v286
      %v342 = vunpack.c.h.b16 %v286
      %v343 = vunpack.c.l.b16 %v287
      %v344 = vunpack.c.h.b16 %v287
      %v345 = vunpack.c.l.b16 %v288
      %v346 = vunpack.c.h.b16 %v288
      %v347 = vunpack.c.l.b16 %v289
      %v348 = vunpack.c.l.b16 %v290
      %v349 = vunpack.c.h.b16 %v290
      %v350 = vunpack.c.l.b16 %v291
      %v351 = vunpack.c.h.b16 %v291
      %v352 = vunpack.c.l.b16 %v292
      %v353 = vunpack.c.h.b16 %v292
      %v354 = vunpack.c.l.b16 %v293
      %v355 = vpack.c.b16 %v327, %v320
      %v356 = vpack.c.b16 %v328, %v321
      %v357 = vpack.c.b16 %v329, %v322
      %v358 = vpack.c.b16 %v330, %v323
      %v359 = vpack.c.b16 %v331, %v324
      %v360 = vpack.c.b16 %v332, %v325
      %v361 = vpack.c.b16 %v333, %v326
      %v362 = vpack.c.b16 %v341, %v334
      %v363 = vpack.c.b16 %v342, %v335
      %v364 = vpack.c.b16 %v343, %v336
      %v365 = vpack.c.b16 %v344, %v337
      %v366 = vpack.c.b16 %v345, %v338
      %v367 = vpack.c.b16 %v346, %v339
      %v368 = vpack.c.b16 %v347, %v340
      %v369 = vpack.c.b16 %v348, %v348
      %v370 = vpack.c.b16 %v349, %v349
      %v371 = vpack.c.b16 %v350, %v350
      %v372 = vpack.c.b16 %v351, %v351
      %v373 = vpack.c.b16 %v352, %v352
      %v374 = vpack.c.b16 %v353, %v353
      %v375 = vpack.c.b16 %v354, %v354
      %vm390 = vcmask 293888
      %v392 = vsel %vm390, %v273, 0
      %vm394 = vcmask 1041408
      %v396 = vsel %vm394, %v369, 0
      %v399 = vsel %vm394, %v370, 0
      %v402 = vsel %vm394, %v371, 0
      %v405 = vsel %vm394, %v372, 0
      %v408 = vsel %vm394, %v373, 0
      %v411 = vsel %vm394, %v374, 0
      %v414 = vsel %vm394, %v375, 0
      %416 = vmatprep.subr.bf16.mxu0 %v356
      %417 = vmatpush1.bf16.msra.mxu0 %v355
      %418 = vmatprep.subr.bf16.mxu0 %v363
      %419 = vmatpush1.bf16.msra.mxu0 %v362
      %420 = vmatprep.subr.bf16.mxu0 %v399
      %421 = vmatpush1.bf16.msra.mxu0 %v396
      %422 = vmatprep.subr.bf16.mxu0 0
      %423 = vmatpush1.bf16.msra.mxu0 0
      %424 = vmatprep.subr.bf16.mxu0 0
      %425 = vmatpush1.bf16.msra.mxu0 0
      %426 = vmatprep.subr.bf16.mxu0 0
      %427 = vmatpush1.bf16.msra.mxu0 0
      %428 = vmatprep.subr.bf16.mxu0 0
      %429 = vmatpush1.bf16.msra.mxu0 0
      %430 = vmatprep.subr.bf16.mxu0 0
      %431 = vmatpush1.bf16.msra.mxu0 0
      %432 = vmatprep.subr.bf16.mxu0 0
      %433 = vmatpush1.bf16.msra.mxu0 0
      %434 = vmatprep.subr.bf16.mxu0 0
      %435 = vmatpush1.bf16.msra.mxu0 0
      %436 = vmatprep.subr.bf16.mxu0 0
      %437 = vmatpush1.bf16.msra.mxu0 0
      %438 = vmatprep.subr.bf16.mxu0 0
      %439 = vmatpush1.bf16.msra.mxu0 0
      %440 = vmatprep.subr.bf16.mxu0 0
      %441 = vmatpush1.bf16.msra.mxu0 0
      %442 = vmatprep.subr.bf16.mxu0 0
      %443 = vmatpush1.bf16.msra.mxu0 0
      %444 = vmatprep.subr.bf16.mxu0 0
      %445 = vmatpush1.bf16.msra.mxu0 0
      %446 = vmatprep.subr.bf16.mxu0 0
      %447 = vmatpush1.bf16.msra.mxu0 0
      %448 = vmatprep.mubr.bf16.mxu0 0
      %449 = vmatmul.mubr.bf16.gmra.mrb[0].mxu0 %v392
      %v450 = vpop.f32.mrb[0].mxu0
      %v451 = vadd.f32 %v298, %v450
      %v452 = vpop.f32.mrb[0].mxu0
      %v453 = vadd.f32 %v298, %v452
      %v454 = vpop.f32.mrb[0].mxu0
      %v455 = vpop.f32.mrb[0].mxu0
      %456 = vdwg.mxu0
      %457 = vmatprep.subr.bf16.mxu0 %v358
      %458 = vmatpush1.bf16.msra.mxu0 %v357
      %459 = vmatprep.subr.bf16.mxu0 %v365
      %460 = vmatpush1.bf16.msra.mxu0 %v364
      %461 = vmatprep.subr.bf16.mxu0 %v405
      %462 = vmatpush1.bf16.msra.mxu0 %v402
      %463 = vmatprep.subr.bf16.mxu0 0
      %464 = vmatpush1.bf16.msra.mxu0 0
      %465 = vmatprep.subr.bf16.mxu0 0
      %466 = vmatpush1.bf16.msra.mxu0 0
      %467 = vmatprep.subr.bf16.mxu0 0
      %468 = vmatpush1.bf16.msra.mxu0 0
      %469 = vmatprep.subr.bf16.mxu0 0
      %470 = vmatpush1.bf16.msra.mxu0 0
      %471 = vmatprep.subr.bf16.mxu0 0
      %472 = vmatpush1.bf16.msra.mxu0 0
      %473 = vmatprep.subr.bf16.mxu0 0
      %474 = vmatpush1.bf16.msra.mxu0 0
      %475 = vmatprep.subr.bf16.mxu0 0
      %476 = vmatpush1.bf16.msra.mxu0 0
      %477 = vmatprep.subr.bf16.mxu0 0
      %478 = vmatpush1.bf16.msra.mxu0 0
      %479 = vmatprep.subr.bf16.mxu0 0
      %480 = vmatpush1.bf16.msra.mxu0 0
      %481 = vmatprep.subr.bf16.mxu0 0
      %482 = vmatpush1.bf16.msra.mxu0 0
      %483 = vmatprep.subr.bf16.mxu0 0
      %484 = vmatpush1.bf16.msra.mxu0 0
      %485 = vmatprep.subr.bf16.mxu0 0
      %486 = vmatpush1.bf16.msra.mxu0 0
      %487 = vmatprep.subr.bf16.mxu0 0
      %488 = vmatpush1.bf16.msra.mxu0 0
      %489 = vmatprep.mubr.bf16.mxu0 0
      %490 = vmatmul.mubr.bf16.gmra.mrb[0].mxu0 %v392
      %v491 = vpop.f32.mrb[0].mxu0
      %v492 = vadd.f32 %v298, %v491
      %v493 = vpop.f32.mrb[0].mxu0
      %v494 = vadd.f32 %v298, %v493
      %v495 = vpop.f32.mrb[0].mxu0
      %v496 = vpop.f32.mrb[0].mxu0
      %497 = vdwg.mxu0
      %498 = vmatprep.subr.bf16.mxu0 %v360
      %499 = vmatpush1.bf16.msra.mxu0 %v359
      %500 = vmatprep.subr.bf16.mxu0 %v367
      %501 = vmatpush1.bf16.msra.mxu0 %v366
      %502 = vmatprep.subr.bf16.mxu0 %v411
      %503 = vmatpush1.bf16.msra.mxu0 %v408
      %504 = vmatprep.subr.bf16.mxu0 0
      %505 = vmatpush1.bf16.msra.mxu0 0
      %506 = vmatprep.subr.bf16.mxu0 0
      %507 = vmatpush1.bf16.msra.mxu0 0
      %508 = vmatprep.subr.bf16.mxu0 0
      %509 = vmatpush1.bf16.msra.mxu0 0
      %510 = vmatprep.subr.bf16.mxu0 0
      %511 = vmatpush1.bf16.msra.mxu0 0
      %512 = vmatprep.subr.bf16.mxu0 0
      %513 = vmatpush1.bf16.msra.mxu0 0
      %514 = vmatprep.subr.bf16.mxu0 0
      %515 = vmatpush1.bf16.msra.mxu0 0
      %516 = vmatprep.subr.bf16.mxu0 0
      %517 = vmatpush1.bf16.msra.mxu0 0
      %518 = vmatprep.subr.bf16.mxu0 0
      %519 = vmatpush1.bf16.msra.mxu0 0
      %520 = vmatprep.subr.bf16.mxu0 0
      %521 = vmatpush1.bf16.msra.mxu0 0
      %522 = vmatprep.subr.bf16.mxu0 0
      %523 = vmatpush1.bf16.msra.mxu0 0
      %524 = vmatprep.subr.bf16.mxu0 0
      %525 = vmatpush1.bf16.msra.mxu0 0
      %526 = vmatprep.subr.bf16.mxu0 0
      %527 = vmatpush1.bf16.msra.mxu0 0
      %528 = vmatprep.subr.bf16.mxu0 0
      %529 = vmatpush1.bf16.msra.mxu0 0
      %530 = vmatprep.mubr.bf16.mxu0 0
      %531 = vmatmul.mubr.bf16.gmra.mrb[0].mxu0 %v392
      %v532 = vpop.f32.mrb[0].mxu0
      %v533 = vadd.f32 %v298, %v532
      %v534 = vpop.f32.mrb[0].mxu0
      %v535 = vadd.f32 %v298, %v534
      %v536 = vpop.f32.mrb[0].mxu0
      %v537 = vpop.f32.mrb[0].mxu0
      %538 = vdwg.mxu0
      %539 = vmatprep.subr.bf16.mxu0 0
      %540 = vmatpush1.bf16.msra.mxu0 %v361
      %541 = vmatprep.subr.bf16.mxu0 0
      %542 = vmatpush1.bf16.msra.mxu0 %v368
      %543 = vmatprep.subr.bf16.mxu0 0
      %544 = vmatpush1.bf16.msra.mxu0 %v414
      %545 = vmatprep.subr.bf16.mxu0 0
      %546 = vmatpush1.bf16.msra.mxu0 0
      %547 = vmatprep.subr.bf16.mxu0 0
      %548 = vmatpush1.bf16.msra.mxu0 0
      %549 = vmatprep.subr.bf16.mxu0 0
      %550 = vmatpush1.bf16.msra.mxu0 0
      %551 = vmatprep.subr.bf16.mxu0 0
      %552 = vmatpush1.bf16.msra.mxu0 0
      %553 = vmatprep.subr.bf16.mxu0 0
      %554 = vmatpush1.bf16.msra.mxu0 0
      %555 = vmatprep.subr.bf16.mxu0 0
      %556 = vmatpush1.bf16.msra.mxu0 0
      %557 = vmatprep.subr.bf16.mxu0 0
      %558 = vmatpush1.bf16.msra.mxu0 0
      %559 = vmatprep.subr.bf16.mxu0 0
      %560 = vmatpush1.bf16.msra.mxu0 0
      %561 = vmatprep.subr.bf16.mxu0 0
      %562 = vmatpush1.bf16.msra.mxu0 0
      %563 = vmatprep.subr.bf16.mxu0 0
      %564 = vmatpush1.bf16.msra.mxu0 0
      %565 = vmatprep.subr.bf16.mxu0 0
      %566 = vmatpush1.bf16.msra.mxu0 0
      %567 = vmatprep.subr.bf16.mxu0 0
      %568 = vmatpush1.bf16.msra.mxu0 0
      %569 = vmatprep.subr.bf16.mxu0 0
      %570 = vmatpush1.bf16.msra.mxu0 0
      %571 = vmatprep.mubr.bf16.mxu0 0
      %572 = vmatmul.mubr.bf16.gmra.mrb[0].mxu0 %v392
      %v573 = vpop.f32.mrb[0].mxu0
      %v574 = vadd.f32 %v298, %v573
      %v575 = vpop.f32.mrb[0].mxu0
      %v576 = vpop.f32.mrb[0].mxu0
      %v577 = vpop.f32.mrb[0].mxu0
      %578 = vdwg.mxu0
      %v579 = vld [vmem:[%s3] sm:$0xff]
      %v580 = vld [vmem:[%s3 + $0x8] sm:$0xff]
      %v581 = vld [vmem:[%s3 + $0x10] sm:$0xff]
      %v582 = vld [vmem:[%s3 + $0x18] sm:$0xf]
      %v583 = vld [vmem:[%s4] sm:$0xff]
      %v584 = vld [vmem:[%s4 + $0x8] sm:$0xff]
      %v585 = vld [vmem:[%s4 + $0x10] sm:$0xff]
      %v586 = vld [vmem:[%s4 + $0x18] sm:$0xf]
      %vm587 = vcmask 1043456
      %v588 = vsel %vm587, %v451, 0.0
      %v589 = vsel %vm587, %v453, 0.0
      %v590 = vadd.f32 %v588, %v589
      %v591 = vsel %vm587, %v492, 0.0
      %v592 = vadd.f32 %v590, %v591
      %v593 = vsel %vm587, %v494, 0.0
      %v594 = vadd.f32 %v592, %v593
      %v595 = vsel %vm587, %v533, 0.0
      %v596 = vadd.f32 %v594, %v595
      %v597 = vsel %vm587, %v535, 0.0
      %v598 = vadd.f32 %v596, %v597
      %vm599 = vcmask 125952
      %v600 = vsel %vm599, %v574, 0.0
      %v601 = vadd.f32 %v598, %v600
      %602 = vadd.xlane.f32.xlu0 %v601
      %v603 = vpop.xlane.xlu0 %602
      %v604 = vrot.slane %v603, 4
      %v605 = vadd.f32 %v603, %v604
      %v606 = vrot.slane %v605, 2
      %v607 = vadd.f32 %v605, %v606
      %v608 = vrot.slane %v607, 1
      %v609 = vadd.f32 %v607, %v608
      %s610 = vtos %v609
      %v611 = vmul.f32 %v451, %v451
      %v612 = vmul.f32 %v453, %v453
      %v613 = vmul.f32 %v492, %v492
      %v614 = vmul.f32 %v494, %v494
      %v615 = vmul.f32 %v533, %v533
      %v616 = vmul.f32 %v535, %v535
      %v617 = vmul.f32 %v574, %v574
      %v618 = vsel %vm587, %v611, 0.0
      %v619 = vsel %vm587, %v612, 0.0
      %v620 = vadd.f32 %v618, %v619
      %v621 = vsel %vm587, %v613, 0.0
      %v622 = vadd.f32 %v620, %v621
      %v623 = vsel %vm587, %v614, 0.0
      %v624 = vadd.f32 %v622, %v623
      %v625 = vsel %vm587, %v615, 0.0
      %v626 = vadd.f32 %v624, %v625
      %v627 = vsel %vm587, %v616, 0.0
      %v628 = vadd.f32 %v626, %v627
      %v629 = vsel %vm599, %v617, 0.0
      %v630 = vadd.f32 %v628, %v629
      %631 = vadd.xlane.f32.xlu0 %v630
      %v632 = vpop.xlane.xlu0 %631
      %v633 = vrot.slane %v632, 4
      %v634 = vadd.f32 %v632, %v633
      %v635 = vrot.slane %v634, 2
      %v636 = vadd.f32 %v634, %v635
      %v637 = vrot.slane %v636, 1
      %v638 = vadd.f32 %v636, %v637
      %s639 = vtos %v638
      %v640 = vrcp.pop 3136.0
      %s641 = vtos %v640
      %s642 = smul.f32 %s610, %s641
      %v643 = vrcp.pop 3136.0
      %s644 = vtos %v643
      %s645 = smul.f32 %s639, %s644
      %s646 = smul.f32 %s642, %s642
      %s647 = ssub.f32 %s645, %s646
      %v648 = vstv %s642
      %v649 = vsub.f32 %v451, %v648
      %v650 = vsub.f32 %v453, %v648
      %v651 = vsub.f32 %v492, %v648
      %v652 = vsub.f32 %v494, %v648
      %v653 = vsub.f32 %v533, %v648
      %v654 = vsub.f32 %v535, %v648
      %v655 = vsub.f32 %v574, %v648
      %s656 = sadd.f32 %s647, 1e-05
      %v657 = vstv %s656
      %v658 = vrsqrt.pop %v657
      %s659 = vtos %v658
      %v660 = vstv %s659
      %v661 = vmul.f32 %v649, %v660
      %v662 = vmul.f32 %v650, %v660
      %v663 = vmul.f32 %v651, %v660
      %v664 = vmul.f32 %v652, %v660
      %v665 = vmul.f32 %v653, %v660
      %v666 = vmul.f32 %v654, %v660
      %v667 = vmul.f32 %v655, %v660
      %v671 = vcombine.high %v579, %v579
      %v672 = vcombine.high %v580, %v580
      %v673 = vcombine.high %v581, %v581
      %v677 = vmul.f32 %v661, %v579
      %v678 = vmul.f32 %v662, %v671
      %v679 = vmul.f32 %v663, %v580
      %v680 = vmul.f32 %v664, %v672
      %v681 = vmul.f32 %v665, %v581
      %v682 = vmul.f32 %v666, %v673
      %v683 = vmul.f32 %v667, %v582
      %v687 = vcombine.high %v583, %v583
      %v688 = vcombine.high %v584, %v584
      %v689 = vcombine.high %v585, %v585
      %v693 = vadd.f32 %v677, %v583
      %v694 = vadd.f32 %v678, %v687
      %v695 = vadd.f32 %v679, %v584
      %v696 = vadd.f32 %v680, %v688
      %v697 = vadd.f32 %v681, %v585
      %v698 = vadd.f32 %v682, %v689
      %v699 = vadd.f32 %v683, %v586
      %v700 = vld [vmem:[%s266] sm:$0xff]
      %v701 = vld [vmem:[%s266 + $0x8] sm:$0xff]
      %v702 = vld [vmem:[%s266 + $0x10] sm:$0xff]
      %v703 = vld [vmem:[%s266 + $0x18] sm:$0xf]
      %v710 = vcombine.low %v693, %v694
      %v711 = vcombine.low %v695, %v696
      %v712 = vcombine.low %v697, %v698
      %v716 = vadd.f32 %v700, %v710
      %v717 = vadd.f32 %v701, %v711
      %v718 = vadd.f32 %v702, %v712
      %v719 = vadd.f32 %v703, %v699
      %v720 = vmax.f32 %v716, 0.0
      %v721 = vmax.f32 %v717, 0.0
      %v722 = vmax.f32 %v718, 0.0
      %v723 = vmax.f32 %v719, 0.0
      %724 = vst [vmem:[%s271] sm:$0xff] %v720
      %725 = vst [vmem:[%s271 + $0x8] sm:$0xff] %v721
      %726 = vst [vmem:[%s271 + $0x10] sm:$0xff] %v722
      %727 = vst.msk [vmem:[%s271 + $0x18] sm:$0xf] %vm599, %v723
      %p728 = scmp.lt.s32.totalorder %s17, 1
      %s729 = scalar_select %p728, %s17, 1
      %s730 = smul.addr %s729, 7
      %s731 = smul.addr %s730, 4
      %s732 = scalar_lea.vmem %s6, %s731
      // Predicated region
      $region45: #{residual_block.7} parent=43 // pred_check
        %p733 = pneg %p171
      $region46: #{residual_block.7} parent=43 // pred_check_branch
        %735 = sbr.rel (%p733) target = $region48
      $region47: #{residual_block.7} parent=43 // pred_region
        _
      $region48: #{residual_block.7} parent=43 // pred_fallthru
        _
    $region44: #{residual_block.7} parent=5 // pred_fallthru
      _
    %p736 = scmp.le.s32.totalorder 2, %s12
    // Predicated region
    $region49: #{residual_block.7} parent=5 // pred_check
      %p737 = pneg %p736
    $region50: #{residual_block.7} parent=5 // pred_check_branch
      %739 = sbr.rel (%p737) target = $region52
    $region51: #{residual_block.7} parent=5 // pred_region
      %s740 = ssub.s32 %s12, 2
      // Predicated region
      $region53: #{residual_block.7} parent=51 // pred_check
        %p741 = pneg %p177
      $region54: #{residual_block.7} parent=51 // pred_check_branch
        %743 = sbr.rel (%p741) target = $region56
      $region55: #{residual_block.7} parent=51 // pred_region
        %p744 = scmp.lt.s32.totalorder %s18, 1
        %s745 = scalar_select %p744, %s18, 1
        %s746 = smul.addr %s745, 7
        %s747 = smul.addr %s746, 4
        %s748 = scalar_lea.vmem %s6, %s747
      $region56: #{residual_block.7} parent=51 // pred_fallthru
        _
    $region52: #{residual_block.7} parent=5 // pred_fallthru
      _
  $region6: #{residual_block.7} parent=0 // loop_footer
    %s16 = sadd.s32 1, %s12
  $region7: #{residual_block.7} parent=0 // loop_footer_branch
    %11 = sbr.rel target = $region3
  $region8: #{residual_block.7} parent=0 // loop_exit
    _

</llo_original>
